<compile_context>
chip_gen: v7x
topology: tpu7x:2x2x1
jax: 0.10.0
libtpu: 0.0.40
codegen_flags: <defaults>
</compile_context>

<pallas_src>
import functools

import jax
import jax.numpy as jnp
import numpy as np
from jax.experimental import pallas as pl
from jax.experimental.pallas import tpu as pltpu


# ----------------------------- Pallas kernel --------------------------------

def _make_bigru_kernel(hidden_size: int, time_block: int, clip_value: float):
    H = hidden_size
    TT = time_block

    def kernel(gzr_ref, gn_ref, h0_ref, wzr_ref, wn_ref, out_ref, h_sc):
        d = pl.program_id(0)      # 0 = forward direction, 1 = backward
        g = pl.program_id(1)      # time-block index in *processing* order

        # New direction starts -> load its initial hidden state.
        @pl.when(g == 0)
        def _():
            h_sc[...] = h0_ref[0]

        wzr = wzr_ref[0]          # (H, 2H) f32  (W_hh_zr^T)
        wn = wn_ref[0]            # (H,  H) f32  (W_hh_n^T)

        def step(i, h):
            # Row inside the block in processing order (reversed for bwd).
            row = (1 - d) * i + d * (TT - 1 - i)
            x_zr = gzr_ref[0, row]          # (B, 2H) precomputed x-gates (+biases)
            x_n = gn_ref[0, row]            # (B,  H)
            h_zr = jnp.dot(h, wzr, preferred_element_type=jnp.float32)
            zr = jax.nn.sigmoid(x_zr + h_zr)
            z = zr[:, :H]
            r = zr[:, H:]
            # PyTorch `r * hidden @ W.T` parses as `(r * hidden) @ W.T`.
            h_n = jnp.dot(r * h, wn, preferred_element_type=jnp.float32)
            n = jnp.tanh(x_n + h_n)
            h_new = z * h + (1.0 - z) * n
            h_new = jnp.clip(h_new, -clip_value, clip_value)
            out_ref[0, row] = h_new         # already in original time order
            return h_new

        h_final = jax.lax.fori_loop(0, TT, step, h_sc[...], unroll=True)
        h_sc[...] = h_final

    return kernel


# ------------------------------- wrapper -------------------------------------

def _pick_time_block(T: int, target: int = 16) -> int:
    tt = min(target, T)
    while T % tt:
        tt -= 1
    return tt


def bidirectional_clipped_gru(x, h_0, params, clip_value=5.0, time_block=16):
    """Forward pass of BidirectionalClippedGRU.

    x:   (B, T, I) float32
    h_0: (2, B, H) float32  -> (h0_fwd, h0_bwd)
    params: dict with 'fwd'/'bwd', each holding w_ih (3H, I), w_hh (3H, H),
            b_ih (3H,), b_hh (3H,)  (module layout, gate order z, r, n).
    Returns (output (B, T, 2H), h_n (2, B, H)).
    """
    B, T, I = x.shape
    H = params["fwd"]["w_hh"].shape[1]
    TT = _pick_time_block(T, time_block)
    nTb = T // TT

    x = x.astype(jnp.float32)

    def prep(p):
        w_ih = jnp.asarray(p["w_ih"], jnp.float32)   # (3H, I)
        w_hh = jnp.asarray(p["w_hh"], jnp.float32)   # (3H, H)
        b_ih = jnp.asarray(p["b_ih"], jnp.float32)   # (3H,)
        b_hh = jnp.asarray(p["b_hh"], jnp.float32)   # (3H,)
        # Hoisted input projection for all timesteps, with the (frozen)
        # recurrent bias folded in.  Exact: b_hh_zr is added to hidden@W_zr^T
        # before the sigmoid, b_hh_n is added outside the (r*h)@W_n^T product.
        g_zr = (jnp.einsum("bti,gi->tbg", x, w_ih[: 2 * H])
                + b_ih[: 2 * H] + b_hh[: 2 * H])            # (T, B, 2H)
        g_n = (jnp.einsum("bti,gi->tbg", x, w_ih[2 * H:])
               + b_ih[2 * H:] + b_hh[2 * H:])               # (T, B, H)
        w_zr = w_hh[: 2 * H].T                              # (H, 2H)
        w_n = w_hh[2 * H:].T                                # (H, H)
        return g_zr, g_n, w_zr, w_n

    gzr_f, gn_f, wzr_f, wn_f = prep(params["fwd"])
    gzr_b, gn_b, wzr_b, wn_b = prep(params["bwd"])

    gzr = jnp.stack([gzr_f, gzr_b])      # (2, T, B, 2H) f32
    gn = jnp.stack([gn_f, gn_b])         # (2, T, B, H)  f32
    wzr = jnp.stack([wzr_f, wzr_b])      # (2, H, 2H)    f32
    wn = jnp.stack([wn_f, wn_b])         # (2, H, H)     f32
    h0 = h_0.astype(jnp.float32)         # (2, B, H)

    # Direction-dependent time-block index: fwd reads block g, bwd reads block
    # nTb-1-g (in-block reversal happens inside the kernel).
    def tb_idx(d, g):
        return (1 - d) * g + d * (nTb - 1 - g)

    grid_spec = pltpu.PrefetchScalarGridSpec(
        num_scalar_prefetch=0,
        grid=(2, nTb),
        in_specs=[
            pl.BlockSpec((1, TT, B, 2 * H),
                         lambda d, g: (d, tb_idx(d, g), 0, 0)),   # x-gates zr
            pl.BlockSpec((1, TT, B, H),
                         lambda d, g: (d, tb_idx(d, g), 0, 0)),   # x-gates n
            pl.BlockSpec((1, B, H), lambda d, g: (d, 0, 0)),      # h0 per dir
            pl.BlockSpec((1, H, 2 * H), lambda d, g: (d, 0, 0)),  # W_hh_zr^T
            pl.BlockSpec((1, H, H), lambda d, g: (d, 0, 0)),      # W_hh_n^T
        ],
        out_specs=pl.BlockSpec((1, TT, B, H),
                               lambda d, g: (d, tb_idx(d, g), 0, 0)),
        scratch_shapes=[pltpu.VMEM((B, H), jnp.float32)],         # running h
    )

    out = pl.pallas_call(
        _make_bigru_kernel(H, TT, clip_value),
        grid_spec=grid_spec,
        out_shape=jax.ShapeDtypeStruct((2, T, B, H), jnp.float32),
        compiler_params=pltpu.CompilerParams(
            dimension_semantics=("parallel", "arbitrary")),
    )(gzr, gn, h0, wzr, wn)

    out_f, out_b = out[0], out[1]                   # (T, B, H), original order
    output = jnp.concatenate([out_f, out_b], -1)    # (T, B, 2H)
    output = jnp.transpose(output, (1, 0, 2))       # (B, T, 2H)
    h_n = jnp.stack([out_f[T - 1], out_b[0]])       # (2, B, H)
    return output, h_n


# --------------------------- pure-JAX reference ------------------------------

def _gru_cell_ref(x, h, w_ih, w_hh, b_ih, b_hh, clip_value, H):
    x_all = x @ w_ih.T + b_ih
    x_z, x_r, x_n = x_all[:, :H], x_all[:, H:2 * H], x_all[:, 2 * H:]
    w_zr, w_n = w_hh[:2 * H], w_hh[2 * H:]
    b_zr, b_n = b_hh[:2 * H], b_hh[2 * H:]
    h_all = h @ w_zr.T + b_zr
    h_z, h_r = h_all[:, :H], h_all[:, H:]
    z = jax.nn.sigmoid(x_z + h_z)
    r = jax.nn.sigmoid(x_r + h_r)
    h_n = (r * h) @ w_n.T + b_n
    n = jnp.tanh(x_n + h_n)
    h_new = z * h + (1 - z) * n
    return jnp.clip(h_new, -clip_value, clip_value)


def _bigru_ref(x, h_0, params, clip_value, H):
    def run_dir(xs, h0, p):
        outs = []
        h = h0
        for t in range(xs.shape[1]):
            h = _gru_cell_ref(xs[:, t], h, p["w_ih"], p["w_hh"],
                              p["b_ih"], p["b_hh"], clip_value, H)
            outs.append(h)
        return jnp.stack(outs, axis=1), h

    out_f, hn_f = run_dir(x, h_0[0], params["fwd"])
    out_b, hn_b = run_dir(jnp.flip(x, axis=1), h_0[1], params["bwd"])
    out_b = jnp.flip(out_b, axis=1)
    return jnp.concatenate([out_f, out_b], axis=2), jnp.stack([hn_f, hn_b])


# --------------------------------- main --------------------------------------

if __name__ == "__main__":
    B, T, I, H = 4, 32, 16, 32
    CLIP = 5.0

    key = jax.random.PRNGKey(0)
    keys = jax.random.split(key, 10)

    def make_dir_params(ks):
        s_ih = 1.0 / np.sqrt(I)
        s_hh = 1.0 / np.sqrt(H)
        return {
            "w_ih": jax.random.uniform(ks[0], (3 * H, I), jnp.float32, -s_ih, s_ih),
            "w_hh": jax.random.uniform(ks[1], (3 * H, H), jnp.float32, -s_hh, s_hh),
            "b_ih": jax.random.uniform(ks[2], (3 * H,), jnp.float32, -s_ih, s_ih),
            "b_hh": jax.random.uniform(ks[3], (3 * H,), jnp.float32, -s_hh, s_hh),
        }

    params = {"fwd": make_dir_params(keys[0:4]), "bwd": make_dir_params(keys[4:8])}
    x = jax.random.normal(keys[8], (B, T, I), jnp.float32)
    h_0 = jax.random.normal(keys[9], (2, B, H), jnp.float32) * 0.1

    run = jax.jit(functools.partial(bidirectional_clipped_gru,
                                    params=params, clip_value=CLIP))
    output, h_n = run(x, h_0)
    jax.block_until_ready((output, h_n))

    out_ref, hn_ref = _bigru_ref(x, h_0, params, CLIP, H)

    assert output.shape == (B, T, 2 * H) and h_n.shape == (2, B, H)
    np.testing.assert_allclose(np.asarray(output), np.asarray(out_ref),
                               rtol=1e-3, atol=1e-3)
    np.testing.assert_allclose(np.asarray(h_n), np.asarray(hn_ref),
                               rtol=1e-3, atol=1e-3)

    print("KERNEL_OK")
</pallas_src>

<mosaic_0001>
module attributes {stable_mosaic.version = 11 : i64} {
  func.func @kernel(%arg0: i32, %arg1: i32, %arg2: memref<1x16x4x64xf32, #tpu.memory_space<vmem>>, %arg3: memref<1x16x4x32xf32, #tpu.memory_space<vmem>>, %arg4: memref<1x4x32xf32, #tpu.memory_space<vmem>>, %arg5: memref<1x32x64xf32, #tpu.memory_space<vmem>>, %arg6: memref<1x32x32xf32, #tpu.memory_space<vmem>>, %arg7: memref<1x16x4x32xf32, #tpu.memory_space<vmem>>, %arg8: memref<4x32xf32, #tpu.memory_space<vmem>>) attributes {dimension_semantics = [#tpu.dimension_semantics<parallel>, #tpu.dimension_semantics<arbitrary>], iteration_bounds = array<i64: 2, 2>, scalar_prefetch = 0 : i64, scratch_operands = 1 : i64, tpu.core_type = #tpu.core_type<tc>, window_params = [{transform_indices = @transform_0, window_bounds = array<i64: 1, 16, 4, 64>}, {transform_indices = @transform_1, window_bounds = array<i64: 1, 16, 4, 32>}, {transform_indices = @transform_2, window_bounds = array<i64: 1, 4, 32>}, {transform_indices = @transform_3, window_bounds = array<i64: 1, 32, 64>}, {transform_indices = @transform_4, window_bounds = array<i64: 1, 32, 32>}, {transform_indices = @transform_5, window_bounds = array<i64: 1, 16, 4, 32>}]} {
    %c0_i32 = arith.constant 0 : i32
    %0 = arith.cmpi eq, %arg1, %c0_i32 : i32
    %1 = arith.extui %0 : i1 to i32
    %c0_i32_0 = arith.constant 0 : i32
    %2 = arith.cmpi ne, %1, %c0_i32_0 : i32
    scf.if %2 {
      %c0_282 = arith.constant 0 : index
      %c0_283 = arith.constant 0 : index
      %c0_284 = arith.constant 0 : index
      %601 = vector.load %arg4[%c0_282, %c0_283, %c0_284] : memref<1x4x32xf32, #tpu.memory_space<vmem>>, vector<1x4x32xf32>
      %602 = vector.shape_cast %601 : vector<1x4x32xf32> to vector<4x32xf32>
      %c0_285 = arith.constant 0 : index
      %c0_286 = arith.constant 0 : index
      %603 = vector.load %arg8[%c0_285, %c0_286] : memref<4x32xf32, #tpu.memory_space<vmem>>, vector<4x32xf32>
      tpu.vector_store %arg8[%c0_285, %c0_286], %602 {strides = array<i32>} : memref<4x32xf32, #tpu.memory_space<vmem>>, vector<4x32xf32>,
    } else {
    }
    %c0 = arith.constant 0 : index
    %c0_1 = arith.constant 0 : index
    %c0_2 = arith.constant 0 : index
    %3 = vector.load %arg5[%c0, %c0_1, %c0_2] : memref<1x32x64xf32, #tpu.memory_space<vmem>>, vector<1x32x64xf32>
    %4 = vector.shape_cast %3 : vector<1x32x64xf32> to vector<32x64xf32>
    %c0_3 = arith.constant 0 : index
    %c0_4 = arith.constant 0 : index
    %c0_5 = arith.constant 0 : index
    %5 = vector.load %arg6[%c0_3, %c0_4, %c0_5] : memref<1x32x32xf32, #tpu.memory_space<vmem>>, vector<1x32x32xf32>
    %6 = vector.shape_cast %5 : vector<1x32x32xf32> to vector<32x32xf32>
    %c0_6 = arith.constant 0 : index
    %c0_7 = arith.constant 0 : index
    %7 = vector.load %arg8[%c0_6, %c0_7] : memref<4x32xf32, #tpu.memory_space<vmem>>, vector<4x32xf32>
    %c0_i32_8 = arith.constant 0 : i32
    %c1_i32 = arith.constant 1 : i32
    %8 = arith.subi %c1_i32, %arg0 : i32
    %9 = arith.muli %8, %c0_i32_8 : i32
    %c15_i32 = arith.constant 15 : i32
    %10 = arith.subi %c15_i32, %c0_i32_8 : i32
    %11 = arith.muli %arg0, %10 : i32
    %12 = arith.addi %9, %11 : i32
    %c0_9 = arith.constant 0 : index
    %13 = arith.index_cast %12 : i32 to index
    %c0_10 = arith.constant 0 : index
    %c0_11 = arith.constant 0 : index
    %14 = vector.load %arg2[%c0_9, %13, %c0_10, %c0_11] : memref<1x16x4x64xf32, #tpu.memory_space<vmem>>, vector<1x1x4x64xf32>
    %15 = vector.shape_cast %14 : vector<1x1x4x64xf32> to vector<4x64xf32>
    %c0_12 = arith.constant 0 : index
    %16 = arith.index_cast %12 : i32 to index
    %c0_13 = arith.constant 0 : index
    %c0_14 = arith.constant 0 : index
    %17 = vector.load %arg3[%c0_12, %16, %c0_13, %c0_14] : memref<1x16x4x32xf32, #tpu.memory_space<vmem>>, vector<1x1x4x32xf32>
    %18 = vector.shape_cast %17 : vector<1x1x4x32xf32> to vector<4x32xf32>
    %cst = arith.constant dense<0.000000e+00> : vector<4x64xf32>
    %19 = tpu.matmul %7, %4, %cst {dimension_numbers = #tpu.dot_dimension_numbers<[1], [0], [0], [1], [0, 0, 1, 1], [], []>} : vector<4x32xf32>, vector<32x64xf32>, vector<4x64xf32> -> vector<4x64xf32>
    %20 = arith.addf %15, %19 : vector<4x64xf32>
    %21 = arith.negf %20 : vector<4x64xf32>
    %22 = math.exp %21 : vector<4x64xf32>
    %cst_15 = arith.constant 1.000000e+00 : f32
    %23 = vector.broadcast %cst_15 : f32 to vector<4x64xf32>
    %24 = arith.addf %23, %22 : vector<4x64xf32>
    %25 = arith.divf %23, %24 : vector<4x64xf32>
    %26 = vector.extract_strided_slice %25 {offsets = [0, 0], sizes = [4, 32], strides = [1, 1]} : vector<4x64xf32> to vector<4x32xf32>
    %27 = vector.extract_strided_slice %25 {offsets = [0, 32], sizes = [4, 32], strides = [1, 1]} : vector<4x64xf32> to vector<4x32xf32>
    %28 = arith.mulf %27, %7 : vector<4x32xf32>
    %cst_16 = arith.constant dense<0.000000e+00> : vector<4x32xf32>
    %29 = tpu.matmul %28, %6, %cst_16 {dimension_numbers = #tpu.dot_dimension_numbers<[1], [0], [0], [1], [0, 0, 1, 1], [], []>} : vector<4x32xf32>, vector<32x32xf32>, vector<4x32xf32> -> vector<4x32xf32>
    %30 = arith.addf %18, %29 : vector<4x32xf32>
    %31 = math.tanh %30 : vector<4x32xf32>
    %32 = arith.mulf %26, %7 : vector<4x32xf32>
    %cst_17 = arith.constant 1.000000e+00 : f32
    %33 = vector.broadcast %cst_17 : f32 to vector<4x32xf32>
    %34 = arith.subf %33, %26 : vector<4x32xf32>
    %35 = arith.mulf %34, %31 : vector<4x32xf32>
    %36 = arith.addf %32, %35 : vector<4x32xf32>
    %cst_18 = arith.constant -5.000000e+00 : f32
    %cst_19 = arith.constant 5.000000e+00 : f32
    %37 = vector.broadcast %cst_18 : f32 to vector<4x32xf32>
    %38 = arith.maximumf %37, %36 : vector<4x32xf32>
    %39 = vector.broadcast %cst_19 : f32 to vector<4x32xf32>
    %40 = arith.minimumf %39, %38 : vector<4x32xf32>
    %c0_20 = arith.constant 0 : index
    %41 = arith.index_cast %12 : i32 to index
    %c0_21 = arith.constant 0 : index
    %c0_22 = arith.constant 0 : index
    %42 = vector.load %arg7[%c0_20, %41, %c0_21, %c0_22] : memref<1x16x4x32xf32, #tpu.memory_space<vmem>>, vector<1x1x4x32xf32>
    %43 = vector.shape_cast %42 : vector<1x1x4x32xf32> to vector<4x32xf32>
    %44 = vector.shape_cast %40 : vector<4x32xf32> to vector<1x1x4x32xf32>
    tpu.vector_store %arg7[%c0_20, %41, %c0_21, %c0_22], %44 {strides = array<i32>} : memref<1x16x4x32xf32, #tpu.memory_space<vmem>>, vector<1x1x4x32xf32>,
    %c1_i32_23 = arith.constant 1 : i32
    %c1_i32_24 = arith.constant 1 : i32
    %45 = arith.subi %c1_i32_24, %arg0 : i32
    %46 = arith.muli %45, %c1_i32_23 : i32
    %c15_i32_25 = arith.constant 15 : i32
    %47 = arith.subi %c15_i32_25, %c1_i32_23 : i32
    %48 = arith.muli %arg0, %47 : i32
    %49 = arith.addi %46, %48 : i32
    %c0_26 = arith.constant 0 : index
    %50 = arith.index_cast %49 : i32 to index
    %c0_27 = arith.constant 0 : index
    %c0_28 = arith.constant 0 : index
    %51 = vector.load %arg2[%c0_26, %50, %c0_27, %c0_28] : memref<1x16x4x64xf32, #tpu.memory_space<vmem>>, vector<1x1x4x64xf32>
    %52 = vector.shape_cast %51 : vector<1x1x4x64xf32> to vector<4x64xf32>
    %c0_29 = arith.constant 0 : index
    %53 = arith.index_cast %49 : i32 to index
    %c0_30 = arith.constant 0 : index
    %c0_31 = arith.constant 0 : index
    %54 = vector.load %arg3[%c0_29, %53, %c0_30, %c0_31] : memref<1x16x4x32xf32, #tpu.memory_space<vmem>>, vector<1x1x4x32xf32>
    %55 = vector.shape_cast %54 : vector<1x1x4x32xf32> to vector<4x32xf32>
    %cst_32 = arith.constant dense<0.000000e+00> : vector<4x64xf32>
    %56 = tpu.matmul %40, %4, %cst_32 {dimension_numbers = #tpu.dot_dimension_numbers<[1], [0], [0], [1], [0, 0, 1, 1], [], []>} : vector<4x32xf32>, vector<32x64xf32>, vector<4x64xf32> -> vector<4x64xf32>
    %57 = arith.addf %52, %56 : vector<4x64xf32>
    %58 = arith.negf %57 : vector<4x64xf32>
    %59 = math.exp %58 : vector<4x64xf32>
    %cst_33 = arith.constant 1.000000e+00 : f32
    %60 = vector.broadcast %cst_33 : f32 to vector<4x64xf32>
    %61 = arith.addf %60, %59 : vector<4x64xf32>
    %62 = arith.divf %60, %61 : vector<4x64xf32>
    %63 = vector.extract_strided_slice %62 {offsets = [0, 0], sizes = [4, 32], strides = [1, 1]} : vector<4x64xf32> to vector<4x32xf32>
    %64 = vector.extract_strided_slice %62 {offsets = [0, 32], sizes = [4, 32], strides = [1, 1]} : vector<4x64xf32> to vector<4x32xf32>
    %65 = arith.mulf %64, %40 : vector<4x32xf32>
    %cst_34 = arith.constant dense<0.000000e+00> : vector<4x32xf32>
    %66 = tpu.matmul %65, %6, %cst_34 {dimension_numbers = #tpu.dot_dimension_numbers<[1], [0], [0], [1], [0, 0, 1, 1], [], []>} : vector<4x32xf32>, vector<32x32xf32>, vector<4x32xf32> -> vector<4x32xf32>
    %67 = arith.addf %55, %66 : vector<4x32xf32>
    %68 = math.tanh %67 : vector<4x32xf32>
    %69 = arith.mulf %63, %40 : vector<4x32xf32>
    %cst_35 = arith.constant 1.000000e+00 : f32
    %70 = vector.broadcast %cst_35 : f32 to vector<4x32xf32>
    %71 = arith.subf %70, %63 : vector<4x32xf32>
    %72 = arith.mulf %71, %68 : vector<4x32xf32>
    %73 = arith.addf %69, %72 : vector<4x32xf32>
    %cst_36 = arith.constant -5.000000e+00 : f32
    %cst_37 = arith.constant 5.000000e+00 : f32
    %74 = vector.broadcast %cst_36 : f32 to vector<4x32xf32>
    %75 = arith.maximumf %74, %73 : vector<4x32xf32>
    %76 = vector.broadcast %cst_37 : f32 to vector<4x32xf32>
    %77 = arith.minimumf %76, %75 : vector<4x32xf32>
    %c0_38 = arith.constant 0 : index
    %78 = arith.index_cast %49 : i32 to index
    %c0_39 = arith.constant 0 : index
    %c0_40 = arith.constant 0 : index
    %79 = vector.load %arg7[%c0_38, %78, %c0_39, %c0_40] : memref<1x16x4x32xf32, #tpu.memory_space<vmem>>, vector<1x1x4x32xf32>
    %80 = vector.shape_cast %79 : vector<1x1x4x32xf32> to vector<4x32xf32>
    %81 = vector.shape_cast %77 : vector<4x32xf32> to vector<1x1x4x32xf32>
    tpu.vector_store %arg7[%c0_38, %78, %c0_39, %c0_40], %81 {strides = array<i32>} : memref<1x16x4x32xf32, #tpu.memory_space<vmem>>, vector<1x1x4x32xf32>,
    %c2_i32 = arith.constant 2 : i32
    %c1_i32_41 = arith.constant 1 : i32
    %82 = arith.subi %c1_i32_41, %arg0 : i32
    %83 = arith.muli %82, %c2_i32 : i32
    %c15_i32_42 = arith.constant 15 : i32
    %84 = arith.subi %c15_i32_42, %c2_i32 : i32
    %85 = arith.muli %arg0, %84 : i32
    %86 = arith.addi %83, %85 : i32
    %c0_43 = arith.constant 0 : index
    %87 = arith.index_cast %86 : i32 to index
    %c0_44 = arith.constant 0 : index
    %c0_45 = arith.constant 0 : index
    %88 = vector.load %arg2[%c0_43, %87, %c0_44, %c0_45] : memref<1x16x4x64xf32, #tpu.memory_space<vmem>>, vector<1x1x4x64xf32>
    %89 = vector.shape_cast %88 : vector<1x1x4x64xf32> to vector<4x64xf32>
    %c0_46 = arith.constant 0 : index
    %90 = arith.index_cast %86 : i32 to index
    %c0_47 = arith.constant 0 : index
    %c0_48 = arith.constant 0 : index
    %91 = vector.load %arg3[%c0_46, %90, %c0_47, %c0_48] : memref<1x16x4x32xf32, #tpu.memory_space<vmem>>, vector<1x1x4x32xf32>
    %92 = vector.shape_cast %91 : vector<1x1x4x32xf32> to vector<4x32xf32>
    %cst_49 = arith.constant dense<0.000000e+00> : vector<4x64xf32>
    %93 = tpu.matmul %77, %4, %cst_49 {dimension_numbers = #tpu.dot_dimension_numbers<[1], [0], [0], [1], [0, 0, 1, 1], [], []>} : vector<4x32xf32>, vector<32x64xf32>, vector<4x64xf32> -> vector<4x64xf32>
    %94 = arith.addf %89, %93 : vector<4x64xf32>
    %95 = arith.negf %94 : vector<4x64xf32>
    %96 = math.exp %95 : vector<4x64xf32>
    %cst_50 = arith.constant 1.000000e+00 : f32
    %97 = vector.broadcast %cst_50 : f32 to vector<4x64xf32>
    %98 = arith.addf %97, %96 : vector<4x64xf32>
    %99 = arith.divf %97, %98 : vector<4x64xf32>
    %100 = vector.extract_strided_slice %99 {offsets = [0, 0], sizes = [4, 32], strides = [1, 1]} : vector<4x64xf32> to vector<4x32xf32>
    %101 = vector.extract_strided_slice %99 {offsets = [0, 32], sizes = [4, 32], strides = [1, 1]} : vector<4x64xf32> to vector<4x32xf32>
    %102 = arith.mulf %101, %77 : vector<4x32xf32>
    %cst_51 = arith.constant dense<0.000000e+00> : vector<4x32xf32>
    %103 = tpu.matmul %102, %6, %cst_51 {dimension_numbers = #tpu.dot_dimension_numbers<[1], [0], [0], [1], [0, 0, 1, 1], [], []>} : vector<4x32xf32>, vector<32x32xf32>, vector<4x32xf32> -> vector<4x32xf32>
    %104 = arith.addf %92, %103 : vector<4x32xf32>
    %105 = math.tanh %104 : vector<4x32xf32>
    %106 = arith.mulf %100, %77 : vector<4x32xf32>
    %cst_52 = arith.constant 1.000000e+00 : f32
    %107 = vector.broadcast %cst_52 : f32 to vector<4x32xf32>
    %108 = arith.subf %107, %100 : vector<4x32xf32>
    %109 = arith.mulf %108, %105 : vector<4x32xf32>
    %110 = arith.addf %106, %109 : vector<4x32xf32>
    %cst_53 = arith.constant -5.000000e+00 : f32
    %cst_54 = arith.constant 5.000000e+00 : f32
    %111 = vector.broadcast %cst_53 : f32 to vector<4x32xf32>
    %112 = arith.maximumf %111, %110 : vector<4x32xf32>
    %113 = vector.broadcast %cst_54 : f32 to vector<4x32xf32>
    %114 = arith.minimumf %113, %112 : vector<4x32xf32>
    %c0_55 = arith.constant 0 : index
    %115 = arith.index_cast %86 : i32 to index
    %c0_56 = arith.constant 0 : index
    %c0_57 = arith.constant 0 : index
    %116 = vector.load %arg7[%c0_55, %115, %c0_56, %c0_57] : memref<1x16x4x32xf32, #tpu.memory_space<vmem>>, vector<1x1x4x32xf32>
    %117 = vector.shape_cast %116 : vector<1x1x4x32xf32> to vector<4x32xf32>
    %118 = vector.shape_cast %114 : vector<4x32xf32> to vector<1x1x4x32xf32>
    tpu.vector_store %arg7[%c0_55, %115, %c0_56, %c0_57], %118 {strides = array<i32>} : memref<1x16x4x32xf32, #tpu.memory_space<vmem>>, vector<1x1x4x32xf32>,
    %c3_i32 = arith.constant 3 : i32
    %c1_i32_58 = arith.constant 1 : i32
    %119 = arith.subi %c1_i32_58, %arg0 : i32
    %120 = arith.muli %119, %c3_i32 : i32
    %c15_i32_59 = arith.constant 15 : i32
    %121 = arith.subi %c15_i32_59, %c3_i32 : i32
    %122 = arith.muli %arg0, %121 : i32
    %123 = arith.addi %120, %122 : i32
    %c0_60 = arith.constant 0 : index
    %124 = arith.index_cast %123 : i32 to index
    %c0_61 = arith.constant 0 : index
    %c0_62 = arith.constant 0 : index
    %125 = vector.load %arg2[%c0_60, %124, %c0_61, %c0_62] : memref<1x16x4x64xf32, #tpu.memory_space<vmem>>, vector<1x1x4x64xf32>
    %126 = vector.shape_cast %125 : vector<1x1x4x64xf32> to vector<4x64xf32>
    %c0_63 = arith.constant 0 : index
    %127 = arith.index_cast %123 : i32 to index
    %c0_64 = arith.constant 0 : index
    %c0_65 = arith.constant 0 : index
    %128 = vector.load %arg3[%c0_63, %127, %c0_64, %c0_65] : memref<1x16x4x32xf32, #tpu.memory_space<vmem>>, vector<1x1x4x32xf32>
    %129 = vector.shape_cast %128 : vector<1x1x4x32xf32> to vector<4x32xf32>
    %cst_66 = arith.constant dense<0.000000e+00> : vector<4x64xf32>
    %130 = tpu.matmul %114, %4, %cst_66 {dimension_numbers = #tpu.dot_dimension_numbers<[1], [0], [0], [1], [0, 0, 1, 1], [], []>} : vector<4x32xf32>, vector<32x64xf32>, vector<4x64xf32> -> vector<4x64xf32>
    %131 = arith.addf %126, %130 : vector<4x64xf32>
    %132 = arith.negf %131 : vector<4x64xf32>
    %133 = math.exp %132 : vector<4x64xf32>
    %cst_67 = arith.constant 1.000000e+00 : f32
    %134 = vector.broadcast %cst_67 : f32 to vector<4x64xf32>
    %135 = arith.addf %134, %133 : vector<4x64xf32>
    %136 = arith.divf %134, %135 : vector<4x64xf32>
    %137 = vector.extract_strided_slice %136 {offsets = [0, 0], sizes = [4, 32], strides = [1, 1]} : vector<4x64xf32> to vector<4x32xf32>
    %138 = vector.extract_strided_slice %136 {offsets = [0, 32], sizes = [4, 32], strides = [1, 1]} : vector<4x64xf32> to vector<4x32xf32>
    %139 = arith.mulf %138, %114 : vector<4x32xf32>
    %cst_68 = arith.constant dense<0.000000e+00> : vector<4x32xf32>
    %140 = tpu.matmul %139, %6, %cst_68 {dimension_numbers = #tpu.dot_dimension_numbers<[1], [0], [0], [1], [0, 0, 1, 1], [], []>} : vector<4x32xf32>, vector<32x32xf32>, vector<4x32xf32> -> vector<4x32xf32>
    %141 = arith.addf %129, %140 : vector<4x32xf32>
    %142 = math.tanh %141 : vector<4x32xf32>
    %143 = arith.mulf %137, %114 : vector<4x32xf32>
    %cst_69 = arith.constant 1.000000e+00 : f32
    %144 = vector.broadcast %cst_69 : f32 to vector<4x32xf32>
    %145 = arith.subf %144, %137 : vector<4x32xf32>
    %146 = arith.mulf %145, %142 : vector<4x32xf32>
    %147 = arith.addf %143, %146 : vector<4x32xf32>
    %cst_70 = arith.constant -5.000000e+00 : f32
    %cst_71 = arith.constant 5.000000e+00 : f32
    %148 = vector.broadcast %cst_70 : f32 to vector<4x32xf32>
    %149 = arith.maximumf %148, %147 : vector<4x32xf32>
    %150 = vector.broadcast %cst_71 : f32 to vector<4x32xf32>
    %151 = arith.minimumf %150, %149 : vector<4x32xf32>
    %c0_72 = arith.constant 0 : index
    %152 = arith.index_cast %123 : i32 to index
    %c0_73 = arith.constant 0 : index
    %c0_74 = arith.constant 0 : index
    %153 = vector.load %arg7[%c0_72, %152, %c0_73, %c0_74] : memref<1x16x4x32xf32, #tpu.memory_space<vmem>>, vector<1x1x4x32xf32>
    %154 = vector.shape_cast %153 : vector<1x1x4x32xf32> to vector<4x32xf32>
    %155 = vector.shape_cast %151 : vector<4x32xf32> to vector<1x1x4x32xf32>
    tpu.vector_store %arg7[%c0_72, %152, %c0_73, %c0_74], %155 {strides = array<i32>} : memref<1x16x4x32xf32, #tpu.memory_space<vmem>>, vector<1x1x4x32xf32>,
    %c4_i32 = arith.constant 4 : i32
    %c1_i32_75 = arith.constant 1 : i32
    %156 = arith.subi %c1_i32_75, %arg0 : i32
    %157 = arith.muli %156, %c4_i32 : i32
    %c15_i32_76 = arith.constant 15 : i32
    %158 = arith.subi %c15_i32_76, %c4_i32 : i32
    %159 = arith.muli %arg0, %158 : i32
    %160 = arith.addi %157, %159 : i32
    %c0_77 = arith.constant 0 : index
    %161 = arith.index_cast %160 : i32 to index
    %c0_78 = arith.constant 0 : index
    %c0_79 = arith.constant 0 : index
    %162 = vector.load %arg2[%c0_77, %161, %c0_78, %c0_79] : memref<1x16x4x64xf32, #tpu.memory_space<vmem>>, vector<1x1x4x64xf32>
    %163 = vector.shape_cast %162 : vector<1x1x4x64xf32> to vector<4x64xf32>
    %c0_80 = arith.constant 0 : index
    %164 = arith.index_cast %160 : i32 to index
    %c0_81 = arith.constant 0 : index
    %c0_82 = arith.constant 0 : index
    %165 = vector.load %arg3[%c0_80, %164, %c0_81, %c0_82] : memref<1x16x4x32xf32, #tpu.memory_space<vmem>>, vector<1x1x4x32xf32>
    %166 = vector.shape_cast %165 : vector<1x1x4x32xf32> to vector<4x32xf32>
    %cst_83 = arith.constant dense<0.000000e+00> : vector<4x64xf32>
    %167 = tpu.matmul %151, %4, %cst_83 {dimension_numbers = #tpu.dot_dimension_numbers<[1], [0], [0], [1], [0, 0, 1, 1], [], []>} : vector<4x32xf32>, vector<32x64xf32>, vector<4x64xf32> -> vector<4x64xf32>
    %168 = arith.addf %163, %167 : vector<4x64xf32>
    %169 = arith.negf %168 : vector<4x64xf32>
    %170 = math.exp %169 : vector<4x64xf32>
    %cst_84 = arith.constant 1.000000e+00 : f32
    %171 = vector.broadcast %cst_84 : f32 to vector<4x64xf32>
    %172 = arith.addf %171, %170 : vector<4x64xf32>
    %173 = arith.divf %171, %172 : vector<4x64xf32>
    %174 = vector.extract_strided_slice %173 {offsets = [0, 0], sizes = [4, 32], strides = [1, 1]} : vector<4x64xf32> to vector<4x32xf32>
    %175 = vector.extract_strided_slice %173 {offsets = [0, 32], sizes = [4, 32], strides = [1, 1]} : vector<4x64xf32> to vector<4x32xf32>
    %176 = arith.mulf %175, %151 : vector<4x32xf32>
    %cst_85 = arith.constant dense<0.000000e+00> : vector<4x32xf32>
    %177 = tpu.matmul %176, %6, %cst_85 {dimension_numbers = #tpu.dot_dimension_numbers<[1], [0], [0], [1], [0, 0, 1, 1], [], []>} : vector<4x32xf32>, vector<32x32xf32>, vector<4x32xf32> -> vector<4x32xf32>
    %178 = arith.addf %166, %177 : vector<4x32xf32>
    %179 = math.tanh %178 : vector<4x32xf32>
    %180 = arith.mulf %174, %151 : vector<4x32xf32>
    %cst_86 = arith.constant 1.000000e+00 : f32
    %181 = vector.broadcast %cst_86 : f32 to vector<4x32xf32>
    %182 = arith.subf %181, %174 : vector<4x32xf32>
    %183 = arith.mulf %182, %179 : vector<4x32xf32>
    %184 = arith.addf %180, %183 : vector<4x32xf32>
    %cst_87 = arith.constant -5.000000e+00 : f32
    %cst_88 = arith.constant 5.000000e+00 : f32
    %185 = vector.broadcast %cst_87 : f32 to vector<4x32xf32>
    %186 = arith.maximumf %185, %184 : vector<4x32xf32>
    %187 = vector.broadcast %cst_88 : f32 to vector<4x32xf32>
    %188 = arith.minimumf %187, %186 : vector<4x32xf32>
    %c0_89 = arith.constant 0 : index
    %189 = arith.index_cast %160 : i32 to index
    %c0_90 = arith.constant 0 : index
    %c0_91 = arith.constant 0 : index
    %190 = vector.load %arg7[%c0_89, %189, %c0_90, %c0_91] : memref<1x16x4x32xf32, #tpu.memory_space<vmem>>, vector<1x1x4x32xf32>
    %191 = vector.shape_cast %190 : vector<1x1x4x32xf32> to vector<4x32xf32>
    %192 = vector.shape_cast %188 : vector<4x32xf32> to vector<1x1x4x32xf32>
    tpu.vector_store %arg7[%c0_89, %189, %c0_90, %c0_91], %192 {strides = array<i32>} : memref<1x16x4x32xf32, #tpu.memory_space<vmem>>, vector<1x1x4x32xf32>,
    %c5_i32 = arith.constant 5 : i32
    %c1_i32_92 = arith.constant 1 : i32
    %193 = arith.subi %c1_i32_92, %arg0 : i32
    %194 = arith.muli %193, %c5_i32 : i32
    %c15_i32_93 = arith.constant 15 : i32
    %195 = arith.subi %c15_i32_93, %c5_i32 : i32
    %196 = arith.muli %arg0, %195 : i32
    %197 = arith.addi %194, %196 : i32
    %c0_94 = arith.constant 0 : index
    %198 = arith.index_cast %197 : i32 to index
    %c0_95 = arith.constant 0 : index
    %c0_96 = arith.constant 0 : index
    %199 = vector.load %arg2[%c0_94, %198, %c0_95, %c0_96] : memref<1x16x4x64xf32, #tpu.memory_space<vmem>>, vector<1x1x4x64xf32>
    %200 = vector.shape_cast %199 : vector<1x1x4x64xf32> to vector<4x64xf32>
    %c0_97 = arith.constant 0 : index
    %201 = arith.index_cast %197 : i32 to index
    %c0_98 = arith.constant 0 : index
    %c0_99 = arith.constant 0 : index
    %202 = vector.load %arg3[%c0_97, %201, %c0_98, %c0_99] : memref<1x16x4x32xf32, #tpu.memory_space<vmem>>, vector<1x1x4x32xf32>
    %203 = vector.shape_cast %202 : vector<1x1x4x32xf32> to vector<4x32xf32>
    %cst_100 = arith.constant dense<0.000000e+00> : vector<4x64xf32>
    %204 = tpu.matmul %188, %4, %cst_100 {dimension_numbers = #tpu.dot_dimension_numbers<[1], [0], [0], [1], [0, 0, 1, 1], [], []>} : vector<4x32xf32>, vector<32x64xf32>, vector<4x64xf32> -> vector<4x64xf32>
    %205 = arith.addf %200, %204 : vector<4x64xf32>
    %206 = arith.negf %205 : vector<4x64xf32>
    %207 = math.exp %206 : vector<4x64xf32>
    %cst_101 = arith.constant 1.000000e+00 : f32
    %208 = vector.broadcast %cst_101 : f32 to vector<4x64xf32>
    %209 = arith.addf %208, %207 : vector<4x64xf32>
    %210 = arith.divf %208, %209 : vector<4x64xf32>
    %211 = vector.extract_strided_slice %210 {offsets = [0, 0], sizes = [4, 32], strides = [1, 1]} : vector<4x64xf32> to vector<4x32xf32>
    %212 = vector.extract_strided_slice %210 {offsets = [0, 32], sizes = [4, 32], strides = [1, 1]} : vector<4x64xf32> to vector<4x32xf32>
    %213 = arith.mulf %212, %188 : vector<4x32xf32>
    %cst_102 = arith.constant dense<0.000000e+00> : vector<4x32xf32>
    %214 = tpu.matmul %213, %6, %cst_102 {dimension_numbers = #tpu.dot_dimension_numbers<[1], [0], [0], [1], [0, 0, 1, 1], [], []>} : vector<4x32xf32>, vector<32x32xf32>, vector<4x32xf32> -> vector<4x32xf32>
    %215 = arith.addf %203, %214 : vector<4x32xf32>
    %216 = math.tanh %215 : vector<4x32xf32>
    %217 = arith.mulf %211, %188 : vector<4x32xf32>
    %cst_103 = arith.constant 1.000000e+00 : f32
    %218 = vector.broadcast %cst_103 : f32 to vector<4x32xf32>
    %219 = arith.subf %218, %211 : vector<4x32xf32>
    %220 = arith.mulf %219, %216 : vector<4x32xf32>
    %221 = arith.addf %217, %220 : vector<4x32xf32>
    %cst_104 = arith.constant -5.000000e+00 : f32
    %cst_105 = arith.constant 5.000000e+00 : f32
    %222 = vector.broadcast %cst_104 : f32 to vector<4x32xf32>
    %223 = arith.maximumf %222, %221 : vector<4x32xf32>
    %224 = vector.broadcast %cst_105 : f32 to vector<4x32xf32>
    %225 = arith.minimumf %224, %223 : vector<4x32xf32>
    %c0_106 = arith.constant 0 : index
    %226 = arith.index_cast %197 : i32 to index
    %c0_107 = arith.constant 0 : index
    %c0_108 = arith.constant 0 : index
    %227 = vector.load %arg7[%c0_106, %226, %c0_107, %c0_108] : memref<1x16x4x32xf32, #tpu.memory_space<vmem>>, vector<1x1x4x32xf32>
    %228 = vector.shape_cast %227 : vector<1x1x4x32xf32> to vector<4x32xf32>
    %229 = vector.shape_cast %225 : vector<4x32xf32> to vector<1x1x4x32xf32>
    tpu.vector_store %arg7[%c0_106, %226, %c0_107, %c0_108], %229 {strides = array<i32>} : memref<1x16x4x32xf32, #tpu.memory_space<vmem>>, vector<1x1x4x32xf32>,
    %c6_i32 = arith.constant 6 : i32
    %c1_i32_109 = arith.constant 1 : i32
    %230 = arith.subi %c1_i32_109, %arg0 : i32
    %231 = arith.muli %230, %c6_i32 : i32
    %c15_i32_110 = arith.constant 15 : i32
    %232 = arith.subi %c15_i32_110, %c6_i32 : i32
    %233 = arith.muli %arg0, %232 : i32
    %234 = arith.addi %231, %233 : i32
    %c0_111 = arith.constant 0 : index
    %235 = arith.index_cast %234 : i32 to index
    %c0_112 = arith.constant 0 : index
    %c0_113 = arith.constant 0 : index
    %236 = vector.load %arg2[%c0_111, %235, %c0_112, %c0_113] : memref<1x16x4x64xf32, #tpu.memory_space<vmem>>, vector<1x1x4x64xf32>
    %237 = vector.shape_cast %236 : vector<1x1x4x64xf32> to vector<4x64xf32>
    %c0_114 = arith.constant 0 : index
    %238 = arith.index_cast %234 : i32 to index
    %c0_115 = arith.constant 0 : index
    %c0_116 = arith.constant 0 : index
    %239 = vector.load %arg3[%c0_114, %238, %c0_115, %c0_116] : memref<1x16x4x32xf32, #tpu.memory_space<vmem>>, vector<1x1x4x32xf32>
    %240 = vector.shape_cast %239 : vector<1x1x4x32xf32> to vector<4x32xf32>
    %cst_117 = arith.constant dense<0.000000e+00> : vector<4x64xf32>
    %241 = tpu.matmul %225, %4, %cst_117 {dimension_numbers = #tpu.dot_dimension_numbers<[1], [0], [0], [1], [0, 0, 1, 1], [], []>} : vector<4x32xf32>, vector<32x64xf32>, vector<4x64xf32> -> vector<4x64xf32>
    %242 = arith.addf %237, %241 : vector<4x64xf32>
    %243 = arith.negf %242 : vector<4x64xf32>
    %244 = math.exp %243 : vector<4x64xf32>
    %cst_118 = arith.constant 1.000000e+00 : f32
    %245 = vector.broadcast %cst_118 : f32 to vector<4x64xf32>
    %246 = arith.addf %245, %244 : vector<4x64xf32>
    %247 = arith.divf %245, %246 : vector<4x64xf32>
    %248 = vector.extract_strided_slice %247 {offsets = [0, 0], sizes = [4, 32], strides = [1, 1]} : vector<4x64xf32> to vector<4x32xf32>
    %249 = vector.extract_strided_slice %247 {offsets = [0, 32], sizes = [4, 32], strides = [1, 1]} : vector<4x64xf32> to vector<4x32xf32>
    %250 = arith.mulf %249, %225 : vector<4x32xf32>
    %cst_119 = arith.constant dense<0.000000e+00> : vector<4x32xf32>
    %251 = tpu.matmul %250, %6, %cst_119 {dimension_numbers = #tpu.dot_dimension_numbers<[1], [0], [0], [1], [0, 0, 1, 1], [], []>} : vector<4x32xf32>, vector<32x32xf32>, vector<4x32xf32> -> vector<4x32xf32>
    %252 = arith.addf %240, %251 : vector<4x32xf32>
    %253 = math.tanh %252 : vector<4x32xf32>
    %254 = arith.mulf %248, %225 : vector<4x32xf32>
    %cst_120 = arith.constant 1.000000e+00 : f32
    %255 = vector.broadcast %cst_120 : f32 to vector<4x32xf32>
    %256 = arith.subf %255, %248 : vector<4x32xf32>
    %257 = arith.mulf %256, %253 : vector<4x32xf32>
    %258 = arith.addf %254, %257 : vector<4x32xf32>
    %cst_121 = arith.constant -5.000000e+00 : f32
    %cst_122 = arith.constant 5.000000e+00 : f32
    %259 = vector.broadcast %cst_121 : f32 to vector<4x32xf32>
    %260 = arith.maximumf %259, %258 : vector<4x32xf32>
    %261 = vector.broadcast %cst_122 : f32 to vector<4x32xf32>
    %262 = arith.minimumf %261, %260 : vector<4x32xf32>
    %c0_123 = arith.constant 0 : index
    %263 = arith.index_cast %234 : i32 to index
    %c0_124 = arith.constant 0 : index
    %c0_125 = arith.constant 0 : index
    %264 = vector.load %arg7[%c0_123, %263, %c0_124, %c0_125] : memref<1x16x4x32xf32, #tpu.memory_space<vmem>>, vector<1x1x4x32xf32>
    %265 = vector.shape_cast %264 : vector<1x1x4x32xf32> to vector<4x32xf32>
    %266 = vector.shape_cast %262 : vector<4x32xf32> to vector<1x1x4x32xf32>
    tpu.vector_store %arg7[%c0_123, %263, %c0_124, %c0_125], %266 {strides = array<i32>} : memref<1x16x4x32xf32, #tpu.memory_space<vmem>>, vector<1x1x4x32xf32>,
    %c7_i32 = arith.constant 7 : i32
    %c1_i32_126 = arith.constant 1 : i32
    %267 = arith.subi %c1_i32_126, %arg0 : i32
    %268 = arith.muli %267, %c7_i32 : i32
    %c15_i32_127 = arith.constant 15 : i32
    %269 = arith.subi %c15_i32_127, %c7_i32 : i32
    %270 = arith.muli %arg0, %269 : i32
    %271 = arith.addi %268, %270 : i32
    %c0_128 = arith.constant 0 : index
    %272 = arith.index_cast %271 : i32 to index
    %c0_129 = arith.constant 0 : index
    %c0_130 = arith.constant 0 : index
    %273 = vector.load %arg2[%c0_128, %272, %c0_129, %c0_130] : memref<1x16x4x64xf32, #tpu.memory_space<vmem>>, vector<1x1x4x64xf32>
    %274 = vector.shape_cast %273 : vector<1x1x4x64xf32> to vector<4x64xf32>
    %c0_131 = arith.constant 0 : index
    %275 = arith.index_cast %271 : i32 to index
    %c0_132 = arith.constant 0 : index
    %c0_133 = arith.constant 0 : index
    %276 = vector.load %arg3[%c0_131, %275, %c0_132, %c0_133] : memref<1x16x4x32xf32, #tpu.memory_space<vmem>>, vector<1x1x4x32xf32>
    %277 = vector.shape_cast %276 : vector<1x1x4x32xf32> to vector<4x32xf32>
    %cst_134 = arith.constant dense<0.000000e+00> : vector<4x64xf32>
    %278 = tpu.matmul %262, %4, %cst_134 {dimension_numbers = #tpu.dot_dimension_numbers<[1], [0], [0], [1], [0, 0, 1, 1], [], []>} : vector<4x32xf32>, vector<32x64xf32>, vector<4x64xf32> -> vector<4x64xf32>
    %279 = arith.addf %274, %278 : vector<4x64xf32>
    %280 = arith.negf %279 : vector<4x64xf32>
    %281 = math.exp %280 : vector<4x64xf32>
    %cst_135 = arith.constant 1.000000e+00 : f32
    %282 = vector.broadcast %cst_135 : f32 to vector<4x64xf32>
    %283 = arith.addf %282, %281 : vector<4x64xf32>
    %284 = arith.divf %282, %283 : vector<4x64xf32>
    %285 = vector.extract_strided_slice %284 {offsets = [0, 0], sizes = [4, 32], strides = [1, 1]} : vector<4x64xf32> to vector<4x32xf32>
    %286 = vector.extract_strided_slice %284 {offsets = [0, 32], sizes = [4, 32], strides = [1, 1]} : vector<4x64xf32> to vector<4x32xf32>
    %287 = arith.mulf %286, %262 : vector<4x32xf32>
    %cst_136 = arith.constant dense<0.000000e+00> : vector<4x32xf32>
    %288 = tpu.matmul %287, %6, %cst_136 {dimension_numbers = #tpu.dot_dimension_numbers<[1], [0], [0], [1], [0, 0, 1, 1], [], []>} : vector<4x32xf32>, vector<32x32xf32>, vector<4x32xf32> -> vector<4x32xf32>
    %289 = arith.addf %277, %288 : vector<4x32xf32>
    %290 = math.tanh %289 : vector<4x32xf32>
    %291 = arith.mulf %285, %262 : vector<4x32xf32>
    %cst_137 = arith.constant 1.000000e+00 : f32
    %292 = vector.broadcast %cst_137 : f32 to vector<4x32xf32>
    %293 = arith.subf %292, %285 : vector<4x32xf32>
    %294 = arith.mulf %293, %290 : vector<4x32xf32>
    %295 = arith.addf %291, %294 : vector<4x32xf32>
    %cst_138 = arith.constant -5.000000e+00 : f32
    %cst_139 = arith.constant 5.000000e+00 : f32
    %296 = vector.broadcast %cst_138 : f32 to vector<4x32xf32>
    %297 = arith.maximumf %296, %295 : vector<4x32xf32>
    %298 = vector.broadcast %cst_139 : f32 to vector<4x32xf32>
    %299 = arith.minimumf %298, %297 : vector<4x32xf32>
    %c0_140 = arith.constant 0 : index
    %300 = arith.index_cast %271 : i32 to index
    %c0_141 = arith.constant 0 : index
    %c0_142 = arith.constant 0 : index
    %301 = vector.load %arg7[%c0_140, %300, %c0_141, %c0_142] : memref<1x16x4x32xf32, #tpu.memory_space<vmem>>, vector<1x1x4x32xf32>
    %302 = vector.shape_cast %301 : vector<1x1x4x32xf32> to vector<4x32xf32>
    %303 = vector.shape_cast %299 : vector<4x32xf32> to vector<1x1x4x32xf32>
    tpu.vector_store %arg7[%c0_140, %300, %c0_141, %c0_142], %303 {strides = array<i32>} : memref<1x16x4x32xf32, #tpu.memory_space<vmem>>, vector<1x1x4x32xf32>,
    %c8_i32 = arith.constant 8 : i32
    %c1_i32_143 = arith.constant 1 : i32
    %304 = arith.subi %c1_i32_143, %arg0 : i32
    %305 = arith.muli %304, %c8_i32 : i32
    %c15_i32_144 = arith.constant 15 : i32
    %306 = arith.subi %c15_i32_144, %c8_i32 : i32
    %307 = arith.muli %arg0, %306 : i32
    %308 = arith.addi %305, %307 : i32
    %c0_145 = arith.constant 0 : index
    %309 = arith.index_cast %308 : i32 to index
    %c0_146 = arith.constant 0 : index
    %c0_147 = arith.constant 0 : index
    %310 = vector.load %arg2[%c0_145, %309, %c0_146, %c0_147] : memref<1x16x4x64xf32, #tpu.memory_space<vmem>>, vector<1x1x4x64xf32>
    %311 = vector.shape_cast %310 : vector<1x1x4x64xf32> to vector<4x64xf32>
    %c0_148 = arith.constant 0 : index
    %312 = arith.index_cast %308 : i32 to index
    %c0_149 = arith.constant 0 : index
    %c0_150 = arith.constant 0 : index
    %313 = vector.load %arg3[%c0_148, %312, %c0_149, %c0_150] : memref<1x16x4x32xf32, #tpu.memory_space<vmem>>, vector<1x1x4x32xf32>
    %314 = vector.shape_cast %313 : vector<1x1x4x32xf32> to vector<4x32xf32>
    %cst_151 = arith.constant dense<0.000000e+00> : vector<4x64xf32>
    %315 = tpu.matmul %299, %4, %cst_151 {dimension_numbers = #tpu.dot_dimension_numbers<[1], [0], [0], [1], [0, 0, 1, 1], [], []>} : vector<4x32xf32>, vector<32x64xf32>, vector<4x64xf32> -> vector<4x64xf32>
    %316 = arith.addf %311, %315 : vector<4x64xf32>
    %317 = arith.negf %316 : vector<4x64xf32>
    %318 = math.exp %317 : vector<4x64xf32>
    %cst_152 = arith.constant 1.000000e+00 : f32
    %319 = vector.broadcast %cst_152 : f32 to vector<4x64xf32>
    %320 = arith.addf %319, %318 : vector<4x64xf32>
    %321 = arith.divf %319, %320 : vector<4x64xf32>
    %322 = vector.extract_strided_slice %321 {offsets = [0, 0], sizes = [4, 32], strides = [1, 1]} : vector<4x64xf32> to vector<4x32xf32>
    %323 = vector.extract_strided_slice %321 {offsets = [0, 32], sizes = [4, 32], strides = [1, 1]} : vector<4x64xf32> to vector<4x32xf32>
    %324 = arith.mulf %323, %299 : vector<4x32xf32>
    %cst_153 = arith.constant dense<0.000000e+00> : vector<4x32xf32>
    %325 = tpu.matmul %324, %6, %cst_153 {dimension_numbers = #tpu.dot_dimension_numbers<[1], [0], [0], [1], [0, 0, 1, 1], [], []>} : vector<4x32xf32>, vector<32x32xf32>, vector<4x32xf32> -> vector<4x32xf32>
    %326 = arith.addf %314, %325 : vector<4x32xf32>
    %327 = math.tanh %326 : vector<4x32xf32>
    %328 = arith.mulf %322, %299 : vector<4x32xf32>
    %cst_154 = arith.constant 1.000000e+00 : f32
    %329 = vector.broadcast %cst_154 : f32 to vector<4x32xf32>
    %330 = arith.subf %329, %322 : vector<4x32xf32>
    %331 = arith.mulf %330, %327 : vector<4x32xf32>
    %332 = arith.addf %328, %331 : vector<4x32xf32>
    %cst_155 = arith.constant -5.000000e+00 : f32
    %cst_156 = arith.constant 5.000000e+00 : f32
    %333 = vector.broadcast %cst_155 : f32 to vector<4x32xf32>
    %334 = arith.maximumf %333, %332 : vector<4x32xf32>
    %335 = vector.broadcast %cst_156 : f32 to vector<4x32xf32>
    %336 = arith.minimumf %335, %334 : vector<4x32xf32>
    %c0_157 = arith.constant 0 : index
    %337 = arith.index_cast %308 : i32 to index
    %c0_158 = arith.constant 0 : index
    %c0_159 = arith.constant 0 : index
    %338 = vector.load %arg7[%c0_157, %337, %c0_158, %c0_159] : memref<1x16x4x32xf32, #tpu.memory_space<vmem>>, vector<1x1x4x32xf32>
    %339 = vector.shape_cast %338 : vector<1x1x4x32xf32> to vector<4x32xf32>
    %340 = vector.shape_cast %336 : vector<4x32xf32> to vector<1x1x4x32xf32>
    tpu.vector_store %arg7[%c0_157, %337, %c0_158, %c0_159], %340 {strides = array<i32>} : memref<1x16x4x32xf32, #tpu.memory_space<vmem>>, vector<1x1x4x32xf32>,
    %c9_i32 = arith.constant 9 : i32
    %c1_i32_160 = arith.constant 1 : i32
    %341 = arith.subi %c1_i32_160, %arg0 : i32
    %342 = arith.muli %341, %c9_i32 : i32
    %c15_i32_161 = arith.constant 15 : i32
    %343 = arith.subi %c15_i32_161, %c9_i32 : i32
    %344 = arith.muli %arg0, %343 : i32
    %345 = arith.addi %342, %344 : i32
    %c0_162 = arith.constant 0 : index
    %346 = arith.index_cast %345 : i32 to index
    %c0_163 = arith.constant 0 : index
    %c0_164 = arith.constant 0 : index
    %347 = vector.load %arg2[%c0_162, %346, %c0_163, %c0_164] : memref<1x16x4x64xf32, #tpu.memory_space<vmem>>, vector<1x1x4x64xf32>
    %348 = vector.shape_cast %347 : vector<1x1x4x64xf32> to vector<4x64xf32>
    %c0_165 = arith.constant 0 : index
    %349 = arith.index_cast %345 : i32 to index
    %c0_166 = arith.constant 0 : index
    %c0_167 = arith.constant 0 : index
    %350 = vector.load %arg3[%c0_165, %349, %c0_166, %c0_167] : memref<1x16x4x32xf32, #tpu.memory_space<vmem>>, vector<1x1x4x32xf32>
    %351 = vector.shape_cast %350 : vector<1x1x4x32xf32> to vector<4x32xf32>
    %cst_168 = arith.constant dense<0.000000e+00> : vector<4x64xf32>
    %352 = tpu.matmul %336, %4, %cst_168 {dimension_numbers = #tpu.dot_dimension_numbers<[1], [0], [0], [1], [0, 0, 1, 1], [], []>} : vector<4x32xf32>, vector<32x64xf32>, vector<4x64xf32> -> vector<4x64xf32>
    %353 = arith.addf %348, %352 : vector<4x64xf32>
    %354 = arith.negf %353 : vector<4x64xf32>
    %355 = math.exp %354 : vector<4x64xf32>
    %cst_169 = arith.constant 1.000000e+00 : f32
    %356 = vector.broadcast %cst_169 : f32 to vector<4x64xf32>
    %357 = arith.addf %356, %355 : vector<4x64xf32>
    %358 = arith.divf %356, %357 : vector<4x64xf32>
    %359 = vector.extract_strided_slice %358 {offsets = [0, 0], sizes = [4, 32], strides = [1, 1]} : vector<4x64xf32> to vector<4x32xf32>
    %360 = vector.extract_strided_slice %358 {offsets = [0, 32], sizes = [4, 32], strides = [1, 1]} : vector<4x64xf32> to vector<4x32xf32>
    %361 = arith.mulf %360, %336 : vector<4x32xf32>
    %cst_170 = arith.constant dense<0.000000e+00> : vector<4x32xf32>
    %362 = tpu.matmul %361, %6, %cst_170 {dimension_numbers = #tpu.dot_dimension_numbers<[1], [0], [0], [1], [0, 0, 1, 1], [], []>} : vector<4x32xf32>, vector<32x32xf32>, vector<4x32xf32> -> vector<4x32xf32>
    %363 = arith.addf %351, %362 : vector<4x32xf32>
    %364 = math.tanh %363 : vector<4x32xf32>
    %365 = arith.mulf %359, %336 : vector<4x32xf32>
    %cst_171 = arith.constant 1.000000e+00 : f32
    %366 = vector.broadcast %cst_171 : f32 to vector<4x32xf32>
    %367 = arith.subf %366, %359 : vector<4x32xf32>
    %368 = arith.mulf %367, %364 : vector<4x32xf32>
    %369 = arith.addf %365, %368 : vector<4x32xf32>
    %cst_172 = arith.constant -5.000000e+00 : f32
    %cst_173 = arith.constant 5.000000e+00 : f32
    %370 = vector.broadcast %cst_172 : f32 to vector<4x32xf32>
    %371 = arith.maximumf %370, %369 : vector<4x32xf32>
    %372 = vector.broadcast %cst_173 : f32 to vector<4x32xf32>
    %373 = arith.minimumf %372, %371 : vector<4x32xf32>
    %c0_174 = arith.constant 0 : index
    %374 = arith.index_cast %345 : i32 to index
    %c0_175 = arith.constant 0 : index
    %c0_176 = arith.constant 0 : index
    %375 = vector.load %arg7[%c0_174, %374, %c0_175, %c0_176] : memref<1x16x4x32xf32, #tpu.memory_space<vmem>>, vector<1x1x4x32xf32>
    %376 = vector.shape_cast %375 : vector<1x1x4x32xf32> to vector<4x32xf32>
    %377 = vector.shape_cast %373 : vector<4x32xf32> to vector<1x1x4x32xf32>
    tpu.vector_store %arg7[%c0_174, %374, %c0_175, %c0_176], %377 {strides = array<i32>} : memref<1x16x4x32xf32, #tpu.memory_space<vmem>>, vector<1x1x4x32xf32>,
    %c10_i32 = arith.constant 10 : i32
    %c1_i32_177 = arith.constant 1 : i32
    %378 = arith.subi %c1_i32_177, %arg0 : i32
    %379 = arith.muli %378, %c10_i32 : i32
    %c15_i32_178 = arith.constant 15 : i32
    %380 = arith.subi %c15_i32_178, %c10_i32 : i32
    %381 = arith.muli %arg0, %380 : i32
    %382 = arith.addi %379, %381 : i32
    %c0_179 = arith.constant 0 : index
    %383 = arith.index_cast %382 : i32 to index
    %c0_180 = arith.constant 0 : index
    %c0_181 = arith.constant 0 : index
    %384 = vector.load %arg2[%c0_179, %383, %c0_180, %c0_181] : memref<1x16x4x64xf32, #tpu.memory_space<vmem>>, vector<1x1x4x64xf32>
    %385 = vector.shape_cast %384 : vector<1x1x4x64xf32> to vector<4x64xf32>
    %c0_182 = arith.constant 0 : index
    %386 = arith.index_cast %382 : i32 to index
    %c0_183 = arith.constant 0 : index
    %c0_184 = arith.constant 0 : index
    %387 = vector.load %arg3[%c0_182, %386, %c0_183, %c0_184] : memref<1x16x4x32xf32, #tpu.memory_space<vmem>>, vector<1x1x4x32xf32>
    %388 = vector.shape_cast %387 : vector<1x1x4x32xf32> to vector<4x32xf32>
    %cst_185 = arith.constant dense<0.000000e+00> : vector<4x64xf32>
    %389 = tpu.matmul %373, %4, %cst_185 {dimension_numbers = #tpu.dot_dimension_numbers<[1], [0], [0], [1], [0, 0, 1, 1], [], []>} : vector<4x32xf32>, vector<32x64xf32>, vector<4x64xf32> -> vector<4x64xf32>
    %390 = arith.addf %385, %389 : vector<4x64xf32>
    %391 = arith.negf %390 : vector<4x64xf32>
    %392 = math.exp %391 : vector<4x64xf32>
    %cst_186 = arith.constant 1.000000e+00 : f32
    %393 = vector.broadcast %cst_186 : f32 to vector<4x64xf32>
    %394 = arith.addf %393, %392 : vector<4x64xf32>
    %395 = arith.divf %393, %394 : vector<4x64xf32>
    %396 = vector.extract_strided_slice %395 {offsets = [0, 0], sizes = [4, 32], strides = [1, 1]} : vector<4x64xf32> to vector<4x32xf32>
    %397 = vector.extract_strided_slice %395 {offsets = [0, 32], sizes = [4, 32], strides = [1, 1]} : vector<4x64xf32> to vector<4x32xf32>
    %398 = arith.mulf %397, %373 : vector<4x32xf32>
    %cst_187 = arith.constant dense<0.000000e+00> : vector<4x32xf32>
    %399 = tpu.matmul %398, %6, %cst_187 {dimension_numbers = #tpu.dot_dimension_numbers<[1], [0], [0], [1], [0, 0, 1, 1], [], []>} : vector<4x32xf32>, vector<32x32xf32>, vector<4x32xf32> -> vector<4x32xf32>
    %400 = arith.addf %388, %399 : vector<4x32xf32>
    %401 = math.tanh %400 : vector<4x32xf32>
    %402 = arith.mulf %396, %373 : vector<4x32xf32>
    %cst_188 = arith.constant 1.000000e+00 : f32
    %403 = vector.broadcast %cst_188 : f32 to vector<4x32xf32>
    %404 = arith.subf %403, %396 : vector<4x32xf32>
    %405 = arith.mulf %404, %401 : vector<4x32xf32>
    %406 = arith.addf %402, %405 : vector<4x32xf32>
    %cst_189 = arith.constant -5.000000e+00 : f32
    %cst_190 = arith.constant 5.000000e+00 : f32
    %407 = vector.broadcast %cst_189 : f32 to vector<4x32xf32>
    %408 = arith.maximumf %407, %406 : vector<4x32xf32>
    %409 = vector.broadcast %cst_190 : f32 to vector<4x32xf32>
    %410 = arith.minimumf %409, %408 : vector<4x32xf32>
    %c0_191 = arith.constant 0 : index
    %411 = arith.index_cast %382 : i32 to index
    %c0_192 = arith.constant 0 : index
    %c0_193 = arith.constant 0 : index
    %412 = vector.load %arg7[%c0_191, %411, %c0_192, %c0_193] : memref<1x16x4x32xf32, #tpu.memory_space<vmem>>, vector<1x1x4x32xf32>
    %413 = vector.shape_cast %412 : vector<1x1x4x32xf32> to vector<4x32xf32>
    %414 = vector.shape_cast %410 : vector<4x32xf32> to vector<1x1x4x32xf32>
    tpu.vector_store %arg7[%c0_191, %411, %c0_192, %c0_193], %414 {strides = array<i32>} : memref<1x16x4x32xf32, #tpu.memory_space<vmem>>, vector<1x1x4x32xf32>,
    %c11_i32 = arith.constant 11 : i32
    %c1_i32_194 = arith.constant 1 : i32
    %415 = arith.subi %c1_i32_194, %arg0 : i32
    %416 = arith.muli %415, %c11_i32 : i32
    %c15_i32_195 = arith.constant 15 : i32
    %417 = arith.subi %c15_i32_195, %c11_i32 : i32
    %418 = arith.muli %arg0, %417 : i32
    %419 = arith.addi %416, %418 : i32
    %c0_196 = arith.constant 0 : index
    %420 = arith.index_cast %419 : i32 to index
    %c0_197 = arith.constant 0 : index
    %c0_198 = arith.constant 0 : index
    %421 = vector.load %arg2[%c0_196, %420, %c0_197, %c0_198] : memref<1x16x4x64xf32, #tpu.memory_space<vmem>>, vector<1x1x4x64xf32>
    %422 = vector.shape_cast %421 : vector<1x1x4x64xf32> to vector<4x64xf32>
    %c0_199 = arith.constant 0 : index
    %423 = arith.index_cast %419 : i32 to index
    %c0_200 = arith.constant 0 : index
    %c0_201 = arith.constant 0 : index
    %424 = vector.load %arg3[%c0_199, %423, %c0_200, %c0_201] : memref<1x16x4x32xf32, #tpu.memory_space<vmem>>, vector<1x1x4x32xf32>
    %425 = vector.shape_cast %424 : vector<1x1x4x32xf32> to vector<4x32xf32>
    %cst_202 = arith.constant dense<0.000000e+00> : vector<4x64xf32>
    %426 = tpu.matmul %410, %4, %cst_202 {dimension_numbers = #tpu.dot_dimension_numbers<[1], [0], [0], [1], [0, 0, 1, 1], [], []>} : vector<4x32xf32>, vector<32x64xf32>, vector<4x64xf32> -> vector<4x64xf32>
    %427 = arith.addf %422, %426 : vector<4x64xf32>
    %428 = arith.negf %427 : vector<4x64xf32>
    %429 = math.exp %428 : vector<4x64xf32>
    %cst_203 = arith.constant 1.000000e+00 : f32
    %430 = vector.broadcast %cst_203 : f32 to vector<4x64xf32>
    %431 = arith.addf %430, %429 : vector<4x64xf32>
    %432 = arith.divf %430, %431 : vector<4x64xf32>
    %433 = vector.extract_strided_slice %432 {offsets = [0, 0], sizes = [4, 32], strides = [1, 1]} : vector<4x64xf32> to vector<4x32xf32>
    %434 = vector.extract_strided_slice %432 {offsets = [0, 32], sizes = [4, 32], strides = [1, 1]} : vector<4x64xf32> to vector<4x32xf32>
    %435 = arith.mulf %434, %410 : vector<4x32xf32>
    %cst_204 = arith.constant dense<0.000000e+00> : vector<4x32xf32>
    %436 = tpu.matmul %435, %6, %cst_204 {dimension_numbers = #tpu.dot_dimension_numbers<[1], [0], [0], [1], [0, 0, 1, 1], [], []>} : vector<4x32xf32>, vector<32x32xf32>, vector<4x32xf32> -> vector<4x32xf32>
    %437 = arith.addf %425, %436 : vector<4x32xf32>
    %438 = math.tanh %437 : vector<4x32xf32>
    %439 = arith.mulf %433, %410 : vector<4x32xf32>
    %cst_205 = arith.constant 1.000000e+00 : f32
    %440 = vector.broadcast %cst_205 : f32 to vector<4x32xf32>
    %441 = arith.subf %440, %433 : vector<4x32xf32>
    %442 = arith.mulf %441, %438 : vector<4x32xf32>
    %443 = arith.addf %439, %442 : vector<4x32xf32>
    %cst_206 = arith.constant -5.000000e+00 : f32
    %cst_207 = arith.constant 5.000000e+00 : f32
    %444 = vector.broadcast %cst_206 : f32 to vector<4x32xf32>
    %445 = arith.maximumf %444, %443 : vector<4x32xf32>
    %446 = vector.broadcast %cst_207 : f32 to vector<4x32xf32>
    %447 = arith.minimumf %446, %445 : vector<4x32xf32>
    %c0_208 = arith.constant 0 : index
    %448 = arith.index_cast %419 : i32 to index
    %c0_209 = arith.constant 0 : index
    %c0_210 = arith.constant 0 : index
    %449 = vector.load %arg7[%c0_208, %448, %c0_209, %c0_210] : memref<1x16x4x32xf32, #tpu.memory_space<vmem>>, vector<1x1x4x32xf32>
    %450 = vector.shape_cast %449 : vector<1x1x4x32xf32> to vector<4x32xf32>
    %451 = vector.shape_cast %447 : vector<4x32xf32> to vector<1x1x4x32xf32>
    tpu.vector_store %arg7[%c0_208, %448, %c0_209, %c0_210], %451 {strides = array<i32>} : memref<1x16x4x32xf32, #tpu.memory_space<vmem>>, vector<1x1x4x32xf32>,
    %c12_i32 = arith.constant 12 : i32
    %c1_i32_211 = arith.constant 1 : i32
    %452 = arith.subi %c1_i32_211, %arg0 : i32
    %453 = arith.muli %452, %c12_i32 : i32
    %c15_i32_212 = arith.constant 15 : i32
    %454 = arith.subi %c15_i32_212, %c12_i32 : i32
    %455 = arith.muli %arg0, %454 : i32
    %456 = arith.addi %453, %455 : i32
    %c0_213 = arith.constant 0 : index
    %457 = arith.index_cast %456 : i32 to index
    %c0_214 = arith.constant 0 : index
    %c0_215 = arith.constant 0 : index
    %458 = vector.load %arg2[%c0_213, %457, %c0_214, %c0_215] : memref<1x16x4x64xf32, #tpu.memory_space<vmem>>, vector<1x1x4x64xf32>
    %459 = vector.shape_cast %458 : vector<1x1x4x64xf32> to vector<4x64xf32>
    %c0_216 = arith.constant 0 : index
    %460 = arith.index_cast %456 : i32 to index
    %c0_217 = arith.constant 0 : index
    %c0_218 = arith.constant 0 : index
    %461 = vector.load %arg3[%c0_216, %460, %c0_217, %c0_218] : memref<1x16x4x32xf32, #tpu.memory_space<vmem>>, vector<1x1x4x32xf32>
    %462 = vector.shape_cast %461 : vector<1x1x4x32xf32> to vector<4x32xf32>
    %cst_219 = arith.constant dense<0.000000e+00> : vector<4x64xf32>
    %463 = tpu.matmul %447, %4, %cst_219 {dimension_numbers = #tpu.dot_dimension_numbers<[1], [0], [0], [1], [0, 0, 1, 1], [], []>} : vector<4x32xf32>, vector<32x64xf32>, vector<4x64xf32> -> vector<4x64xf32>
    %464 = arith.addf %459, %463 : vector<4x64xf32>
    %465 = arith.negf %464 : vector<4x64xf32>
    %466 = math.exp %465 : vector<4x64xf32>
    %cst_220 = arith.constant 1.000000e+00 : f32
    %467 = vector.broadcast %cst_220 : f32 to vector<4x64xf32>
    %468 = arith.addf %467, %466 : vector<4x64xf32>
    %469 = arith.divf %467, %468 : vector<4x64xf32>
    %470 = vector.extract_strided_slice %469 {offsets = [0, 0], sizes = [4, 32], strides = [1, 1]} : vector<4x64xf32> to vector<4x32xf32>
    %471 = vector.extract_strided_slice %469 {offsets = [0, 32], sizes = [4, 32], strides = [1, 1]} : vector<4x64xf32> to vector<4x32xf32>
    %472 = arith.mulf %471, %447 : vector<4x32xf32>
    %cst_221 = arith.constant dense<0.000000e+00> : vector<4x32xf32>
    %473 = tpu.matmul %472, %6, %cst_221 {dimension_numbers = #tpu.dot_dimension_numbers<[1], [0], [0], [1], [0, 0, 1, 1], [], []>} : vector<4x32xf32>, vector<32x32xf32>, vector<4x32xf32> -> vector<4x32xf32>
    %474 = arith.addf %462, %473 : vector<4x32xf32>
    %475 = math.tanh %474 : vector<4x32xf32>
    %476 = arith.mulf %470, %447 : vector<4x32xf32>
    %cst_222 = arith.constant 1.000000e+00 : f32
    %477 = vector.broadcast %cst_222 : f32 to vector<4x32xf32>
    %478 = arith.subf %477, %470 : vector<4x32xf32>
    %479 = arith.mulf %478, %475 : vector<4x32xf32>
    %480 = arith.addf %476, %479 : vector<4x32xf32>
    %cst_223 = arith.constant -5.000000e+00 : f32
    %cst_224 = arith.constant 5.000000e+00 : f32
    %481 = vector.broadcast %cst_223 : f32 to vector<4x32xf32>
    %482 = arith.maximumf %481, %480 : vector<4x32xf32>
    %483 = vector.broadcast %cst_224 : f32 to vector<4x32xf32>
    %484 = arith.minimumf %483, %482 : vector<4x32xf32>
    %c0_225 = arith.constant 0 : index
    %485 = arith.index_cast %456 : i32 to index
    %c0_226 = arith.constant 0 : index
    %c0_227 = arith.constant 0 : index
    %486 = vector.load %arg7[%c0_225, %485, %c0_226, %c0_227] : memref<1x16x4x32xf32, #tpu.memory_space<vmem>>, vector<1x1x4x32xf32>
    %487 = vector.shape_cast %486 : vector<1x1x4x32xf32> to vector<4x32xf32>
    %488 = vector.shape_cast %484 : vector<4x32xf32> to vector<1x1x4x32xf32>
    tpu.vector_store %arg7[%c0_225, %485, %c0_226, %c0_227], %488 {strides = array<i32>} : memref<1x16x4x32xf32, #tpu.memory_space<vmem>>, vector<1x1x4x32xf32>,
    %c13_i32 = arith.constant 13 : i32
    %c1_i32_228 = arith.constant 1 : i32
    %489 = arith.subi %c1_i32_228, %arg0 : i32
    %490 = arith.muli %489, %c13_i32 : i32
    %c15_i32_229 = arith.constant 15 : i32
    %491 = arith.subi %c15_i32_229, %c13_i32 : i32
    %492 = arith.muli %arg0, %491 : i32
    %493 = arith.addi %490, %492 : i32
    %c0_230 = arith.constant 0 : index
    %494 = arith.index_cast %493 : i32 to index
    %c0_231 = arith.constant 0 : index
    %c0_232 = arith.constant 0 : index
    %495 = vector.load %arg2[%c0_230, %494, %c0_231, %c0_232] : memref<1x16x4x64xf32, #tpu.memory_space<vmem>>, vector<1x1x4x64xf32>
    %496 = vector.shape_cast %495 : vector<1x1x4x64xf32> to vector<4x64xf32>
    %c0_233 = arith.constant 0 : index
    %497 = arith.index_cast %493 : i32 to index
    %c0_234 = arith.constant 0 : index
    %c0_235 = arith.constant 0 : index
    %498 = vector.load %arg3[%c0_233, %497, %c0_234, %c0_235] : memref<1x16x4x32xf32, #tpu.memory_space<vmem>>, vector<1x1x4x32xf32>
    %499 = vector.shape_cast %498 : vector<1x1x4x32xf32> to vector<4x32xf32>
    %cst_236 = arith.constant dense<0.000000e+00> : vector<4x64xf32>
    %500 = tpu.matmul %484, %4, %cst_236 {dimension_numbers = #tpu.dot_dimension_numbers<[1], [0], [0], [1], [0, 0, 1, 1], [], []>} : vector<4x32xf32>, vector<32x64xf32>, vector<4x64xf32> -> vector<4x64xf32>
    %501 = arith.addf %496, %500 : vector<4x64xf32>
    %502 = arith.negf %501 : vector<4x64xf32>
    %503 = math.exp %502 : vector<4x64xf32>
    %cst_237 = arith.constant 1.000000e+00 : f32
    %504 = vector.broadcast %cst_237 : f32 to vector<4x64xf32>
    %505 = arith.addf %504, %503 : vector<4x64xf32>
    %506 = arith.divf %504, %505 : vector<4x64xf32>
    %507 = vector.extract_strided_slice %506 {offsets = [0, 0], sizes = [4, 32], strides = [1, 1]} : vector<4x64xf32> to vector<4x32xf32>
    %508 = vector.extract_strided_slice %506 {offsets = [0, 32], sizes = [4, 32], strides = [1, 1]} : vector<4x64xf32> to vector<4x32xf32>
    %509 = arith.mulf %508, %484 : vector<4x32xf32>
    %cst_238 = arith.constant dense<0.000000e+00> : vector<4x32xf32>
    %510 = tpu.matmul %509, %6, %cst_238 {dimension_numbers = #tpu.dot_dimension_numbers<[1], [0], [0], [1], [0, 0, 1, 1], [], []>} : vector<4x32xf32>, vector<32x32xf32>, vector<4x32xf32> -> vector<4x32xf32>
    %511 = arith.addf %499, %510 : vector<4x32xf32>
    %512 = math.tanh %511 : vector<4x32xf32>
    %513 = arith.mulf %507, %484 : vector<4x32xf32>
    %cst_239 = arith.constant 1.000000e+00 : f32
    %514 = vector.broadcast %cst_239 : f32 to vector<4x32xf32>
    %515 = arith.subf %514, %507 : vector<4x32xf32>
    %516 = arith.mulf %515, %512 : vector<4x32xf32>
    %517 = arith.addf %513, %516 : vector<4x32xf32>
    %cst_240 = arith.constant -5.000000e+00 : f32
    %cst_241 = arith.constant 5.000000e+00 : f32
    %518 = vector.broadcast %cst_240 : f32 to vector<4x32xf32>
    %519 = arith.maximumf %518, %517 : vector<4x32xf32>
    %520 = vector.broadcast %cst_241 : f32 to vector<4x32xf32>
    %521 = arith.minimumf %520, %519 : vector<4x32xf32>
    %c0_242 = arith.constant 0 : index
    %522 = arith.index_cast %493 : i32 to index
    %c0_243 = arith.constant 0 : index
    %c0_244 = arith.constant 0 : index
    %523 = vector.load %arg7[%c0_242, %522, %c0_243, %c0_244] : memref<1x16x4x32xf32, #tpu.memory_space<vmem>>, vector<1x1x4x32xf32>
    %524 = vector.shape_cast %523 : vector<1x1x4x32xf32> to vector<4x32xf32>
    %525 = vector.shape_cast %521 : vector<4x32xf32> to vector<1x1x4x32xf32>
    tpu.vector_store %arg7[%c0_242, %522, %c0_243, %c0_244], %525 {strides = array<i32>} : memref<1x16x4x32xf32, #tpu.memory_space<vmem>>, vector<1x1x4x32xf32>,
    %c14_i32 = arith.constant 14 : i32
    %c1_i32_245 = arith.constant 1 : i32
    %526 = arith.subi %c1_i32_245, %arg0 : i32
    %527 = arith.muli %526, %c14_i32 : i32
    %c15_i32_246 = arith.constant 15 : i32
    %528 = arith.subi %c15_i32_246, %c14_i32 : i32
    %529 = arith.muli %arg0, %528 : i32
    %530 = arith.addi %527, %529 : i32
    %c0_247 = arith.constant 0 : index
    %531 = arith.index_cast %530 : i32 to index
    %c0_248 = arith.constant 0 : index
    %c0_249 = arith.constant 0 : index
    %532 = vector.load %arg2[%c0_247, %531, %c0_248, %c0_249] : memref<1x16x4x64xf32, #tpu.memory_space<vmem>>, vector<1x1x4x64xf32>
    %533 = vector.shape_cast %532 : vector<1x1x4x64xf32> to vector<4x64xf32>
    %c0_250 = arith.constant 0 : index
    %534 = arith.index_cast %530 : i32 to index
    %c0_251 = arith.constant 0 : index
    %c0_252 = arith.constant 0 : index
    %535 = vector.load %arg3[%c0_250, %534, %c0_251, %c0_252] : memref<1x16x4x32xf32, #tpu.memory_space<vmem>>, vector<1x1x4x32xf32>
    %536 = vector.shape_cast %535 : vector<1x1x4x32xf32> to vector<4x32xf32>
    %cst_253 = arith.constant dense<0.000000e+00> : vector<4x64xf32>
    %537 = tpu.matmul %521, %4, %cst_253 {dimension_numbers = #tpu.dot_dimension_numbers<[1], [0], [0], [1], [0, 0, 1, 1], [], []>} : vector<4x32xf32>, vector<32x64xf32>, vector<4x64xf32> -> vector<4x64xf32>
    %538 = arith.addf %533, %537 : vector<4x64xf32>
    %539 = arith.negf %538 : vector<4x64xf32>
    %540 = math.exp %539 : vector<4x64xf32>
    %cst_254 = arith.constant 1.000000e+00 : f32
    %541 = vector.broadcast %cst_254 : f32 to vector<4x64xf32>
    %542 = arith.addf %541, %540 : vector<4x64xf32>
    %543 = arith.divf %541, %542 : vector<4x64xf32>
    %544 = vector.extract_strided_slice %543 {offsets = [0, 0], sizes = [4, 32], strides = [1, 1]} : vector<4x64xf32> to vector<4x32xf32>
    %545 = vector.extract_strided_slice %543 {offsets = [0, 32], sizes = [4, 32], strides = [1, 1]} : vector<4x64xf32> to vector<4x32xf32>
    %546 = arith.mulf %545, %521 : vector<4x32xf32>
    %cst_255 = arith.constant dense<0.000000e+00> : vector<4x32xf32>
    %547 = tpu.matmul %546, %6, %cst_255 {dimension_numbers = #tpu.dot_dimension_numbers<[1], [0], [0], [1], [0, 0, 1, 1], [], []>} : vector<4x32xf32>, vector<32x32xf32>, vector<4x32xf32> -> vector<4x32xf32>
    %548 = arith.addf %536, %547 : vector<4x32xf32>
    %549 = math.tanh %548 : vector<4x32xf32>
    %550 = arith.mulf %544, %521 : vector<4x32xf32>
    %cst_256 = arith.constant 1.000000e+00 : f32
    %551 = vector.broadcast %cst_256 : f32 to vector<4x32xf32>
    %552 = arith.subf %551, %544 : vector<4x32xf32>
    %553 = arith.mulf %552, %549 : vector<4x32xf32>
    %554 = arith.addf %550, %553 : vector<4x32xf32>
    %cst_257 = arith.constant -5.000000e+00 : f32
    %cst_258 = arith.constant 5.000000e+00 : f32
    %555 = vector.broadcast %cst_257 : f32 to vector<4x32xf32>
    %556 = arith.maximumf %555, %554 : vector<4x32xf32>
    %557 = vector.broadcast %cst_258 : f32 to vector<4x32xf32>
    %558 = arith.minimumf %557, %556 : vector<4x32xf32>
    %c0_259 = arith.constant 0 : index
    %559 = arith.index_cast %530 : i32 to index
    %c0_260 = arith.constant 0 : index
    %c0_261 = arith.constant 0 : index
    %560 = vector.load %arg7[%c0_259, %559, %c0_260, %c0_261] : memref<1x16x4x32xf32, #tpu.memory_space<vmem>>, vector<1x1x4x32xf32>
    %561 = vector.shape_cast %560 : vector<1x1x4x32xf32> to vector<4x32xf32>
    %562 = vector.shape_cast %558 : vector<4x32xf32> to vector<1x1x4x32xf32>
    tpu.vector_store %arg7[%c0_259, %559, %c0_260, %c0_261], %562 {strides = array<i32>} : memref<1x16x4x32xf32, #tpu.memory_space<vmem>>, vector<1x1x4x32xf32>,
    %c15_i32_262 = arith.constant 15 : i32
    %c1_i32_263 = arith.constant 1 : i32
    %563 = arith.subi %c1_i32_263, %arg0 : i32
    %564 = arith.muli %563, %c15_i32_262 : i32
    %c15_i32_264 = arith.constant 15 : i32
    %565 = arith.subi %c15_i32_264, %c15_i32_262 : i32
    %566 = arith.muli %arg0, %565 : i32
    %567 = arith.addi %564, %566 : i32
    %c0_265 = arith.constant 0 : index
    %568 = arith.index_cast %567 : i32 to index
    %c0_266 = arith.constant 0 : index
    %c0_267 = arith.constant 0 : index
    %569 = vector.load %arg2[%c0_265, %568, %c0_266, %c0_267] : memref<1x16x4x64xf32, #tpu.memory_space<vmem>>, vector<1x1x4x64xf32>
    %570 = vector.shape_cast %569 : vector<1x1x4x64xf32> to vector<4x64xf32>
    %c0_268 = arith.constant 0 : index
    %571 = arith.index_cast %567 : i32 to index
    %c0_269 = arith.constant 0 : index
    %c0_270 = arith.constant 0 : index
    %572 = vector.load %arg3[%c0_268, %571, %c0_269, %c0_270] : memref<1x16x4x32xf32, #tpu.memory_space<vmem>>, vector<1x1x4x32xf32>
    %573 = vector.shape_cast %572 : vector<1x1x4x32xf32> to vector<4x32xf32>
    %cst_271 = arith.constant dense<0.000000e+00> : vector<4x64xf32>
    %574 = tpu.matmul %558, %4, %cst_271 {dimension_numbers = #tpu.dot_dimension_numbers<[1], [0], [0], [1], [0, 0, 1, 1], [], []>} : vector<4x32xf32>, vector<32x64xf32>, vector<4x64xf32> -> vector<4x64xf32>
    %575 = arith.addf %570, %574 : vector<4x64xf32>
    %576 = arith.negf %575 : vector<4x64xf32>
    %577 = math.exp %576 : vector<4x64xf32>
    %cst_272 = arith.constant 1.000000e+00 : f32
    %578 = vector.broadcast %cst_272 : f32 to vector<4x64xf32>
    %579 = arith.addf %578, %577 : vector<4x64xf32>
    %580 = arith.divf %578, %579 : vector<4x64xf32>
    %581 = vector.extract_strided_slice %580 {offsets = [0, 0], sizes = [4, 32], strides = [1, 1]} : vector<4x64xf32> to vector<4x32xf32>
    %582 = vector.extract_strided_slice %580 {offsets = [0, 32], sizes = [4, 32], strides = [1, 1]} : vector<4x64xf32> to vector<4x32xf32>
    %583 = arith.mulf %582, %558 : vector<4x32xf32>
    %cst_273 = arith.constant dense<0.000000e+00> : vector<4x32xf32>
    %584 = tpu.matmul %583, %6, %cst_273 {dimension_numbers = #tpu.dot_dimension_numbers<[1], [0], [0], [1], [0, 0, 1, 1], [], []>} : vector<4x32xf32>, vector<32x32xf32>, vector<4x32xf32> -> vector<4x32xf32>
    %585 = arith.addf %573, %584 : vector<4x32xf32>
    %586 = math.tanh %585 : vector<4x32xf32>
    %587 = arith.mulf %581, %558 : vector<4x32xf32>
    %cst_274 = arith.constant 1.000000e+00 : f32
    %588 = vector.broadcast %cst_274 : f32 to vector<4x32xf32>
    %589 = arith.subf %588, %581 : vector<4x32xf32>
    %590 = arith.mulf %589, %586 : vector<4x32xf32>
    %591 = arith.addf %587, %590 : vector<4x32xf32>
    %cst_275 = arith.constant -5.000000e+00 : f32
    %cst_276 = arith.constant 5.000000e+00 : f32
    %592 = vector.broadcast %cst_275 : f32 to vector<4x32xf32>
    %593 = arith.maximumf %592, %591 : vector<4x32xf32>
    %594 = vector.broadcast %cst_276 : f32 to vector<4x32xf32>
    %595 = arith.minimumf %594, %593 : vector<4x32xf32>
    %c0_277 = arith.constant 0 : index
    %596 = arith.index_cast %567 : i32 to index
    %c0_278 = arith.constant 0 : index
    %c0_279 = arith.constant 0 : index
    %597 = vector.load %arg7[%c0_277, %596, %c0_278, %c0_279] : memref<1x16x4x32xf32, #tpu.memory_space<vmem>>, vector<1x1x4x32xf32>
    %598 = vector.shape_cast %597 : vector<1x1x4x32xf32> to vector<4x32xf32>
    %599 = vector.shape_cast %595 : vector<4x32xf32> to vector<1x1x4x32xf32>
    tpu.vector_store %arg7[%c0_277, %596, %c0_278, %c0_279], %599 {strides = array<i32>} : memref<1x16x4x32xf32, #tpu.memory_space<vmem>>, vector<1x1x4x32xf32>,
    %c16_i32 = arith.constant 16 : i32
    %c0_280 = arith.constant 0 : index
    %c0_281 = arith.constant 0 : index
    %600 = vector.load %arg8[%c0_280, %c0_281] : memref<4x32xf32, #tpu.memory_space<vmem>>, vector<4x32xf32>
    tpu.vector_store %arg8[%c0_280, %c0_281], %595 {strides = array<i32>} : memref<4x32xf32, #tpu.memory_space<vmem>>, vector<4x32xf32>,
    return
  }
  func.func @transform_0(%arg0: i32, %arg1: i32) -> (i32, i32, i32, i32) {
    %c1_i32 = arith.constant 1 : i32
    %0 = arith.subi %c1_i32, %arg0 : i32
    %1 = arith.muli %0, %arg1 : i32
    %c1_i32_0 = arith.constant 1 : i32
    %2 = arith.subi %c1_i32_0, %arg1 : i32
    %3 = arith.muli %arg0, %2 : i32
    %4 = arith.addi %1, %3 : i32
    %c0_i32 = arith.constant 0 : i32
    %c0_i32_1 = arith.constant 0 : i32
    %c0_i32_2 = arith.constant 0 : i32
    return %arg0, %4, %c0_i32, %c0_i32_1 : i32, i32, i32, i32
  }
  func.func @transform_1(%arg0: i32, %arg1: i32) -> (i32, i32, i32, i32) {
    %c1_i32 = arith.constant 1 : i32
    %0 = arith.subi %c1_i32, %arg0 : i32
    %1 = arith.muli %0, %arg1 : i32
    %c1_i32_0 = arith.constant 1 : i32
    %2 = arith.subi %c1_i32_0, %arg1 : i32
    %3 = arith.muli %arg0, %2 : i32
    %4 = arith.addi %1, %3 : i32
    %c0_i32 = arith.constant 0 : i32
    %c0_i32_1 = arith.constant 0 : i32
    %c0_i32_2 = arith.constant 0 : i32
    return %arg0, %4, %c0_i32, %c0_i32_1 : i32, i32, i32, i32
  }
  func.func @transform_2(%arg0: i32, %arg1: i32) -> (i32, i32, i32) {
    %c0_i32 = arith.constant 0 : i32
    %c0_i32_0 = arith.constant 0 : i32
    %c0_i32_1 = arith.constant 0 : i32
    return %arg0, %c0_i32, %c0_i32_0 : i32, i32, i32
  }
  func.func @transform_3(%arg0: i32, %arg1: i32) -> (i32, i32, i32) {
    %c0_i32 = arith.constant 0 : i32
    %c0_i32_0 = arith.constant 0 : i32
    %c0_i32_1 = arith.constant 0 : i32
    return %arg0, %c0_i32, %c0_i32_0 : i32, i32, i32
  }
  func.func @transform_4(%arg0: i32, %arg1: i32) -> (i32, i32, i32) {
    %c0_i32 = arith.constant 0 : i32
    %c0_i32_0 = arith.constant 0 : i32
    %c0_i32_1 = arith.constant 0 : i32
    return %arg0, %c0_i32, %c0_i32_0 : i32, i32, i32
  }
  func.func @transform_5(%arg0: i32, %arg1: i32) -> (i32, i32, i32, i32) {
    %c1_i32 = arith.constant 1 : i32
    %0 = arith.subi %c1_i32, %arg0 : i32
    %1 = arith.muli %0, %arg1 : i32
    %c1_i32_0 = arith.constant 1 : i32
    %2 = arith.subi %c1_i32_0, %arg1 : i32
    %3 = arith.muli %arg0, %2 : i32
    %4 = arith.addi %1, %3 : i32
    %c0_i32 = arith.constant 0 : i32
    %c0_i32_1 = arith.constant 0 : i32
    %c0_i32_2 = arith.constant 0 : i32
    return %arg0, %4, %c0_i32, %c0_i32_1 : i32, i32, i32, i32
  }
}

</mosaic_0001>

<llo_original>
// kernel: bidirectional_clipped_gru.1
$region0: #{bidirectional_clipped_gru.1}
  #allocation0 [shape = 'u32[]', space=smem, size = 0x4, offset = 0x4, fixed_abs, tag = 'smem constant byte address 0x4 - core index']
  #allocation1 [shape = 'u32[144,128]{1,0:T(1,128)}', space=vmem, size = 0x12000, scoped, tag = 'internal scratch']
  #allocation2 [shape = 'f32[4,32]{1,0:T(4,128)}', space=vmem, size = 0x800, scoped, tag = 'scratch operand']
  %s0 = inlined_call_operand.vmem [shape: f32[2,32,4,64], index: 0, kind: input, shape index: {}]
  %s1 = inlined_call_operand.vmem [shape: f32[2,32,4,32], index: 1, kind: input, shape index: {}]
  %s2 = inlined_call_operand.vmem [shape: f32[2,4,32], index: 2, kind: input, shape index: {}]
  %s3 = inlined_call_operand.vmem [shape: f32[2,32,64], index: 3, kind: input, shape index: {}]
  %s4 = inlined_call_operand.vmem [shape: f32[2,32,32], index: 4, kind: input, shape index: {}]
  %s5 = inlined_call_operand.vmem [shape: f32[2,32,4,32], index: 5, kind: output, shape index: {}]
  %s6 = sld [smem:[#allocation0]]
  $region57: #{bidirectional_clipped_gru.1} parent=0
    _
  %s8 = ssub.s32 1, %s6
  %s9 = scalar_select 0, %s8, %s6
  loop: start=0, step=1, limit=6
  $region2: #{bidirectional_clipped_gru.1} parent=0 // loop_pre_header
    _
  $region3: #{bidirectional_clipped_gru.1} parent=0 // loop_header
    %s11 = sphi 0, %s15
    %p12 = scmp.ge.s32.totalorder %s11, 6
    %s18 = sphi 0, %s30
    %s19 = sphi 0, %s26
    %s20 = sphi 0, %s18
    %s21 = sphi 0, %s19
    %s22 = sphi 0, %s20
    %s23 = sphi 0, %s21
    %s45 = sphi 0, %s47
    %s48 = sphi 0, %s45
    %s49 = sphi 0, %s48
    %s65 = sphi 0, %s49
    %s83 = sphi 0, %s85
    %s86 = sphi 0, %s83
    %s87 = sphi 0, %s86
    %s103 = sphi 0, %s87
    %s109 = sphi 0, %s111
    %s112 = sphi 0, %s109
    %s113 = sphi 0, %s112
    %s129 = sphi 0, %s113
    %s135 = sphi 0, %s137
    %s138 = sphi 0, %s135
    %s139 = sphi 0, %s138
    %s155 = sphi 0, %s139
    %s161 = sphi 0, %s163
    %s164 = sphi 0, %s161
    %s165 = sphi 0, %s164
    %s181 = sphi 0, %s165
    %s199 = sphi 0, %s201
    %s202 = sphi 0, %s199
    %s203 = sphi 0, %s202
    %s219 = sphi 0, %s203
  $region4: #{bidirectional_clipped_gru.1} parent=0 // loop_header_branch
    %14 = sbr.rel (%p12) target = $region8
  $region5: #{bidirectional_clipped_gru.1} parent=0 // loop_body
    %s16 = ssub.s32 %s11, 1
    %s17 = ssub.s32 %s11, 2
    %s24 = sadd.s32 1, %s19
    %p25 = scmp.ge.s32.totalorder %s24, 2
    %s26 = scalar_select %p25, 0, %s24
    %s27 = sadd.s32 1, %s18
    %s28 = scalar_select %p25, %s27, %s18
    %p29 = scmp.ge.s32.totalorder %s28, 2
    %s30 = scalar_select %p29, 0, %s28
    %s31 = ssub.s32 1, %s18
    %s32 = smul.u32 %s31, %s19
    %s33 = ssub.s32 1, %s19
    %s34 = smul.u32 %s18, %s33
    %s35 = sadd.s32 %s32, %s34
    %s36 = ssub.s32 1, %s30
    %s37 = smul.u32 %s36, %s26
    %s38 = ssub.s32 1, %s26
    %s39 = smul.u32 %s30, %s38
    %s40 = sadd.s32 %s37, %s39
    %s41 = ssub.s32 %s18, %s30
    %s42 = ssub.s32 %s35, %s40
    %s43 = sor.u32 %s41, %s42
    %p44 = scmp.eq.s32.totalorder %s43, 0
    %s46 = sadd.s32 %s45, 1
    %s47 = scalar_select %p44, %s45, %s46
    %p50 = pneg %p44
    %p51 = scmp.eq.s32.totalorder %s11, 3
    %p52 = por %p50, %p51
    %p53 = scmp.ne.s32.totalorder %s45, %s48
    %p54 = scmp.eq.s32.totalorder %s11, 0
    %p55 = por %p53, %p54
    %p56 = scmp.ne.s32.totalorder %s45, %s48
    %p57 = scmp.eq.s32.totalorder %s16, 3
    %p58 = por %p56, %p57
    %p59 = scmp.ne.s32.totalorder %s48, %s49
    %p60 = scmp.eq.s32.totalorder %s16, 0
    %p61 = por %p59, %p60
    %p62 = scmp.ne.s32.totalorder %s48, %s49
    %p63 = scmp.eq.s32.totalorder %s17, 3
    %p64 = por %p62, %p63
    %p66 = scmp.ne.s32.totalorder %s49, %s65
    %p67 = scmp.eq.s32.totalorder %s17, 0
    %p68 = por %p66, %p67
    %s69 = ssub.s32 1, %s18
    %s70 = smul.u32 %s69, %s19
    %s71 = ssub.s32 1, %s19
    %s72 = smul.u32 %s18, %s71
    %s73 = sadd.s32 %s70, %s72
    %s74 = ssub.s32 1, %s30
    %s75 = smul.u32 %s74, %s26
    %s76 = ssub.s32 1, %s26
    %s77 = smul.u32 %s30, %s76
    %s78 = sadd.s32 %s75, %s77
    %s79 = ssub.s32 %s18, %s30
    %s80 = ssub.s32 %s73, %s78
    %s81 = sor.u32 %s79, %s80
    %p82 = scmp.eq.s32.totalorder %s81, 0
    %s84 = sadd.s32 %s83, 1
    %s85 = scalar_select %p82, %s83, %s84
    %p88 = pneg %p82
    %p89 = scmp.eq.s32.totalorder %s11, 3
    %p90 = por %p88, %p89
    %p91 = scmp.ne.s32.totalorder %s83, %s86
    %p92 = scmp.eq.s32.totalorder %s11, 0
    %p93 = por %p91, %p92
    %p94 = scmp.ne.s32.totalorder %s83, %s86
    %p95 = scmp.eq.s32.totalorder %s16, 3
    %p96 = por %p94, %p95
    %p97 = scmp.ne.s32.totalorder %s86, %s87
    %p98 = scmp.eq.s32.totalorder %s16, 0
    %p99 = por %p97, %p98
    %p100 = scmp.ne.s32.totalorder %s86, %s87
    %p101 = scmp.eq.s32.totalorder %s17, 3
    %p102 = por %p100, %p101
    %p104 = scmp.ne.s32.totalorder %s87, %s103
    %p105 = scmp.eq.s32.totalorder %s17, 0
    %p106 = por %p104, %p105
    %s107 = ssub.s32 %s18, %s30
    %p108 = scmp.eq.s32.totalorder %s107, 0
    %s110 = sadd.s32 %s109, 1
    %s111 = scalar_select %p108, %s109, %s110
    %p114 = pneg %p108
    %p115 = scmp.eq.s32.totalorder %s11, 3
    %p116 = por %p114, %p115
    %p117 = scmp.ne.s32.totalorder %s109, %s112
    %p118 = scmp.eq.s32.totalorder %s11, 0
    %p119 = por %p117, %p118
    %p120 = scmp.ne.s32.totalorder %s109, %s112
    %p121 = scmp.eq.s32.totalorder %s16, 3
    %p122 = por %p120, %p121
    %p123 = scmp.ne.s32.totalorder %s112, %s113
    %p124 = scmp.eq.s32.totalorder %s16, 0
    %p125 = por %p123, %p124
    %p126 = scmp.ne.s32.totalorder %s112, %s113
    %p127 = scmp.eq.s32.totalorder %s17, 3
    %p128 = por %p126, %p127
    %p130 = scmp.ne.s32.totalorder %s113, %s129
    %p131 = scmp.eq.s32.totalorder %s17, 0
    %p132 = por %p130, %p131
    %s133 = ssub.s32 %s18, %s30
    %p134 = scmp.eq.s32.totalorder %s133, 0
    %s136 = sadd.s32 %s135, 1
    %s137 = scalar_select %p134, %s135, %s136
    %p140 = pneg %p134
    %p141 = scmp.eq.s32.totalorder %s11, 3
    %p142 = por %p140, %p141
    %p143 = scmp.ne.s32.totalorder %s135, %s138
    %p144 = scmp.eq.s32.totalorder %s11, 0
    %p145 = por %p143, %p144
    %p146 = scmp.ne.s32.totalorder %s135, %s138
    %p147 = scmp.eq.s32.totalorder %s16, 3
    %p148 = por %p146, %p147
    %p149 = scmp.ne.s32.totalorder %s138, %s139
    %p150 = scmp.eq.s32.totalorder %s16, 0
    %p151 = por %p149, %p150
    %p152 = scmp.ne.s32.totalorder %s138, %s139
    %p153 = scmp.eq.s32.totalorder %s17, 3
    %p154 = por %p152, %p153
    %p156 = scmp.ne.s32.totalorder %s139, %s155
    %p157 = scmp.eq.s32.totalorder %s17, 0
    %p158 = por %p156, %p157
    %s159 = ssub.s32 %s18, %s30
    %p160 = scmp.eq.s32.totalorder %s159, 0
    %s162 = sadd.s32 %s161, 1
    %s163 = scalar_select %p160, %s161, %s162
    %p166 = pneg %p160
    %p167 = scmp.eq.s32.totalorder %s11, 3
    %p168 = por %p166, %p167
    %p169 = scmp.ne.s32.totalorder %s161, %s164
    %p170 = scmp.eq.s32.totalorder %s11, 0
    %p171 = por %p169, %p170
    %p172 = scmp.ne.s32.totalorder %s161, %s164
    %p173 = scmp.eq.s32.totalorder %s16, 3
    %p174 = por %p172, %p173
    %p175 = scmp.ne.s32.totalorder %s164, %s165
    %p176 = scmp.eq.s32.totalorder %s16, 0
    %p177 = por %p175, %p176
    %p178 = scmp.ne.s32.totalorder %s164, %s165
    %p179 = scmp.eq.s32.totalorder %s17, 3
    %p180 = por %p178, %p179
    %p182 = scmp.ne.s32.totalorder %s165, %s181
    %p183 = scmp.eq.s32.totalorder %s17, 0
    %p184 = por %p182, %p183
    %s185 = ssub.s32 1, %s18
    %s186 = smul.u32 %s185, %s19
    %s187 = ssub.s32 1, %s19
    %s188 = smul.u32 %s18, %s187
    %s189 = sadd.s32 %s186, %s188
    %s190 = ssub.s32 1, %s30
    %s191 = smul.u32 %s190, %s26
    %s192 = ssub.s32 1, %s26
    %s193 = smul.u32 %s30, %s192
    %s194 = sadd.s32 %s191, %s193
    %s195 = ssub.s32 %s18, %s30
    %s196 = ssub.s32 %s189, %s194
    %s197 = sor.u32 %s195, %s196
    %p198 = scmp.eq.s32.totalorder %s197, 0
    %s200 = sadd.s32 %s199, 1
    %s201 = scalar_select %p198, %s199, %s200
    %p204 = pneg %p198
    %p205 = scmp.eq.s32.totalorder %s11, 3
    %p206 = por %p204, %p205
    %p207 = scmp.ne.s32.totalorder %s199, %s202
    %p208 = scmp.eq.s32.totalorder %s11, 0
    %p209 = por %p207, %p208
    %p210 = scmp.ne.s32.totalorder %s199, %s202
    %p211 = scmp.eq.s32.totalorder %s16, 3
    %p212 = por %p210, %p211
    %p213 = scmp.ne.s32.totalorder %s202, %s203
    %p214 = scmp.eq.s32.totalorder %s16, 0
    %p215 = por %p213, %p214
    %p216 = scmp.ne.s32.totalorder %s202, %s203
    %p217 = scmp.eq.s32.totalorder %s17, 3
    %p218 = por %p216, %p217
    %p220 = scmp.ne.s32.totalorder %s203, %s219
    %p221 = scmp.eq.s32.totalorder %s17, 0
    %p222 = por %p220, %p221
    %p223 = scmp.le.s32.totalorder 1, %s11
    %p224 = scmp.lt.s32.totalorder %s11, 5
    %p225 = pnand %p223, %p224
    %p226 = pneg %p225
    // Predicated region
    $region9: #{bidirectional_clipped_gru.1} parent=5 // pred_check
      _
    $region10: #{bidirectional_clipped_gru.1} parent=5 // pred_check_branch
      %228 = sbr.rel (%p225) target = $region12
    $region11: #{bidirectional_clipped_gru.1} parent=5 // pred_region
      %s229 = ssub.s32 %s11, 1
    $region12: #{bidirectional_clipped_gru.1} parent=5 // pred_fallthru
      _
    %p230 = scmp.lt.s32.totalorder %s11, 4
    // Predicated region
    $region13: #{bidirectional_clipped_gru.1} parent=5 // pred_check
      %p231 = pneg %p230
    $region14: #{bidirectional_clipped_gru.1} parent=5 // pred_check_branch
      %233 = sbr.rel (%p231) target = $region16
    $region15: #{bidirectional_clipped_gru.1} parent=5 // pred_region
      // Predicated region
      $region17: #{bidirectional_clipped_gru.1} parent=15 // pred_check
        %p234 = pneg %p55
      $region18: #{bidirectional_clipped_gru.1} parent=15 // pred_check_branch
        %236 = sbr.rel (%p234) target = $region20
      $region19: #{bidirectional_clipped_gru.1} parent=15 // pred_region
        %s237 = ssub.s32 1, %s18
        %s238 = smul.u32 %s237, %s19
        %s239 = ssub.s32 1, %s19
        %s240 = smul.u32 %s18, %s239
        %s241 = sadd.s32 %s238, %s240
        %s242 = smul.u32 16, %s241
        %p243 = scmp.lt.s32.totalorder %s18, 1
        %s244 = scalar_select %p243, %s18, 1
        %p245 = scmp.lt.s32.totalorder %s242, 31
        %s246 = scalar_select %p245, %s242, 31
        %s247 = smul.addr %s244, 32
        %s248 = sadd.s32 %s246, %s247
        %s249 = smul.addr %s248, 4
        %s250 = scalar_lea.vmem %s0, %s249
        %s251 = ssub.s32 1, %s18
        %s252 = smul.u32 %s251, %s19
        %s253 = ssub.s32 1, %s19
        %s254 = smul.u32 %s18, %s253
        %s255 = sadd.s32 %s252, %s254
        %s256 = smul.u32 16, %s255
      $region20: #{bidirectional_clipped_gru.1} parent=15 // pred_fallthru
        _
      // Predicated region
      $region21: #{bidirectional_clipped_gru.1} parent=15 // pred_check
        %p257 = pneg %p93
      $region22: #{bidirectional_clipped_gru.1} parent=15 // pred_check_branch
        %259 = sbr.rel (%p257) target = $region24
      $region23: #{bidirectional_clipped_gru.1} parent=15 // pred_region
        %s260 = ssub.s32 1, %s18
        %s261 = smul.u32 %s260, %s19
        %s262 = ssub.s32 1, %s19
        %s263 = smul.u32 %s18, %s262
        %s264 = sadd.s32 %s261, %s263
        %s265 = smul.u32 16, %s264
        %p266 = scmp.lt.s32.totalorder %s18, 1
        %s267 = scalar_select %p266, %s18, 1
        %p268 = scmp.lt.s32.totalorder %s265, 31
        %s269 = scalar_select %p268, %s265, 31
        %s270 = smul.addr %s267, 32
        %s271 = sadd.s32 %s269, %s270
        %s272 = smul.addr %s271, 4
        %s273 = scalar_lea.vmem %s1, %s272
        %s274 = ssub.s32 1, %s18
        %s275 = smul.u32 %s274, %s19
        %s276 = ssub.s32 1, %s19
        %s277 = smul.u32 %s18, %s276
        %s278 = sadd.s32 %s275, %s277
        %s279 = smul.u32 16, %s278
      $region24: #{bidirectional_clipped_gru.1} parent=15 // pred_fallthru
        _
      // Predicated region
      $region25: #{bidirectional_clipped_gru.1} parent=15 // pred_check
        %p280 = pneg %p119
      $region26: #{bidirectional_clipped_gru.1} parent=15 // pred_check_branch
        %282 = sbr.rel (%p280) target = $region28
      $region27: #{bidirectional_clipped_gru.1} parent=15 // pred_region
        %p283 = scmp.lt.s32.totalorder %s18, 1
        %s284 = scalar_select %p283, %s18, 1
        %s285 = smul.addr %s284, 4
        %s286 = scalar_lea.vmem %s2, %s285
      $region28: #{bidirectional_clipped_gru.1} parent=15 // pred_fallthru
        _
      // Predicated region
      $region29: #{bidirectional_clipped_gru.1} parent=15 // pred_check
        %p287 = pneg %p145
      $region30: #{bidirectional_clipped_gru.1} parent=15 // pred_check_branch
        %289 = sbr.rel (%p287) target = $region32
      $region31: #{bidirectional_clipped_gru.1} parent=15 // pred_region
        %p290 = scmp.lt.s32.totalorder %s18, 1
        %s291 = scalar_select %p290, %s18, 1
        %s292 = smul.addr %s291, 4
        %s293 = smul.addr %s292, 8
        %s294 = scalar_lea.vmem %s3, %s293
      $region32: #{bidirectional_clipped_gru.1} parent=15 // pred_fallthru
        _
      // Predicated region
      $region33: #{bidirectional_clipped_gru.1} parent=15 // pred_check
        %p295 = pneg %p171
      $region34: #{bidirectional_clipped_gru.1} parent=15 // pred_check_branch
        %297 = sbr.rel (%p295) target = $region36
      $region35: #{bidirectional_clipped_gru.1} parent=15 // pred_region
        %p298 = scmp.lt.s32.totalorder %s18, 1
        %s299 = scalar_select %p298, %s18, 1
        %s300 = smul.addr %s299, 4
        %s301 = smul.addr %s300, 8
        %s302 = scalar_lea.vmem %s4, %s301
      $region36: #{bidirectional_clipped_gru.1} parent=15 // pred_fallthru
        _
    $region16: #{bidirectional_clipped_gru.1} parent=5 // pred_fallthru
      _
    %p303 = scmp.le.s32.totalorder 1, %s11
    %p304 = scmp.lt.s32.totalorder %s11, 5
    %p305 = pnand %p303, %p304
    %p306 = pneg %p305
    // Predicated region
    $region37: #{bidirectional_clipped_gru.1} parent=5 // pred_check
      _
    $region38: #{bidirectional_clipped_gru.1} parent=5 // pred_check_branch
      %308 = sbr.rel (%p305) target = $region40
    $region39: #{bidirectional_clipped_gru.1} parent=5 // pred_region
      %s309 = ssub.s32 %s11, 1
      %s310 = ssub.s32 1, %s20
      %s311 = smul.u32 %s310, %s21
      %s312 = ssub.s32 1, %s21
      %s313 = smul.u32 %s20, %s312
      %s314 = sadd.s32 %s311, %s313
      %s315 = smul.u32 16, %s314
      %p316 = scmp.lt.s32.totalorder %s20, 1
      %s317 = scalar_select %p316, %s20, 1
      %p318 = scmp.lt.s32.totalorder %s315, 31
      %s319 = scalar_select %p318, %s315, 31
      %s320 = smul.addr %s317, 32
      %s321 = sadd.s32 %s319, %s320
      %s322 = smul.addr %s321, 4
      %s323 = scalar_lea.vmem %s0, %s322
      %p324 = pneg %p61
      %p325 = pneg %p58
      %s326 = ssub.s32 1, %s20
      %s327 = smul.u32 %s326, %s21
      %s328 = ssub.s32 1, %s21
      %s329 = smul.u32 %s20, %s328
      %s330 = sadd.s32 %s327, %s329
      %s331 = smul.u32 16, %s330
      %p332 = scmp.lt.s32.totalorder %s20, 1
      %s333 = scalar_select %p332, %s20, 1
      %p334 = scmp.lt.s32.totalorder %s331, 31
      %s335 = scalar_select %p334, %s331, 31
      %s336 = smul.addr %s333, 32
      %s337 = sadd.s32 %s335, %s336
      %s338 = smul.addr %s337, 4
      %s339 = scalar_lea.vmem %s1, %s338
      %p340 = pneg %p99
      %p341 = pneg %p96
      %p342 = scmp.lt.s32.totalorder %s20, 1
      %s343 = scalar_select %p342, %s20, 1
      %s344 = smul.addr %s343, 4
      %s345 = scalar_lea.vmem %s2, %s344
      %p346 = pneg %p125
      %p347 = pneg %p122
      %p348 = scmp.lt.s32.totalorder %s20, 1
      %s349 = scalar_select %p348, %s20, 1
      %s350 = smul.addr %s349, 4
      %s351 = smul.addr %s350, 8
      %s352 = scalar_lea.vmem %s3, %s351
      %p353 = pneg %p151
      %p354 = pneg %p148
      %p355 = scmp.lt.s32.totalorder %s20, 1
      %s356 = scalar_select %p355, %s20, 1
      %s357 = smul.addr %s356, 4
      %s358 = smul.addr %s357, 8
      %s359 = scalar_lea.vmem %s4, %s358
      %p360 = pneg %p177
      %p361 = pneg %p174
      %p362 = pneg %p215
      %p363 = pneg %p212
      %s364 = ssub.s32 1, %s20
      %s365 = smul.u32 %s364, %s21
      %s366 = ssub.s32 1, %s21
      %s367 = smul.u32 %s20, %s366
      %s368 = sadd.s32 %s365, %s367
      %s369 = smul.u32 16, %s368
      %p370 = scmp.lt.s32.totalorder %s20, 1
      %s371 = scalar_select %p370, %s20, 1
      %p372 = scmp.lt.s32.totalorder %s369, 31
      %s373 = scalar_select %p372, %s369, 31
      %s374 = smul.addr %s371, 32
      %s375 = sadd.s32 %s373, %s374
      %s376 = smul.addr %s375, 4
      %s377 = scalar_lea.vmem %s5, %s376
      %s378 = ssub.s32 1, %s20
      %s379 = smul.u32 %s378, %s21
      %s380 = ssub.s32 1, %s21
      %s381 = smul.u32 %s20, %s380
      %s382 = sadd.s32 %s379, %s381
      %s383 = smul.u32 16, %s382
      %p384 = scmp.lt.s32.totalorder %s20, 1
      %s385 = scalar_select %p384, %s20, 1
      %p386 = scmp.lt.s32.totalorder %s383, 31
      %s387 = scalar_select %p386, %s383, 31
      %s388 = smul.addr %s385, 32
      %s389 = sadd.s32 %s387, %s388
      %s390 = smul.addr %s389, 4
      %s391 = scalar_lea.vmem %s0, %s390
      %s392 = ssub.s32 1, %s20
      %s393 = smul.u32 %s392, %s21
      %s394 = ssub.s32 1, %s21
      %s395 = smul.u32 %s20, %s394
      %s396 = sadd.s32 %s393, %s395
      %s397 = smul.u32 16, %s396
      %s398 = ssub.s32 1, %s20
      %s399 = smul.u32 %s398, %s21
      %s400 = ssub.s32 1, %s21
      %s401 = smul.u32 %s20, %s400
      %s402 = sadd.s32 %s399, %s401
      %s403 = smul.u32 16, %s402
      %p404 = scmp.lt.s32.totalorder %s20, 1
      %s405 = scalar_select %p404, %s20, 1
      %p406 = scmp.lt.s32.totalorder %s403, 31
      %s407 = scalar_select %p406, %s403, 31
      %s408 = smul.addr %s405, 32
      %s409 = sadd.s32 %s407, %s408
      %s410 = smul.addr %s409, 4
      %s411 = scalar_lea.vmem %s1, %s410
      %s412 = ssub.s32 1, %s20
      %s413 = smul.u32 %s412, %s21
      %s414 = ssub.s32 1, %s21
      %s415 = smul.u32 %s20, %s414
      %s416 = sadd.s32 %s413, %s415
      %s417 = smul.u32 16, %s416
      %p418 = scmp.lt.s32.totalorder %s20, 1
      %s419 = scalar_select %p418, %s20, 1
      %s420 = smul.addr %s419, 4
      %s421 = scalar_lea.vmem %s2, %s420
      %p422 = scmp.lt.s32.totalorder %s20, 1
      %s423 = scalar_select %p422, %s20, 1
      %s424 = smul.addr %s423, 4
      %s425 = smul.addr %s424, 8
      %s426 = scalar_lea.vmem %s3, %s425
      %p427 = scmp.lt.s32.totalorder %s20, 1
      %s428 = scalar_select %p427, %s20, 1
      %s429 = smul.addr %s428, 4
      %s430 = smul.addr %s429, 8
      %s431 = scalar_lea.vmem %s4, %s430
      %s432 = ssub.s32 1, %s20
      %s433 = smul.u32 %s432, %s21
      %s434 = ssub.s32 1, %s21
      %s435 = smul.u32 %s20, %s434
      %s436 = sadd.s32 %s433, %s435
      %s437 = smul.u32 16, %s436
      %p438 = scmp.lt.s32.totalorder %s20, 1
      %s439 = scalar_select %p438, %s20, 1
      %p440 = scmp.lt.s32.totalorder %s437, 31
      %s441 = scalar_select %p440, %s437, 31
      %s442 = smul.addr %s439, 32
      %s443 = sadd.s32 %s441, %s442
      %s444 = smul.addr %s443, 4
      %s445 = scalar_lea.vmem %s5, %s444
      %s446 = ssub.s32 1, %s20
      %s447 = smul.u32 %s446, %s21
      %s448 = ssub.s32 1, %s21
      %s449 = smul.u32 %s20, %s448
      %s450 = sadd.s32 %s447, %s449
      %s451 = smul.u32 16, %s450
      %p452 = scmp.eq.s32.totalorder %s21, 0
      // Predicated region
      $region41: #{bidirectional_clipped_gru.1} parent=39 // pred_check
        %p453 = pneg %p452
      $region42: #{bidirectional_clipped_gru.1} parent=39 // pred_check_branch
        %455 = sbr.rel (%p453) target = $region44
      $region43: #{bidirectional_clipped_gru.1} parent=39 // pred_region
        %v456 = vld [vmem:[%s421] sm:$0xf]
        %vm457 = vcmask 257024
        %458 = vst.msk [vmem:[#allocation2] sm:$0xf] %vm457, %v456
      $region44: #{bidirectional_clipped_gru.1} parent=39 // pred_fallthru
        _
      %v459 = vld [vmem:[%s426] sm:$0xff]
      %v460 = vld [vmem:[%s426 + $0x8] sm:$0xff]
      %v461 = vld [vmem:[%s426 + $0x10] sm:$0xff]
      %v462 = vld [vmem:[%s426 + $0x18] sm:$0xff]
      %v463 = vld [vmem:[%s431] sm:$0xff]
      %v464 = vld [vmem:[%s431 + $0x8] sm:$0xff]
      %v465 = vld [vmem:[%s431 + $0x10] sm:$0xff]
      %v466 = vld [vmem:[%s431 + $0x18] sm:$0xff]
      %v467 = vld [vmem:[#allocation2] sm:$0xf]
      %s468 = smul.u32 %s20, 15
      %s469 = smul.u32 %s468, 4
      %s470 = scalar_lea.vmem %s391, %s469
      %v471 = vld [vmem:[%s470] sm:$0xf]
      %s472 = scalar_lea.vmem %s411, %s469
      %v473 = vld [vmem:[%s472] sm:$0xf]
      %vm474 = vcmask 261120
      %v476 = vsel %vm474, %v467, 0
      %478 = vmatprep.subr.mxu0 0.0
      %479 = vmatpush1.msra.mxu0 %v459
      %480 = vmatprep.subr.mxu0 0.0
      %481 = vmatpush1.msra.mxu0 %v460
      %482 = vmatprep.subr.mxu0 0.0
      %483 = vmatpush1.msra.mxu0 %v461
      %484 = vmatprep.subr.mxu0 0.0
      %485 = vmatpush1.msra.mxu0 %v462
      %486 = vmatprep.subr.mxu0 0.0
      %487 = vmatpush1.msra.mxu0 0.0
      %488 = vmatprep.subr.mxu0 0.0
      %489 = vmatpush1.msra.mxu0 0.0
      %490 = vmatprep.subr.mxu0 0.0
      %491 = vmatpush1.msra.mxu0 0.0
      %492 = vmatprep.subr.mxu0 0.0
      %493 = vmatpush1.msra.mxu0 0.0
      %494 = vmatprep.subr.mxu0 0.0
      %495 = vmatpush1.msra.mxu0 0.0
      %496 = vmatprep.subr.mxu0 0.0
      %497 = vmatpush1.msra.mxu0 0.0
      %498 = vmatprep.subr.mxu0 0.0
      %499 = vmatpush1.msra.mxu0 0.0
      %500 = vmatprep.subr.mxu0 0.0
      %501 = vmatpush1.msra.mxu0 0.0
      %502 = vmatprep.subr.mxu0 0.0
      %503 = vmatpush1.msra.mxu0 0.0
      %504 = vmatprep.subr.mxu0 0.0
      %505 = vmatpush1.msra.mxu0 0.0
      %506 = vmatprep.subr.mxu0 0.0
      %507 = vmatpush1.msra.mxu0 0.0
      %508 = vmatprep.subr.mxu0 0.0
      %509 = vmatpush1.msra.mxu0 0.0
      %510 = vmatprep.subr.mxu0 0.0
      %511 = vmatpush1.msra.mxu0 0.0
      %512 = vmatprep.subr.mxu0 0.0
      %513 = vmatpush1.msra.mxu0 0.0
      %514 = vmatprep.subr.mxu0 0.0
      %515 = vmatpush1.msra.mxu0 0.0
      %516 = vmatprep.subr.mxu0 0.0
      %517 = vmatpush1.msra.mxu0 0.0
      %518 = vmatprep.subr.mxu0 0.0
      %519 = vmatpush1.msra.mxu0 0.0
      %520 = vmatprep.subr.mxu0 0.0
      %521 = vmatpush1.msra.mxu0 0.0
      %522 = vmatprep.subr.mxu0 0.0
      %523 = vmatpush1.msra.mxu0 0.0
      %524 = vmatprep.subr.mxu0 0.0
      %525 = vmatpush1.msra.mxu0 0.0
      %526 = vmatprep.subr.mxu0 0.0
      %527 = vmatpush1.msra.mxu0 0.0
      %528 = vmatprep.subr.mxu0 0.0
      %529 = vmatpush1.msra.mxu0 0.0
      %530 = vmatprep.subr.mxu0 0.0
      %531 = vmatpush1.msra.mxu0 0.0
      %532 = vmatprep.subr.mxu0 0.0
      %533 = vmatpush1.msra.mxu0 0.0
      %534 = vmatprep.subr.mxu0 0.0
      %535 = vmatpush1.msra.mxu0 0.0
      %536 = vmatprep.subr.mxu0 0.0
      %537 = vmatpush1.msra.mxu0 0.0
      %538 = vmatprep.subr.mxu0 0.0
      %539 = vmatpush1.msra.mxu0 0.0
      %540 = vmatprep.subr.mxu0 0.0
      %541 = vmatpush1.msra.mxu0 0.0
      %542 = vmatprep.mubr.f32.mxu0 0.0
      %543 = vmatmul.mubr.f32.gmra.mrb[0].mxu0 %v476
      %v544 = vpop.f32.mrb[0].mxu0
      %v545 = vadd.f32 0.0, %v544
      %v546 = vpop.f32.mrb[0].mxu0
      %547 = vdwg.mxu0
      %v548 = vadd.f32 %v471, %v545
      %v549 = vxor.u32 %v548, 2147483648
      %v550 = vmul.f32 %v549, 1.442695
      %v551 = vpow.pop %v550
      %v552 = vadd.f32 %v551, 1.0
      %v553 = vrcp.pop %v552
      %v554 = vmul.f32 1.0, %v553
      %555 = vrot.lane.b32.xlu0 %v467, 32
      %v556 = vpop.permute.xlu0 %555
      %v558 = vmul.f32 %v554, %v556
      %560 = vrot.lane.b32.xlu0 %v558, 96
      %v561 = vpop.permute.xlu0 %560
      %v562 = vsel %vm474, %v561, 0
      %564 = vmatprep.subr.mxu0 0.0
      %565 = vmatpush1.msra.mxu0 %v463
      %566 = vmatprep.subr.mxu0 0.0
      %567 = vmatpush1.msra.mxu0 %v464
      %568 = vmatprep.subr.mxu0 0.0
      %569 = vmatpush1.msra.mxu0 %v465
      %570 = vmatprep.subr.mxu0 0.0
      %571 = vmatpush1.msra.mxu0 %v466
      %572 = vmatprep.subr.mxu0 0.0
      %573 = vmatpush1.msra.mxu0 0.0
      %574 = vmatprep.subr.mxu0 0.0
      %575 = vmatpush1.msra.mxu0 0.0
      %576 = vmatprep.subr.mxu0 0.0
      %577 = vmatpush1.msra.mxu0 0.0
      %578 = vmatprep.subr.mxu0 0.0
      %579 = vmatpush1.msra.mxu0 0.0
      %580 = vmatprep.subr.mxu0 0.0
      %581 = vmatpush1.msra.mxu0 0.0
      %582 = vmatprep.subr.mxu0 0.0
      %583 = vmatpush1.msra.mxu0 0.0
      %584 = vmatprep.subr.mxu0 0.0
      %585 = vmatpush1.msra.mxu0 0.0
      %586 = vmatprep.subr.mxu0 0.0
      %587 = vmatpush1.msra.mxu0 0.0
      %588 = vmatprep.subr.mxu0 0.0
      %589 = vmatpush1.msra.mxu0 0.0
      %590 = vmatprep.subr.mxu0 0.0
      %591 = vmatpush1.msra.mxu0 0.0
      %592 = vmatprep.subr.mxu0 0.0
      %593 = vmatpush1.msra.mxu0 0.0
      %594 = vmatprep.subr.mxu0 0.0
      %595 = vmatpush1.msra.mxu0 0.0
      %596 = vmatprep.subr.mxu0 0.0
      %597 = vmatpush1.msra.mxu0 0.0
      %598 = vmatprep.subr.mxu0 0.0
      %599 = vmatpush1.msra.mxu0 0.0
      %600 = vmatprep.subr.mxu0 0.0
      %601 = vmatpush1.msra.mxu0 0.0
      %602 = vmatprep.subr.mxu0 0.0
      %603 = vmatpush1.msra.mxu0 0.0
      %604 = vmatprep.subr.mxu0 0.0
      %605 = vmatpush1.msra.mxu0 0.0
      %606 = vmatprep.subr.mxu0 0.0
      %607 = vmatpush1.msra.mxu0 0.0
      %608 = vmatprep.subr.mxu0 0.0
      %609 = vmatpush1.msra.mxu0 0.0
      %610 = vmatprep.subr.mxu0 0.0
      %611 = vmatpush1.msra.mxu0 0.0
      %612 = vmatprep.subr.mxu0 0.0
      %613 = vmatpush1.msra.mxu0 0.0
      %614 = vmatprep.subr.mxu0 0.0
      %615 = vmatpush1.msra.mxu0 0.0
      %616 = vmatprep.subr.mxu0 0.0
      %617 = vmatpush1.msra.mxu0 0.0
      %618 = vmatprep.subr.mxu0 0.0
      %619 = vmatpush1.msra.mxu0 0.0
      %620 = vmatprep.subr.mxu0 0.0
      %621 = vmatpush1.msra.mxu0 0.0
      %622 = vmatprep.subr.mxu0 0.0
      %623 = vmatpush1.msra.mxu0 0.0
      %624 = vmatprep.subr.mxu0 0.0
      %625 = vmatpush1.msra.mxu0 0.0
      %626 = vmatprep.subr.mxu0 0.0
      %627 = vmatpush1.msra.mxu0 0.0
      %628 = vmatprep.mubr.f32.mxu0 0.0
      %629 = vmatmul.mubr.f32.gmra.mrb[0].mxu0 %v562
      %v630 = vpop.f32.mrb[0].mxu0
      %v631 = vadd.f32 0.0, %v630
      %v632 = vpop.f32.mrb[0].mxu0
      %633 = vdwg.mxu0
      %v634 = vadd.f32 %v473, %v631
      %v635 = vtanh.pop %v634
      %v636 = vmul.f32 %v554, %v467
      %v637 = vsub.f32 1.0, %v554
      %v638 = vmul.f32 %v637, %v635
      %v639 = vadd.f32 %v636, %v638
      %v640 = vmax.f32 %v639, -5.0
      %v641 = vmin.f32 %v640, 5.0
      %s642 = scalar_lea.vmem %s445, %s469
      %vm643 = vcmask 257024
      %644 = vst.msk [vmem:[%s642] sm:$0xf] %vm643, %v641
      %s645 = ssub.s32 1, %s20
      %s646 = smul.u32 %s20, 14
      %s647 = sadd.s32 %s645, %s646
      %s648 = smul.u32 %s647, 4
      %s649 = scalar_lea.vmem %s391, %s648
      %v650 = vld [vmem:[%s649] sm:$0xf]
      %s651 = scalar_lea.vmem %s411, %s648
      %v652 = vld [vmem:[%s651] sm:$0xf]
      %v654 = vsel %vm474, %v641, 0
      %656 = vmatprep.subr.mxu0 0.0
      %657 = vmatpush1.msra.mxu0 %v459
      %658 = vmatprep.subr.mxu0 0.0
      %659 = vmatpush1.msra.mxu0 %v460
      %660 = vmatprep.subr.mxu0 0.0
      %661 = vmatpush1.msra.mxu0 %v461
      %662 = vmatprep.subr.mxu0 0.0
      %663 = vmatpush1.msra.mxu0 %v462
      %664 = vmatprep.subr.mxu0 0.0
      %665 = vmatpush1.msra.mxu0 0.0
      %666 = vmatprep.subr.mxu0 0.0
      %667 = vmatpush1.msra.mxu0 0.0
      %668 = vmatprep.subr.mxu0 0.0
      %669 = vmatpush1.msra.mxu0 0.0
      %670 = vmatprep.subr.mxu0 0.0
      %671 = vmatpush1.msra.mxu0 0.0
      %672 = vmatprep.subr.mxu0 0.0
      %673 = vmatpush1.msra.mxu0 0.0
      %674 = vmatprep.subr.mxu0 0.0
      %675 = vmatpush1.msra.mxu0 0.0
      %676 = vmatprep.subr.mxu0 0.0
      %677 = vmatpush1.msra.mxu0 0.0
      %678 = vmatprep.subr.mxu0 0.0
      %679 = vmatpush1.msra.mxu0 0.0
      %680 = vmatprep.subr.mxu0 0.0
      %681 = vmatpush1.msra.mxu0 0.0
      %682 = vmatprep.subr.mxu0 0.0
      %683 = vmatpush1.msra.mxu0 0.0
      %684 = vmatprep.subr.mxu0 0.0
      %685 = vmatpush1.msra.mxu0 0.0
      %686 = vmatprep.subr.mxu0 0.0
      %687 = vmatpush1.msra.mxu0 0.0
      %688 = vmatprep.subr.mxu0 0.0
      %689 = vmatpush1.msra.mxu0 0.0
      %690 = vmatprep.subr.mxu0 0.0
      %691 = vmatpush1.msra.mxu0 0.0
      %692 = vmatprep.subr.mxu0 0.0
      %693 = vmatpush1.msra.mxu0 0.0
      %694 = vmatprep.subr.mxu0 0.0
      %695 = vmatpush1.msra.mxu0 0.0
      %696 = vmatprep.subr.mxu0 0.0
      %697 = vmatpush1.msra.mxu0 0.0
      %698 = vmatprep.subr.mxu0 0.0
      %699 = vmatpush1.msra.mxu0 0.0
      %700 = vmatprep.subr.mxu0 0.0
      %701 = vmatpush1.msra.mxu0 0.0
      %702 = vmatprep.subr.mxu0 0.0
      %703 = vmatpush1.msra.mxu0 0.0
      %704 = vmatprep.subr.mxu0 0.0
      %705 = vmatpush1.msra.mxu0 0.0
      %706 = vmatprep.subr.mxu0 0.0
      %707 = vmatpush1.msra.mxu0 0.0
      %708 = vmatprep.subr.mxu0 0.0
      %709 = vmatpush1.msra.mxu0 0.0
      %710 = vmatprep.subr.mxu0 0.0
      %711 = vmatpush1.msra.mxu0 0.0
      %712 = vmatprep.subr.mxu0 0.0
      %713 = vmatpush1.msra.mxu0 0.0
      %714 = vmatprep.subr.mxu0 0.0
      %715 = vmatpush1.msra.mxu0 0.0
      %716 = vmatprep.subr.mxu0 0.0
      %717 = vmatpush1.msra.mxu0 0.0
      %718 = vmatprep.subr.mxu0 0.0
      %719 = vmatpush1.msra.mxu0 0.0
      %720 = vmatprep.mubr.f32.mxu0 0.0
      %721 = vmatmul.mubr.f32.gmra.mrb[0].mxu0 %v654
      %v722 = vpop.f32.mrb[0].mxu0
      %v723 = vadd.f32 0.0, %v722
      %v724 = vpop.f32.mrb[0].mxu0
      %725 = vdwg.mxu0
      %v726 = vadd.f32 %v650, %v723
      %v727 = vxor.u32 %v726, 2147483648
      %v728 = vmul.f32 %v727, 1.442695
      %v729 = vpow.pop %v728
      %v730 = vadd.f32 %v729, 1.0
      %v731 = vrcp.pop %v730
      %v732 = vmul.f32 1.0, %v731
      %733 = vrot.lane.b32.xlu0 %v641, 32
      %v734 = vpop.permute.xlu0 %733
      %v736 = vmul.f32 %v732, %v734
      %738 = vrot.lane.b32.xlu0 %v736, 96
      %v739 = vpop.permute.xlu0 %738
      %v740 = vsel %vm474, %v739, 0
      %742 = vmatprep.subr.mxu0 0.0
      %743 = vmatpush1.msra.mxu0 %v463
      %744 = vmatprep.subr.mxu0 0.0
      %745 = vmatpush1.msra.mxu0 %v464
      %746 = vmatprep.subr.mxu0 0.0
      %747 = vmatpush1.msra.mxu0 %v465
      %748 = vmatprep.subr.mxu0 0.0
      %749 = vmatpush1.msra.mxu0 %v466
      %750 = vmatprep.subr.mxu0 0.0
      %751 = vmatpush1.msra.mxu0 0.0
      %752 = vmatprep.subr.mxu0 0.0
      %753 = vmatpush1.msra.mxu0 0.0
      %754 = vmatprep.subr.mxu0 0.0
      %755 = vmatpush1.msra.mxu0 0.0
      %756 = vmatprep.subr.mxu0 0.0
      %757 = vmatpush1.msra.mxu0 0.0
      %758 = vmatprep.subr.mxu0 0.0
      %759 = vmatpush1.msra.mxu0 0.0
      %760 = vmatprep.subr.mxu0 0.0
      %761 = vmatpush1.msra.mxu0 0.0
      %762 = vmatprep.subr.mxu0 0.0
      %763 = vmatpush1.msra.mxu0 0.0
      %764 = vmatprep.subr.mxu0 0.0
      %765 = vmatpush1.msra.mxu0 0.0
      %766 = vmatprep.subr.mxu0 0.0
      %767 = vmatpush1.msra.mxu0 0.0
      %768 = vmatprep.subr.mxu0 0.0
      %769 = vmatpush1.msra.mxu0 0.0
      %770 = vmatprep.subr.mxu0 0.0
      %771 = vmatpush1.msra.mxu0 0.0
      %772 = vmatprep.subr.mxu0 0.0
      %773 = vmatpush1.msra.mxu0 0.0
      %774 = vmatprep.subr.mxu0 0.0
      %775 = vmatpush1.msra.mxu0 0.0
      %776 = vmatprep.subr.mxu0 0.0
      %777 = vmatpush1.msra.mxu0 0.0
      %778 = vmatprep.subr.mxu0 0.0
      %779 = vmatpush1.msra.mxu0 0.0
      %780 = vmatprep.subr.mxu0 0.0
      %781 = vmatpush1.msra.mxu0 0.0
      %782 = vmatprep.subr.mxu0 0.0
      %783 = vmatpush1.msra.mxu0 0.0
      %784 = vmatprep.subr.mxu0 0.0
      %785 = vmatpush1.msra.mxu0 0.0
      %786 = vmatprep.subr.mxu0 0.0
      %787 = vmatpush1.msra.mxu0 0.0
      %788 = vmatprep.subr.mxu0 0.0
      %789 = vmatpush1.msra.mxu0 0.0
      %790 = vmatprep.subr.mxu0 0.0
      %791 = vmatpush1.msra.mxu0 0.0
      %792 = vmatprep.subr.mxu0 0.0
      %793 = vmatpush1.msra.mxu0 0.0
      %794 = vmatprep.subr.mxu0 0.0
      %795 = vmatpush1.msra.mxu0 0.0
      %796 = vmatprep.subr.mxu0 0.0
      %797 = vmatpush1.msra.mxu0 0.0
      %798 = vmatprep.subr.mxu0 0.0
      %799 = vmatpush1.msra.mxu0 0.0
      %800 = vmatprep.subr.mxu0 0.0
      %801 = vmatpush1.msra.mxu0 0.0
      %802 = vmatprep.subr.mxu0 0.0
      %803 = vmatpush1.msra.mxu0 0.0
      %804 = vmatprep.subr.mxu0 0.0
      %805 = vmatpush1.msra.mxu0 0.0
      %806 = vmatprep.mubr.f32.mxu0 0.0
      %807 = vmatmul.mubr.f32.gmra.mrb[0].mxu0 %v740
      %v808 = vpop.f32.mrb[0].mxu0
      %v809 = vadd.f32 0.0, %v808
      %v810 = vpop.f32.mrb[0].mxu0
      %811 = vdwg.mxu0
      %v812 = vadd.f32 %v652, %v809
      %v813 = vtanh.pop %v812
      %v814 = vmul.f32 %v732, %v641
      %v815 = vsub.f32 1.0, %v732
      %v816 = vmul.f32 %v815, %v813
      %v817 = vadd.f32 %v814, %v816
      %v818 = vmax.f32 %v817, -5.0
      %v819 = vmin.f32 %v818, 5.0
      %s820 = scalar_lea.vmem %s445, %s648
      %821 = vst.msk [vmem:[%s820] sm:$0xf] %vm643, %v819
      %s822 = smul.u32 %s645, 2
      %s823 = smul.u32 %s20, 13
      %s824 = sadd.s32 %s822, %s823
      %s825 = smul.u32 %s824, 4
      %s826 = scalar_lea.vmem %s391, %s825
      %v827 = vld [vmem:[%s826] sm:$0xf]
      %s828 = scalar_lea.vmem %s411, %s825
      %v829 = vld [vmem:[%s828] sm:$0xf]
      %v831 = vsel %vm474, %v819, 0
      %833 = vmatprep.subr.mxu0 0.0
      %834 = vmatpush1.msra.mxu0 %v459
      %835 = vmatprep.subr.mxu0 0.0
      %836 = vmatpush1.msra.mxu0 %v460
      %837 = vmatprep.subr.mxu0 0.0
      %838 = vmatpush1.msra.mxu0 %v461
      %839 = vmatprep.subr.mxu0 0.0
      %840 = vmatpush1.msra.mxu0 %v462
      %841 = vmatprep.subr.mxu0 0.0
      %842 = vmatpush1.msra.mxu0 0.0
      %843 = vmatprep.subr.mxu0 0.0
      %844 = vmatpush1.msra.mxu0 0.0
      %845 = vmatprep.subr.mxu0 0.0
      %846 = vmatpush1.msra.mxu0 0.0
      %847 = vmatprep.subr.mxu0 0.0
      %848 = vmatpush1.msra.mxu0 0.0
      %849 = vmatprep.subr.mxu0 0.0
      %850 = vmatpush1.msra.mxu0 0.0
      %851 = vmatprep.subr.mxu0 0.0
      %852 = vmatpush1.msra.mxu0 0.0
      %853 = vmatprep.subr.mxu0 0.0
      %854 = vmatpush1.msra.mxu0 0.0
      %855 = vmatprep.subr.mxu0 0.0
      %856 = vmatpush1.msra.mxu0 0.0
      %857 = vmatprep.subr.mxu0 0.0
      %858 = vmatpush1.msra.mxu0 0.0
      %859 = vmatprep.subr.mxu0 0.0
      %860 = vmatpush1.msra.mxu0 0.0
      %861 = vmatprep.subr.mxu0 0.0
      %862 = vmatpush1.msra.mxu0 0.0
      %863 = vmatprep.subr.mxu0 0.0
      %864 = vmatpush1.msra.mxu0 0.0
      %865 = vmatprep.subr.mxu0 0.0
      %866 = vmatpush1.msra.mxu0 0.0
      %867 = vmatprep.subr.mxu0 0.0
      %868 = vmatpush1.msra.mxu0 0.0
      %869 = vmatprep.subr.mxu0 0.0
      %870 = vmatpush1.msra.mxu0 0.0
      %871 = vmatprep.subr.mxu0 0.0
      %872 = vmatpush1.msra.mxu0 0.0
      %873 = vmatprep.subr.mxu0 0.0
      %874 = vmatpush1.msra.mxu0 0.0
      %875 = vmatprep.subr.mxu0 0.0
      %876 = vmatpush1.msra.mxu0 0.0
      %877 = vmatprep.subr.mxu0 0.0
      %878 = vmatpush1.msra.mxu0 0.0
      %879 = vmatprep.subr.mxu0 0.0
      %880 = vmatpush1.msra.mxu0 0.0
      %881 = vmatprep.subr.mxu0 0.0
      %882 = vmatpush1.msra.mxu0 0.0
      %883 = vmatprep.subr.mxu0 0.0
      %884 = vmatpush1.msra.mxu0 0.0
      %885 = vmatprep.subr.mxu0 0.0
      %886 = vmatpush1.msra.mxu0 0.0
      %887 = vmatprep.subr.mxu0 0.0
      %888 = vmatpush1.msra.mxu0 0.0
      %889 = vmatprep.subr.mxu0 0.0
      %890 = vmatpush1.msra.mxu0 0.0
      %891 = vmatprep.subr.mxu0 0.0
      %892 = vmatpush1.msra.mxu0 0.0
      %893 = vmatprep.subr.mxu0 0.0
      %894 = vmatpush1.msra.mxu0 0.0
      %895 = vmatprep.subr.mxu0 0.0
      %896 = vmatpush1.msra.mxu0 0.0
      %897 = vmatprep.mubr.f32.mxu0 0.0
      %898 = vmatmul.mubr.f32.gmra.mrb[0].mxu0 %v831
      %v899 = vpop.f32.mrb[0].mxu0
      %v900 = vadd.f32 0.0, %v899
      %v901 = vpop.f32.mrb[0].mxu0
      %902 = vdwg.mxu0
      %v903 = vadd.f32 %v827, %v900
      %v904 = vxor.u32 %v903, 2147483648
      %v905 = vmul.f32 %v904, 1.442695
      %v906 = vpow.pop %v905
      %v907 = vadd.f32 %v906, 1.0
      %v908 = vrcp.pop %v907
      %v909 = vmul.f32 1.0, %v908
      %910 = vrot.lane.b32.xlu0 %v819, 32
      %v911 = vpop.permute.xlu0 %910
      %v913 = vmul.f32 %v909, %v911
      %915 = vrot.lane.b32.xlu0 %v913, 96
      %v916 = vpop.permute.xlu0 %915
      %v917 = vsel %vm474, %v916, 0
      %919 = vmatprep.subr.mxu0 0.0
      %920 = vmatpush1.msra.mxu0 %v463
      %921 = vmatprep.subr.mxu0 0.0
      %922 = vmatpush1.msra.mxu0 %v464
      %923 = vmatprep.subr.mxu0 0.0
      %924 = vmatpush1.msra.mxu0 %v465
      %925 = vmatprep.subr.mxu0 0.0
      %926 = vmatpush1.msra.mxu0 %v466
      %927 = vmatprep.subr.mxu0 0.0
      %928 = vmatpush1.msra.mxu0 0.0
      %929 = vmatprep.subr.mxu0 0.0
      %930 = vmatpush1.msra.mxu0 0.0
      %931 = vmatprep.subr.mxu0 0.0
      %932 = vmatpush1.msra.mxu0 0.0
      %933 = vmatprep.subr.mxu0 0.0
      %934 = vmatpush1.msra.mxu0 0.0
      %935 = vmatprep.subr.mxu0 0.0
      %936 = vmatpush1.msra.mxu0 0.0
      %937 = vmatprep.subr.mxu0 0.0
      %938 = vmatpush1.msra.mxu0 0.0
      %939 = vmatprep.subr.mxu0 0.0
      %940 = vmatpush1.msra.mxu0 0.0
      %941 = vmatprep.subr.mxu0 0.0
      %942 = vmatpush1.msra.mxu0 0.0
      %943 = vmatprep.subr.mxu0 0.0
      %944 = vmatpush1.msra.mxu0 0.0
      %945 = vmatprep.subr.mxu0 0.0
      %946 = vmatpush1.msra.mxu0 0.0
      %947 = vmatprep.subr.mxu0 0.0
      %948 = vmatpush1.msra.mxu0 0.0
      %949 = vmatprep.subr.mxu0 0.0
      %950 = vmatpush1.msra.mxu0 0.0
      %951 = vmatprep.subr.mxu0 0.0
      %952 = vmatpush1.msra.mxu0 0.0
      %953 = vmatprep.subr.mxu0 0.0
      %954 = vmatpush1.msra.mxu0 0.0
      %955 = vmatprep.subr.mxu0 0.0
      %956 = vmatpush1.msra.mxu0 0.0
      %957 = vmatprep.subr.mxu0 0.0
      %958 = vmatpush1.msra.mxu0 0.0
      %959 = vmatprep.subr.mxu0 0.0
      %960 = vmatpush1.msra.mxu0 0.0
      %961 = vmatprep.subr.mxu0 0.0
      %962 = vmatpush1.msra.mxu0 0.0
      %963 = vmatprep.subr.mxu0 0.0
      %964 = vmatpush1.msra.mxu0 0.0
      %965 = vmatprep.subr.mxu0 0.0
      %966 = vmatpush1.msra.mxu0 0.0
      %967 = vmatprep.subr.mxu0 0.0
      %968 = vmatpush1.msra.mxu0 0.0
      %969 = vmatprep.subr.mxu0 0.0
      %970 = vmatpush1.msra.mxu0 0.0
      %971 = vmatprep.subr.mxu0 0.0
      %972 = vmatpush1.msra.mxu0 0.0
      %973 = vmatprep.subr.mxu0 0.0
      %974 = vmatpush1.msra.mxu0 0.0
      %975 = vmatprep.subr.mxu0 0.0
      %976 = vmatpush1.msra.mxu0 0.0
      %977 = vmatprep.subr.mxu0 0.0
      %978 = vmatpush1.msra.mxu0 0.0
      %979 = vmatprep.subr.mxu0 0.0
      %980 = vmatpush1.msra.mxu0 0.0
      %981 = vmatprep.subr.mxu0 0.0
      %982 = vmatpush1.msra.mxu0 0.0
      %983 = vmatprep.mubr.f32.mxu0 0.0
      %984 = vmatmul.mubr.f32.gmra.mrb[0].mxu0 %v917
      %v985 = vpop.f32.mrb[0].mxu0
      %v986 = vadd.f32 0.0, %v985
      %v987 = vpop.f32.mrb[0].mxu0
      %988 = vdwg.mxu0
      %v989 = vadd.f32 %v829, %v986
      %v990 = vtanh.pop %v989
      %v991 = vmul.f32 %v909, %v819
      %v992 = vsub.f32 1.0, %v909
      %v993 = vmul.f32 %v992, %v990
      %v994 = vadd.f32 %v991, %v993
      %v995 = vmax.f32 %v994, -5.0
      %v996 = vmin.f32 %v995, 5.0
      %s997 = scalar_lea.vmem %s445, %s825
      %998 = vst.msk [vmem:[%s997] sm:$0xf] %vm643, %v996
      %s999 = smul.u32 %s645, 3
      %s1000 = smul.u32 %s20, 12
      %s1001 = sadd.s32 %s999, %s1000
      %s1002 = smul.u32 %s1001, 4
      %s1003 = scalar_lea.vmem %s391, %s1002
      %v1004 = vld [vmem:[%s1003] sm:$0xf]
      %s1005 = scalar_lea.vmem %s411, %s1002
      %v1006 = vld [vmem:[%s1005] sm:$0xf]
      %v1008 = vsel %vm474, %v996, 0
      %1010 = vmatprep.subr.mxu0 0.0
      %1011 = vmatpush1.msra.mxu0 %v459
      %1012 = vmatprep.subr.mxu0 0.0
      %1013 = vmatpush1.msra.mxu0 %v460
      %1014 = vmatprep.subr.mxu0 0.0
      %1015 = vmatpush1.msra.mxu0 %v461
      %1016 = vmatprep.subr.mxu0 0.0
      %1017 = vmatpush1.msra.mxu0 %v462
      %1018 = vmatprep.subr.mxu0 0.0
      %1019 = vmatpush1.msra.mxu0 0.0
      %1020 = vmatprep.subr.mxu0 0.0
      %1021 = vmatpush1.msra.mxu0 0.0
      %1022 = vmatprep.subr.mxu0 0.0
      %1023 = vmatpush1.msra.mxu0 0.0
      %1024 = vmatprep.subr.mxu0 0.0
      %1025 = vmatpush1.msra.mxu0 0.0
      %1026 = vmatprep.subr.mxu0 0.0
      %1027 = vmatpush1.msra.mxu0 0.0
      %1028 = vmatprep.subr.mxu0 0.0
      %1029 = vmatpush1.msra.mxu0 0.0
      %1030 = vmatprep.subr.mxu0 0.0
      %1031 = vmatpush1.msra.mxu0 0.0
      %1032 = vmatprep.subr.mxu0 0.0
      %1033 = vmatpush1.msra.mxu0 0.0
      %1034 = vmatprep.subr.mxu0 0.0
      %1035 = vmatpush1.msra.mxu0 0.0
      %1036 = vmatprep.subr.mxu0 0.0
      %1037 = vmatpush1.msra.mxu0 0.0
      %1038 = vmatprep.subr.mxu0 0.0
      %1039 = vmatpush1.msra.mxu0 0.0
      %1040 = vmatprep.subr.mxu0 0.0
      %1041 = vmatpush1.msra.mxu0 0.0
      %1042 = vmatprep.subr.mxu0 0.0
      %1043 = vmatpush1.msra.mxu0 0.0
      %1044 = vmatprep.subr.mxu0 0.0
      %1045 = vmatpush1.msra.mxu0 0.0
      %1046 = vmatprep.subr.mxu0 0.0
      %1047 = vmatpush1.msra.mxu0 0.0
      %1048 = vmatprep.subr.mxu0 0.0
      %1049 = vmatpush1.msra.mxu0 0.0
      %1050 = vmatprep.subr.mxu0 0.0
      %1051 = vmatpush1.msra.mxu0 0.0
      %1052 = vmatprep.subr.mxu0 0.0
      %1053 = vmatpush1.msra.mxu0 0.0
      %1054 = vmatprep.subr.mxu0 0.0
      %1055 = vmatpush1.msra.mxu0 0.0
      %1056 = vmatprep.subr.mxu0 0.0
      %1057 = vmatpush1.msra.mxu0 0.0
      %1058 = vmatprep.subr.mxu0 0.0
      %1059 = vmatpush1.msra.mxu0 0.0
      %1060 = vmatprep.subr.mxu0 0.0
      %1061 = vmatpush1.msra.mxu0 0.0
      %1062 = vmatprep.subr.mxu0 0.0
      %1063 = vmatpush1.msra.mxu0 0.0
      %1064 = vmatprep.subr.mxu0 0.0
      %1065 = vmatpush1.msra.mxu0 0.0
      %1066 = vmatprep.subr.mxu0 0.0
      %1067 = vmatpush1.msra.mxu0 0.0
      %1068 = vmatprep.subr.mxu0 0.0
      %1069 = vmatpush1.msra.mxu0 0.0
      %1070 = vmatprep.subr.mxu0 0.0
      %1071 = vmatpush1.msra.mxu0 0.0
      %1072 = vmatprep.subr.mxu0 0.0
      %1073 = vmatpush1.msra.mxu0 0.0
      %1074 = vmatprep.mubr.f32.mxu0 0.0
      %1075 = vmatmul.mubr.f32.gmra.mrb[0].mxu0 %v1008
      %v1076 = vpop.f32.mrb[0].mxu0
      %v1077 = vadd.f32 0.0, %v1076
      %v1078 = vpop.f32.mrb[0].mxu0
      %1079 = vdwg.mxu0
      %v1080 = vadd.f32 %v1004, %v1077
      %v1081 = vxor.u32 %v1080, 2147483648
      %v1082 = vmul.f32 %v1081, 1.442695
      %v1083 = vpow.pop %v1082
      %v1084 = vadd.f32 %v1083, 1.0
      %v1085 = vrcp.pop %v1084
      %v1086 = vmul.f32 1.0, %v1085
      %1087 = vrot.lane.b32.xlu0 %v996, 32
      %v1088 = vpop.permute.xlu0 %1087
      %v1090 = vmul.f32 %v1086, %v1088
      %1092 = vrot.lane.b32.xlu0 %v1090, 96
      %v1093 = vpop.permute.xlu0 %1092
      %v1094 = vsel %vm474, %v1093, 0
      %1096 = vmatprep.subr.mxu0 0.0
      %1097 = vmatpush1.msra.mxu0 %v463
      %1098 = vmatprep.subr.mxu0 0.0
      %1099 = vmatpush1.msra.mxu0 %v464
      %1100 = vmatprep.subr.mxu0 0.0
      %1101 = vmatpush1.msra.mxu0 %v465
      %1102 = vmatprep.subr.mxu0 0.0
      %1103 = vmatpush1.msra.mxu0 %v466
      %1104 = vmatprep.subr.mxu0 0.0
      %1105 = vmatpush1.msra.mxu0 0.0
      %1106 = vmatprep.subr.mxu0 0.0
      %1107 = vmatpush1.msra.mxu0 0.0
      %1108 = vmatprep.subr.mxu0 0.0
      %1109 = vmatpush1.msra.mxu0 0.0
      %1110 = vmatprep.subr.mxu0 0.0
      %1111 = vmatpush1.msra.mxu0 0.0
      %1112 = vmatprep.subr.mxu0 0.0
      %1113 = vmatpush1.msra.mxu0 0.0
      %1114 = vmatprep.subr.mxu0 0.0
      %1115 = vmatpush1.msra.mxu0 0.0
      %1116 = vmatprep.subr.mxu0 0.0
      %1117 = vmatpush1.msra.mxu0 0.0
      %1118 = vmatprep.subr.mxu0 0.0
      %1119 = vmatpush1.msra.mxu0 0.0
      %1120 = vmatprep.subr.mxu0 0.0
      %1121 = vmatpush1.msra.mxu0 0.0
      %1122 = vmatprep.subr.mxu0 0.0
      %1123 = vmatpush1.msra.mxu0 0.0
      %1124 = vmatprep.subr.mxu0 0.0
      %1125 = vmatpush1.msra.mxu0 0.0
      %1126 = vmatprep.subr.mxu0 0.0
      %1127 = vmatpush1.msra.mxu0 0.0
      %1128 = vmatprep.subr.mxu0 0.0
      %1129 = vmatpush1.msra.mxu0 0.0
      %1130 = vmatprep.subr.mxu0 0.0
      %1131 = vmatpush1.msra.mxu0 0.0
      %1132 = vmatprep.subr.mxu0 0.0
      %1133 = vmatpush1.msra.mxu0 0.0
      %1134 = vmatprep.subr.mxu0 0.0
      %1135 = vmatpush1.msra.mxu0 0.0
      %1136 = vmatprep.subr.mxu0 0.0
      %1137 = vmatpush1.msra.mxu0 0.0
      %1138 = vmatprep.subr.mxu0 0.0
      %1139 = vmatpush1.msra.mxu0 0.0
      %1140 = vmatprep.subr.mxu0 0.0
      %1141 = vmatpush1.msra.mxu0 0.0
      %1142 = vmatprep.subr.mxu0 0.0
      %1143 = vmatpush1.msra.mxu0 0.0
      %1144 = vmatprep.subr.mxu0 0.0
      %1145 = vmatpush1.msra.mxu0 0.0
      %1146 = vmatprep.subr.mxu0 0.0
      %1147 = vmatpush1.msra.mxu0 0.0
      %1148 = vmatprep.subr.mxu0 0.0
      %1149 = vmatpush1.msra.mxu0 0.0
      %1150 = vmatprep.subr.mxu0 0.0
      %1151 = vmatpush1.msra.mxu0 0.0
      %1152 = vmatprep.subr.mxu0 0.0
      %1153 = vmatpush1.msra.mxu0 0.0
      %1154 = vmatprep.subr.mxu0 0.0
      %1155 = vmatpush1.msra.mxu0 0.0
      %1156 = vmatprep.subr.mxu0 0.0
      %1157 = vmatpush1.msra.mxu0 0.0
      %1158 = vmatprep.subr.mxu0 0.0
      %1159 = vmatpush1.msra.mxu0 0.0
      %1160 = vmatprep.mubr.f32.mxu0 0.0
      %1161 = vmatmul.mubr.f32.gmra.mrb[0].mxu0 %v1094
      %v1162 = vpop.f32.mrb[0].mxu0
      %v1163 = vadd.f32 0.0, %v1162
      %v1164 = vpop.f32.mrb[0].mxu0
      %1165 = vdwg.mxu0
      %v1166 = vadd.f32 %v1006, %v1163
      %v1167 = vtanh.pop %v1166
      %v1168 = vmul.f32 %v1086, %v996
      %v1169 = vsub.f32 1.0, %v1086
      %v1170 = vmul.f32 %v1169, %v1167
      %v1171 = vadd.f32 %v1168, %v1170
      %v1172 = vmax.f32 %v1171, -5.0
      %v1173 = vmin.f32 %v1172, 5.0
      %s1174 = scalar_lea.vmem %s445, %s1002
      %1175 = vst.msk [vmem:[%s1174] sm:$0xf] %vm643, %v1173
      %s1176 = smul.u32 %s645, 4
      %s1177 = smul.u32 %s20, 11
      %s1178 = sadd.s32 %s1176, %s1177
      %s1179 = smul.u32 %s1178, 4
      %s1180 = scalar_lea.vmem %s391, %s1179
      %v1181 = vld [vmem:[%s1180] sm:$0xf]
      %s1182 = scalar_lea.vmem %s411, %s1179
      %v1183 = vld [vmem:[%s1182] sm:$0xf]
      %v1185 = vsel %vm474, %v1173, 0
      %1187 = vmatprep.subr.mxu0 0.0
      %1188 = vmatpush1.msra.mxu0 %v459
      %1189 = vmatprep.subr.mxu0 0.0
      %1190 = vmatpush1.msra.mxu0 %v460
      %1191 = vmatprep.subr.mxu0 0.0
      %1192 = vmatpush1.msra.mxu0 %v461
      %1193 = vmatprep.subr.mxu0 0.0
      %1194 = vmatpush1.msra.mxu0 %v462
      %1195 = vmatprep.subr.mxu0 0.0
      %1196 = vmatpush1.msra.mxu0 0.0
      %1197 = vmatprep.subr.mxu0 0.0
      %1198 = vmatpush1.msra.mxu0 0.0
      %1199 = vmatprep.subr.mxu0 0.0
      %1200 = vmatpush1.msra.mxu0 0.0
      %1201 = vmatprep.subr.mxu0 0.0
      %1202 = vmatpush1.msra.mxu0 0.0
      %1203 = vmatprep.subr.mxu0 0.0
      %1204 = vmatpush1.msra.mxu0 0.0
      %1205 = vmatprep.subr.mxu0 0.0
      %1206 = vmatpush1.msra.mxu0 0.0
      %1207 = vmatprep.subr.mxu0 0.0
      %1208 = vmatpush1.msra.mxu0 0.0
      %1209 = vmatprep.subr.mxu0 0.0
      %1210 = vmatpush1.msra.mxu0 0.0
      %1211 = vmatprep.subr.mxu0 0.0
      %1212 = vmatpush1.msra.mxu0 0.0
      %1213 = vmatprep.subr.mxu0 0.0
      %1214 = vmatpush1.msra.mxu0 0.0
      %1215 = vmatprep.subr.mxu0 0.0
      %1216 = vmatpush1.msra.mxu0 0.0
      %1217 = vmatprep.subr.mxu0 0.0
      %1218 = vmatpush1.msra.mxu0 0.0
      %1219 = vmatprep.subr.mxu0 0.0
      %1220 = vmatpush1.msra.mxu0 0.0
      %1221 = vmatprep.subr.mxu0 0.0
      %1222 = vmatpush1.msra.mxu0 0.0
      %1223 = vmatprep.subr.mxu0 0.0
      %1224 = vmatpush1.msra.mxu0 0.0
      %1225 = vmatprep.subr.mxu0 0.0
      %1226 = vmatpush1.msra.mxu0 0.0
      %1227 = vmatprep.subr.mxu0 0.0
      %1228 = vmatpush1.msra.mxu0 0.0
      %1229 = vmatprep.subr.mxu0 0.0
      %1230 = vmatpush1.msra.mxu0 0.0
      %1231 = vmatprep.subr.mxu0 0.0
      %1232 = vmatpush1.msra.mxu0 0.0
      %1233 = vmatprep.subr.mxu0 0.0
      %1234 = vmatpush1.msra.mxu0 0.0
      %1235 = vmatprep.subr.mxu0 0.0
      %1236 = vmatpush1.msra.mxu0 0.0
      %1237 = vmatprep.subr.mxu0 0.0
      %1238 = vmatpush1.msra.mxu0 0.0
      %1239 = vmatprep.subr.mxu0 0.0
      %1240 = vmatpush1.msra.mxu0 0.0
      %1241 = vmatprep.subr.mxu0 0.0
      %1242 = vmatpush1.msra.mxu0 0.0
      %1243 = vmatprep.subr.mxu0 0.0
      %1244 = vmatpush1.msra.mxu0 0.0
      %1245 = vmatprep.subr.mxu0 0.0
      %1246 = vmatpush1.msra.mxu0 0.0
      %1247 = vmatprep.subr.mxu0 0.0
      %1248 = vmatpush1.msra.mxu0 0.0
      %1249 = vmatprep.subr.mxu0 0.0
      %1250 = vmatpush1.msra.mxu0 0.0
      %1251 = vmatprep.mubr.f32.mxu0 0.0
      %1252 = vmatmul.mubr.f32.gmra.mrb[0].mxu0 %v1185
      %v1253 = vpop.f32.mrb[0].mxu0
      %v1254 = vadd.f32 0.0, %v1253
      %v1255 = vpop.f32.mrb[0].mxu0
      %1256 = vdwg.mxu0
      %v1257 = vadd.f32 %v1181, %v1254
      %v1258 = vxor.u32 %v1257, 2147483648
      %v1259 = vmul.f32 %v1258, 1.442695
      %v1260 = vpow.pop %v1259
      %v1261 = vadd.f32 %v1260, 1.0
      %v1262 = vrcp.pop %v1261
      %v1263 = vmul.f32 1.0, %v1262
      %1264 = vrot.lane.b32.xlu0 %v1173, 32
      %v1265 = vpop.permute.xlu0 %1264
      %v1267 = vmul.f32 %v1263, %v1265
      %1269 = vrot.lane.b32.xlu0 %v1267, 96
      %v1270 = vpop.permute.xlu0 %1269
      %v1271 = vsel %vm474, %v1270, 0
      %1273 = vmatprep.subr.mxu0 0.0
      %1274 = vmatpush1.msra.mxu0 %v463
      %1275 = vmatprep.subr.mxu0 0.0
      %1276 = vmatpush1.msra.mxu0 %v464
      %1277 = vmatprep.subr.mxu0 0.0
      %1278 = vmatpush1.msra.mxu0 %v465
      %1279 = vmatprep.subr.mxu0 0.0
      %1280 = vmatpush1.msra.mxu0 %v466
      %1281 = vmatprep.subr.mxu0 0.0
      %1282 = vmatpush1.msra.mxu0 0.0
      %1283 = vmatprep.subr.mxu0 0.0
      %1284 = vmatpush1.msra.mxu0 0.0
      %1285 = vmatprep.subr.mxu0 0.0
      %1286 = vmatpush1.msra.mxu0 0.0
      %1287 = vmatprep.subr.mxu0 0.0
      %1288 = vmatpush1.msra.mxu0 0.0
      %1289 = vmatprep.subr.mxu0 0.0
      %1290 = vmatpush1.msra.mxu0 0.0
      %1291 = vmatprep.subr.mxu0 0.0
      %1292 = vmatpush1.msra.mxu0 0.0
      %1293 = vmatprep.subr.mxu0 0.0
      %1294 = vmatpush1.msra.mxu0 0.0
      %1295 = vmatprep.subr.mxu0 0.0
      %1296 = vmatpush1.msra.mxu0 0.0
      %1297 = vmatprep.subr.mxu0 0.0
      %1298 = vmatpush1.msra.mxu0 0.0
      %1299 = vmatprep.subr.mxu0 0.0
      %1300 = vmatpush1.msra.mxu0 0.0
      %1301 = vmatprep.subr.mxu0 0.0
      %1302 = vmatpush1.msra.mxu0 0.0
      %1303 = vmatprep.subr.mxu0 0.0
      %1304 = vmatpush1.msra.mxu0 0.0
      %1305 = vmatprep.subr.mxu0 0.0
      %1306 = vmatpush1.msra.mxu0 0.0
      %1307 = vmatprep.subr.mxu0 0.0
      %1308 = vmatpush1.msra.mxu0 0.0
      %1309 = vmatprep.subr.mxu0 0.0
      %1310 = vmatpush1.msra.mxu0 0.0
      %1311 = vmatprep.subr.mxu0 0.0
      %1312 = vmatpush1.msra.mxu0 0.0
      %1313 = vmatprep.subr.mxu0 0.0
      %1314 = vmatpush1.msra.mxu0 0.0
      %1315 = vmatprep.subr.mxu0 0.0
      %1316 = vmatpush1.msra.mxu0 0.0
      %1317 = vmatprep.subr.mxu0 0.0
      %1318 = vmatpush1.msra.mxu0 0.0
      %1319 = vmatprep.subr.mxu0 0.0
      %1320 = vmatpush1.msra.mxu0 0.0
      %1321 = vmatprep.subr.mxu0 0.0
      %1322 = vmatpush1.msra.mxu0 0.0
      %1323 = vmatprep.subr.mxu0 0.0
      %1324 = vmatpush1.msra.mxu0 0.0
      %1325 = vmatprep.subr.mxu0 0.0
      %1326 = vmatpush1.msra.mxu0 0.0
      %1327 = vmatprep.subr.mxu0 0.0
      %1328 = vmatpush1.msra.mxu0 0.0
      %1329 = vmatprep.subr.mxu0 0.0
      %1330 = vmatpush1.msra.mxu0 0.0
      %1331 = vmatprep.subr.mxu0 0.0
      %1332 = vmatpush1.msra.mxu0 0.0
      %1333 = vmatprep.subr.mxu0 0.0
      %1334 = vmatpush1.msra.mxu0 0.0
      %1335 = vmatprep.subr.mxu0 0.0
      %1336 = vmatpush1.msra.mxu0 0.0
      %1337 = vmatprep.mubr.f32.mxu0 0.0
      %1338 = vmatmul.mubr.f32.gmra.mrb[0].mxu0 %v1271
      %v1339 = vpop.f32.mrb[0].mxu0
      %v1340 = vadd.f32 0.0, %v1339
      %v1341 = vpop.f32.mrb[0].mxu0
      %1342 = vdwg.mxu0
      %v1343 = vadd.f32 %v1183, %v1340
      %v1344 = vtanh.pop %v1343
      %v1345 = vmul.f32 %v1263, %v1173
      %v1346 = vsub.f32 1.0, %v1263
      %v1347 = vmul.f32 %v1346, %v1344
      %v1348 = vadd.f32 %v1345, %v1347
      %v1349 = vmax.f32 %v1348, -5.0
      %v1350 = vmin.f32 %v1349, 5.0
      %s1351 = scalar_lea.vmem %s445, %s1179
      %1352 = vst.msk [vmem:[%s1351] sm:$0xf] %vm643, %v1350
      %s1353 = smul.u32 %s645, 5
      %s1354 = smul.u32 %s20, 10
      %s1355 = sadd.s32 %s1353, %s1354
      %s1356 = smul.u32 %s1355, 4
      %s1357 = scalar_lea.vmem %s391, %s1356
      %v1358 = vld [vmem:[%s1357] sm:$0xf]
      %s1359 = scalar_lea.vmem %s411, %s1356
      %v1360 = vld [vmem:[%s1359] sm:$0xf]
      %v1362 = vsel %vm474, %v1350, 0
      %1364 = vmatprep.subr.mxu0 0.0
      %1365 = vmatpush1.msra.mxu0 %v459
      %1366 = vmatprep.subr.mxu0 0.0
      %1367 = vmatpush1.msra.mxu0 %v460
      %1368 = vmatprep.subr.mxu0 0.0
      %1369 = vmatpush1.msra.mxu0 %v461
      %1370 = vmatprep.subr.mxu0 0.0
      %1371 = vmatpush1.msra.mxu0 %v462
      %1372 = vmatprep.subr.mxu0 0.0
      %1373 = vmatpush1.msra.mxu0 0.0
      %1374 = vmatprep.subr.mxu0 0.0
      %1375 = vmatpush1.msra.mxu0 0.0
      %1376 = vmatprep.subr.mxu0 0.0
      %1377 = vmatpush1.msra.mxu0 0.0
      %1378 = vmatprep.subr.mxu0 0.0
      %1379 = vmatpush1.msra.mxu0 0.0
      %1380 = vmatprep.subr.mxu0 0.0
      %1381 = vmatpush1.msra.mxu0 0.0
      %1382 = vmatprep.subr.mxu0 0.0
      %1383 = vmatpush1.msra.mxu0 0.0
      %1384 = vmatprep.subr.mxu0 0.0
      %1385 = vmatpush1.msra.mxu0 0.0
      %1386 = vmatprep.subr.mxu0 0.0
      %1387 = vmatpush1.msra.mxu0 0.0
      %1388 = vmatprep.subr.mxu0 0.0
      %1389 = vmatpush1.msra.mxu0 0.0
      %1390 = vmatprep.subr.mxu0 0.0
      %1391 = vmatpush1.msra.mxu0 0.0
      %1392 = vmatprep.subr.mxu0 0.0
      %1393 = vmatpush1.msra.mxu0 0.0
      %1394 = vmatprep.subr.mxu0 0.0
      %1395 = vmatpush1.msra.mxu0 0.0
      %1396 = vmatprep.subr.mxu0 0.0
      %1397 = vmatpush1.msra.mxu0 0.0
      %1398 = vmatprep.subr.mxu0 0.0
      %1399 = vmatpush1.msra.mxu0 0.0
      %1400 = vmatprep.subr.mxu0 0.0
      %1401 = vmatpush1.msra.mxu0 0.0
      %1402 = vmatprep.subr.mxu0 0.0
      %1403 = vmatpush1.msra.mxu0 0.0
      %1404 = vmatprep.subr.mxu0 0.0
      %1405 = vmatpush1.msra.mxu0 0.0
      %1406 = vmatprep.subr.mxu0 0.0
      %1407 = vmatpush1.msra.mxu0 0.0
      %1408 = vmatprep.subr.mxu0 0.0
      %1409 = vmatpush1.msra.mxu0 0.0
      %1410 = vmatprep.subr.mxu0 0.0
      %1411 = vmatpush1.msra.mxu0 0.0
      %1412 = vmatprep.subr.mxu0 0.0
      %1413 = vmatpush1.msra.mxu0 0.0
      %1414 = vmatprep.subr.mxu0 0.0
      %1415 = vmatpush1.msra.mxu0 0.0
      %1416 = vmatprep.subr.mxu0 0.0
      %1417 = vmatpush1.msra.mxu0 0.0
      %1418 = vmatprep.subr.mxu0 0.0
      %1419 = vmatpush1.msra.mxu0 0.0
      %1420 = vmatprep.subr.mxu0 0.0
      %1421 = vmatpush1.msra.mxu0 0.0
      %1422 = vmatprep.subr.mxu0 0.0
      %1423 = vmatpush1.msra.mxu0 0.0
      %1424 = vmatprep.subr.mxu0 0.0
      %1425 = vmatpush1.msra.mxu0 0.0
      %1426 = vmatprep.subr.mxu0 0.0
      %1427 = vmatpush1.msra.mxu0 0.0
      %1428 = vmatprep.mubr.f32.mxu0 0.0
      %1429 = vmatmul.mubr.f32.gmra.mrb[0].mxu0 %v1362
      %v1430 = vpop.f32.mrb[0].mxu0
      %v1431 = vadd.f32 0.0, %v1430
      %v1432 = vpop.f32.mrb[0].mxu0
      %1433 = vdwg.mxu0
      %v1434 = vadd.f32 %v1358, %v1431
      %v1435 = vxor.u32 %v1434, 2147483648
      %v1436 = vmul.f32 %v1435, 1.442695
      %v1437 = vpow.pop %v1436
      %v1438 = vadd.f32 %v1437, 1.0
      %v1439 = vrcp.pop %v1438
      %v1440 = vmul.f32 1.0, %v1439
      %1441 = vrot.lane.b32.xlu0 %v1350, 32
      %v1442 = vpop.permute.xlu0 %1441
      %v1444 = vmul.f32 %v1440, %v1442
      %1446 = vrot.lane.b32.xlu0 %v1444, 96
      %v1447 = vpop.permute.xlu0 %1446
      %v1448 = vsel %vm474, %v1447, 0
      %1450 = vmatprep.subr.mxu0 0.0
      %1451 = vmatpush1.msra.mxu0 %v463
      %1452 = vmatprep.subr.mxu0 0.0
      %1453 = vmatpush1.msra.mxu0 %v464
      %1454 = vmatprep.subr.mxu0 0.0
      %1455 = vmatpush1.msra.mxu0 %v465
      %1456 = vmatprep.subr.mxu0 0.0
      %1457 = vmatpush1.msra.mxu0 %v466
      %1458 = vmatprep.subr.mxu0 0.0
      %1459 = vmatpush1.msra.mxu0 0.0
      %1460 = vmatprep.subr.mxu0 0.0
      %1461 = vmatpush1.msra.mxu0 0.0
      %1462 = vmatprep.subr.mxu0 0.0
      %1463 = vmatpush1.msra.mxu0 0.0
      %1464 = vmatprep.subr.mxu0 0.0
      %1465 = vmatpush1.msra.mxu0 0.0
      %1466 = vmatprep.subr.mxu0 0.0
      %1467 = vmatpush1.msra.mxu0 0.0
      %1468 = vmatprep.subr.mxu0 0.0
      %1469 = vmatpush1.msra.mxu0 0.0
      %1470 = vmatprep.subr.mxu0 0.0
      %1471 = vmatpush1.msra.mxu0 0.0
      %1472 = vmatprep.subr.mxu0 0.0
      %1473 = vmatpush1.msra.mxu0 0.0
      %1474 = vmatprep.subr.mxu0 0.0
      %1475 = vmatpush1.msra.mxu0 0.0
      %1476 = vmatprep.subr.mxu0 0.0
      %1477 = vmatpush1.msra.mxu0 0.0
      %1478 = vmatprep.subr.mxu0 0.0
      %1479 = vmatpush1.msra.mxu0 0.0
      %1480 = vmatprep.subr.mxu0 0.0
      %1481 = vmatpush1.msra.mxu0 0.0
      %1482 = vmatprep.subr.mxu0 0.0
      %1483 = vmatpush1.msra.mxu0 0.0
      %1484 = vmatprep.subr.mxu0 0.0
      %1485 = vmatpush1.msra.mxu0 0.0
      %1486 = vmatprep.subr.mxu0 0.0
      %1487 = vmatpush1.msra.mxu0 0.0
      %1488 = vmatprep.subr.mxu0 0.0
      %1489 = vmatpush1.msra.mxu0 0.0
      %1490 = vmatprep.subr.mxu0 0.0
      %1491 = vmatpush1.msra.mxu0 0.0
      %1492 = vmatprep.subr.mxu0 0.0
      %1493 = vmatpush1.msra.mxu0 0.0
      %1494 = vmatprep.subr.mxu0 0.0
      %1495 = vmatpush1.msra.mxu0 0.0
      %1496 = vmatprep.subr.mxu0 0.0
      %1497 = vmatpush1.msra.mxu0 0.0
      %1498 = vmatprep.subr.mxu0 0.0
      %1499 = vmatpush1.msra.mxu0 0.0
      %1500 = vmatprep.subr.mxu0 0.0
      %1501 = vmatpush1.msra.mxu0 0.0
      %1502 = vmatprep.subr.mxu0 0.0
      %1503 = vmatpush1.msra.mxu0 0.0
      %1504 = vmatprep.subr.mxu0 0.0
      %1505 = vmatpush1.msra.mxu0 0.0
      %1506 = vmatprep.subr.mxu0 0.0
      %1507 = vmatpush1.msra.mxu0 0.0
      %1508 = vmatprep.subr.mxu0 0.0
      %1509 = vmatpush1.msra.mxu0 0.0
      %1510 = vmatprep.subr.mxu0 0.0
      %1511 = vmatpush1.msra.mxu0 0.0
      %1512 = vmatprep.subr.mxu0 0.0
      %1513 = vmatpush1.msra.mxu0 0.0
      %1514 = vmatprep.mubr.f32.mxu0 0.0
      %1515 = vmatmul.mubr.f32.gmra.mrb[0].mxu0 %v1448
      %v1516 = vpop.f32.mrb[0].mxu0
      %v1517 = vadd.f32 0.0, %v1516
      %v1518 = vpop.f32.mrb[0].mxu0
      %1519 = vdwg.mxu0
      %v1520 = vadd.f32 %v1360, %v1517
      %v1521 = vtanh.pop %v1520
      %v1522 = vmul.f32 %v1440, %v1350
      %v1523 = vsub.f32 1.0, %v1440
      %v1524 = vmul.f32 %v1523, %v1521
      %v1525 = vadd.f32 %v1522, %v1524
      %v1526 = vmax.f32 %v1525, -5.0
      %v1527 = vmin.f32 %v1526, 5.0
      %s1528 = scalar_lea.vmem %s445, %s1356
      %1529 = vst.msk [vmem:[%s1528] sm:$0xf] %vm643, %v1527
      %s1530 = smul.u32 %s645, 6
      %s1531 = smul.u32 %s20, 9
      %s1532 = sadd.s32 %s1530, %s1531
      %s1533 = smul.u32 %s1532, 4
      %s1534 = scalar_lea.vmem %s391, %s1533
      %v1535 = vld [vmem:[%s1534] sm:$0xf]
      %s1536 = scalar_lea.vmem %s411, %s1533
      %v1537 = vld [vmem:[%s1536] sm:$0xf]
      %v1539 = vsel %vm474, %v1527, 0
      %1541 = vmatprep.subr.mxu0 0.0
      %1542 = vmatpush1.msra.mxu0 %v459
      %1543 = vmatprep.subr.mxu0 0.0
      %1544 = vmatpush1.msra.mxu0 %v460
      %1545 = vmatprep.subr.mxu0 0.0
      %1546 = vmatpush1.msra.mxu0 %v461
      %1547 = vmatprep.subr.mxu0 0.0
      %1548 = vmatpush1.msra.mxu0 %v462
      %1549 = vmatprep.subr.mxu0 0.0
      %1550 = vmatpush1.msra.mxu0 0.0
      %1551 = vmatprep.subr.mxu0 0.0
      %1552 = vmatpush1.msra.mxu0 0.0
      %1553 = vmatprep.subr.mxu0 0.0
      %1554 = vmatpush1.msra.mxu0 0.0
      %1555 = vmatprep.subr.mxu0 0.0
      %1556 = vmatpush1.msra.mxu0 0.0
      %1557 = vmatprep.subr.mxu0 0.0
      %1558 = vmatpush1.msra.mxu0 0.0
      %1559 = vmatprep.subr.mxu0 0.0
      %1560 = vmatpush1.msra.mxu0 0.0
      %1561 = vmatprep.subr.mxu0 0.0
      %1562 = vmatpush1.msra.mxu0 0.0
      %1563 = vmatprep.subr.mxu0 0.0
      %1564 = vmatpush1.msra.mxu0 0.0
      %1565 = vmatprep.subr.mxu0 0.0
      %1566 = vmatpush1.msra.mxu0 0.0
      %1567 = vmatprep.subr.mxu0 0.0
      %1568 = vmatpush1.msra.mxu0 0.0
      %1569 = vmatprep.subr.mxu0 0.0
      %1570 = vmatpush1.msra.mxu0 0.0
      %1571 = vmatprep.subr.mxu0 0.0
      %1572 = vmatpush1.msra.mxu0 0.0
      %1573 = vmatprep.subr.mxu0 0.0
      %1574 = vmatpush1.msra.mxu0 0.0
      %1575 = vmatprep.subr.mxu0 0.0
      %1576 = vmatpush1.msra.mxu0 0.0
      %1577 = vmatprep.subr.mxu0 0.0
      %1578 = vmatpush1.msra.mxu0 0.0
      %1579 = vmatprep.subr.mxu0 0.0
      %1580 = vmatpush1.msra.mxu0 0.0
      %1581 = vmatprep.subr.mxu0 0.0
      %1582 = vmatpush1.msra.mxu0 0.0
      %1583 = vmatprep.subr.mxu0 0.0
      %1584 = vmatpush1.msra.mxu0 0.0
      %1585 = vmatprep.subr.mxu0 0.0
      %1586 = vmatpush1.msra.mxu0 0.0
      %1587 = vmatprep.subr.mxu0 0.0
      %1588 = vmatpush1.msra.mxu0 0.0
      %1589 = vmatprep.subr.mxu0 0.0
      %1590 = vmatpush1.msra.mxu0 0.0
      %1591 = vmatprep.subr.mxu0 0.0
      %1592 = vmatpush1.msra.mxu0 0.0
      %1593 = vmatprep.subr.mxu0 0.0
      %1594 = vmatpush1.msra.mxu0 0.0
      %1595 = vmatprep.subr.mxu0 0.0
      %1596 = vmatpush1.msra.mxu0 0.0
      %1597 = vmatprep.subr.mxu0 0.0
      %1598 = vmatpush1.msra.mxu0 0.0
      %1599 = vmatprep.subr.mxu0 0.0
      %1600 = vmatpush1.msra.mxu0 0.0
      %1601 = vmatprep.subr.mxu0 0.0
      %1602 = vmatpush1.msra.mxu0 0.0
      %1603 = vmatprep.subr.mxu0 0.0
      %1604 = vmatpush1.msra.mxu0 0.0
      %1605 = vmatprep.mubr.f32.mxu0 0.0
      %1606 = vmatmul.mubr.f32.gmra.mrb[0].mxu0 %v1539
      %v1607 = vpop.f32.mrb[0].mxu0
      %v1608 = vadd.f32 0.0, %v1607
      %v1609 = vpop.f32.mrb[0].mxu0
      %1610 = vdwg.mxu0
      %v1611 = vadd.f32 %v1535, %v1608
      %v1612 = vxor.u32 %v1611, 2147483648
      %v1613 = vmul.f32 %v1612, 1.442695
      %v1614 = vpow.pop %v1613
      %v1615 = vadd.f32 %v1614, 1.0
      %v1616 = vrcp.pop %v1615
      %v1617 = vmul.f32 1.0, %v1616
      %1618 = vrot.lane.b32.xlu0 %v1527, 32
      %v1619 = vpop.permute.xlu0 %1618
      %v1621 = vmul.f32 %v1617, %v1619
      %1623 = vrot.lane.b32.xlu0 %v1621, 96
      %v1624 = vpop.permute.xlu0 %1623
      %v1625 = vsel %vm474, %v1624, 0
      %1627 = vmatprep.subr.mxu0 0.0
      %1628 = vmatpush1.msra.mxu0 %v463
      %1629 = vmatprep.subr.mxu0 0.0
      %1630 = vmatpush1.msra.mxu0 %v464
      %1631 = vmatprep.subr.mxu0 0.0
      %1632 = vmatpush1.msra.mxu0 %v465
      %1633 = vmatprep.subr.mxu0 0.0
      %1634 = vmatpush1.msra.mxu0 %v466
      %1635 = vmatprep.subr.mxu0 0.0
      %1636 = vmatpush1.msra.mxu0 0.0
      %1637 = vmatprep.subr.mxu0 0.0
      %1638 = vmatpush1.msra.mxu0 0.0
      %1639 = vmatprep.subr.mxu0 0.0
      %1640 = vmatpush1.msra.mxu0 0.0
      %1641 = vmatprep.subr.mxu0 0.0
      %1642 = vmatpush1.msra.mxu0 0.0
      %1643 = vmatprep.subr.mxu0 0.0
      %1644 = vmatpush1.msra.mxu0 0.0
      %1645 = vmatprep.subr.mxu0 0.0
      %1646 = vmatpush1.msra.mxu0 0.0
      %1647 = vmatprep.subr.mxu0 0.0
      %1648 = vmatpush1.msra.mxu0 0.0
      %1649 = vmatprep.subr.mxu0 0.0
      %1650 = vmatpush1.msra.mxu0 0.0
      %1651 = vmatprep.subr.mxu0 0.0
      %1652 = vmatpush1.msra.mxu0 0.0
      %1653 = vmatprep.subr.mxu0 0.0
      %1654 = vmatpush1.msra.mxu0 0.0
      %1655 = vmatprep.subr.mxu0 0.0
      %1656 = vmatpush1.msra.mxu0 0.0
      %1657 = vmatprep.subr.mxu0 0.0
      %1658 = vmatpush1.msra.mxu0 0.0
      %1659 = vmatprep.subr.mxu0 0.0
      %1660 = vmatpush1.msra.mxu0 0.0
      %1661 = vmatprep.subr.mxu0 0.0
      %1662 = vmatpush1.msra.mxu0 0.0
      %1663 = vmatprep.subr.mxu0 0.0
      %1664 = vmatpush1.msra.mxu0 0.0
      %1665 = vmatprep.subr.mxu0 0.0
      %1666 = vmatpush1.msra.mxu0 0.0
      %1667 = vmatprep.subr.mxu0 0.0
      %1668 = vmatpush1.msra.mxu0 0.0
      %1669 = vmatprep.subr.mxu0 0.0
      %1670 = vmatpush1.msra.mxu0 0.0
      %1671 = vmatprep.subr.mxu0 0.0
      %1672 = vmatpush1.msra.mxu0 0.0
      %1673 = vmatprep.subr.mxu0 0.0
      %1674 = vmatpush1.msra.mxu0 0.0
      %1675 = vmatprep.subr.mxu0 0.0
      %1676 = vmatpush1.msra.mxu0 0.0
      %1677 = vmatprep.subr.mxu0 0.0
      %1678 = vmatpush1.msra.mxu0 0.0
      %1679 = vmatprep.subr.mxu0 0.0
      %1680 = vmatpush1.msra.mxu0 0.0
      %1681 = vmatprep.subr.mxu0 0.0
      %1682 = vmatpush1.msra.mxu0 0.0
      %1683 = vmatprep.subr.mxu0 0.0
      %1684 = vmatpush1.msra.mxu0 0.0
      %1685 = vmatprep.subr.mxu0 0.0
      %1686 = vmatpush1.msra.mxu0 0.0
      %1687 = vmatprep.subr.mxu0 0.0
      %1688 = vmatpush1.msra.mxu0 0.0
      %1689 = vmatprep.subr.mxu0 0.0
      %1690 = vmatpush1.msra.mxu0 0.0
      %1691 = vmatprep.mubr.f32.mxu0 0.0
      %1692 = vmatmul.mubr.f32.gmra.mrb[0].mxu0 %v1625
      %v1693 = vpop.f32.mrb[0].mxu0
      %v1694 = vadd.f32 0.0, %v1693
      %v1695 = vpop.f32.mrb[0].mxu0
      %1696 = vdwg.mxu0
      %v1697 = vadd.f32 %v1537, %v1694
      %v1698 = vtanh.pop %v1697
      %v1699 = vmul.f32 %v1617, %v1527
      %v1700 = vsub.f32 1.0, %v1617
      %v1701 = vmul.f32 %v1700, %v1698
      %v1702 = vadd.f32 %v1699, %v1701
      %v1703 = vmax.f32 %v1702, -5.0
      %v1704 = vmin.f32 %v1703, 5.0
      %s1705 = scalar_lea.vmem %s445, %s1533
      %1706 = vst.msk [vmem:[%s1705] sm:$0xf] %vm643, %v1704
      %s1707 = smul.u32 %s645, 7
      %s1708 = smul.u32 %s20, 8
      %s1709 = sadd.s32 %s1707, %s1708
      %s1710 = smul.u32 %s1709, 4
      %s1711 = scalar_lea.vmem %s391, %s1710
      %v1712 = vld [vmem:[%s1711] sm:$0xf]
      %s1713 = scalar_lea.vmem %s411, %s1710
      %v1714 = vld [vmem:[%s1713] sm:$0xf]
      %v1716 = vsel %vm474, %v1704, 0
      %1718 = vmatprep.subr.mxu0 0.0
      %1719 = vmatpush1.msra.mxu0 %v459
      %1720 = vmatprep.subr.mxu0 0.0
      %1721 = vmatpush1.msra.mxu0 %v460
      %1722 = vmatprep.subr.mxu0 0.0
      %1723 = vmatpush1.msra.mxu0 %v461
      %1724 = vmatprep.subr.mxu0 0.0
      %1725 = vmatpush1.msra.mxu0 %v462
      %1726 = vmatprep.subr.mxu0 0.0
      %1727 = vmatpush1.msra.mxu0 0.0
      %1728 = vmatprep.subr.mxu0 0.0
      %1729 = vmatpush1.msra.mxu0 0.0
      %1730 = vmatprep.subr.mxu0 0.0
      %1731 = vmatpush1.msra.mxu0 0.0
      %1732 = vmatprep.subr.mxu0 0.0
      %1733 = vmatpush1.msra.mxu0 0.0
      %1734 = vmatprep.subr.mxu0 0.0
      %1735 = vmatpush1.msra.mxu0 0.0
      %1736 = vmatprep.subr.mxu0 0.0
      %1737 = vmatpush1.msra.mxu0 0.0
      %1738 = vmatprep.subr.mxu0 0.0
      %1739 = vmatpush1.msra.mxu0 0.0
      %1740 = vmatprep.subr.mxu0 0.0
      %1741 = vmatpush1.msra.mxu0 0.0
      %1742 = vmatprep.subr.mxu0 0.0
      %1743 = vmatpush1.msra.mxu0 0.0
      %1744 = vmatprep.subr.mxu0 0.0
      %1745 = vmatpush1.msra.mxu0 0.0
      %1746 = vmatprep.subr.mxu0 0.0
      %1747 = vmatpush1.msra.mxu0 0.0
      %1748 = vmatprep.subr.mxu0 0.0
      %1749 = vmatpush1.msra.mxu0 0.0
      %1750 = vmatprep.subr.mxu0 0.0
      %1751 = vmatpush1.msra.mxu0 0.0
      %1752 = vmatprep.subr.mxu0 0.0
      %1753 = vmatpush1.msra.mxu0 0.0
      %1754 = vmatprep.subr.mxu0 0.0
      %1755 = vmatpush1.msra.mxu0 0.0
      %1756 = vmatprep.subr.mxu0 0.0
      %1757 = vmatpush1.msra.mxu0 0.0
      %1758 = vmatprep.subr.mxu0 0.0
      %1759 = vmatpush1.msra.mxu0 0.0
      %1760 = vmatprep.subr.mxu0 0.0
      %1761 = vmatpush1.msra.mxu0 0.0
      %1762 = vmatprep.subr.mxu0 0.0
      %1763 = vmatpush1.msra.mxu0 0.0
      %1764 = vmatprep.subr.mxu0 0.0
      %1765 = vmatpush1.msra.mxu0 0.0
      %1766 = vmatprep.subr.mxu0 0.0
      %1767 = vmatpush1.msra.mxu0 0.0
      %1768 = vmatprep.subr.mxu0 0.0
      %1769 = vmatpush1.msra.mxu0 0.0
      %1770 = vmatprep.subr.mxu0 0.0
      %1771 = vmatpush1.msra.mxu0 0.0
      %1772 = vmatprep.subr.mxu0 0.0
      %1773 = vmatpush1.msra.mxu0 0.0
      %1774 = vmatprep.subr.mxu0 0.0
      %1775 = vmatpush1.msra.mxu0 0.0
      %1776 = vmatprep.subr.mxu0 0.0
      %1777 = vmatpush1.msra.mxu0 0.0
      %1778 = vmatprep.subr.mxu0 0.0
      %1779 = vmatpush1.msra.mxu0 0.0
      %1780 = vmatprep.subr.mxu0 0.0
      %1781 = vmatpush1.msra.mxu0 0.0
      %1782 = vmatprep.mubr.f32.mxu0 0.0
      %1783 = vmatmul.mubr.f32.gmra.mrb[0].mxu0 %v1716
      %v1784 = vpop.f32.mrb[0].mxu0
      %v1785 = vadd.f32 0.0, %v1784
      %v1786 = vpop.f32.mrb[0].mxu0
      %1787 = vdwg.mxu0
      %v1788 = vadd.f32 %v1712, %v1785
      %v1789 = vxor.u32 %v1788, 2147483648
      %v1790 = vmul.f32 %v1789, 1.442695
      %v1791 = vpow.pop %v1790
      %v1792 = vadd.f32 %v1791, 1.0
      %v1793 = vrcp.pop %v1792
      %v1794 = vmul.f32 1.0, %v1793
      %1795 = vrot.lane.b32.xlu0 %v1704, 32
      %v1796 = vpop.permute.xlu0 %1795
      %v1798 = vmul.f32 %v1794, %v1796
      %1800 = vrot.lane.b32.xlu0 %v1798, 96
      %v1801 = vpop.permute.xlu0 %1800
      %v1802 = vsel %vm474, %v1801, 0
      %1804 = vmatprep.subr.mxu0 0.0
      %1805 = vmatpush1.msra.mxu0 %v463
      %1806 = vmatprep.subr.mxu0 0.0
      %1807 = vmatpush1.msra.mxu0 %v464
      %1808 = vmatprep.subr.mxu0 0.0
      %1809 = vmatpush1.msra.mxu0 %v465
      %1810 = vmatprep.subr.mxu0 0.0
      %1811 = vmatpush1.msra.mxu0 %v466
      %1812 = vmatprep.subr.mxu0 0.0
      %1813 = vmatpush1.msra.mxu0 0.0
      %1814 = vmatprep.subr.mxu0 0.0
      %1815 = vmatpush1.msra.mxu0 0.0
      %1816 = vmatprep.subr.mxu0 0.0
      %1817 = vmatpush1.msra.mxu0 0.0
      %1818 = vmatprep.subr.mxu0 0.0
      %1819 = vmatpush1.msra.mxu0 0.0
      %1820 = vmatprep.subr.mxu0 0.0
      %1821 = vmatpush1.msra.mxu0 0.0
      %1822 = vmatprep.subr.mxu0 0.0
      %1823 = vmatpush1.msra.mxu0 0.0
      %1824 = vmatprep.subr.mxu0 0.0
      %1825 = vmatpush1.msra.mxu0 0.0
      %1826 = vmatprep.subr.mxu0 0.0
      %1827 = vmatpush1.msra.mxu0 0.0
      %1828 = vmatprep.subr.mxu0 0.0
      %1829 = vmatpush1.msra.mxu0 0.0
      %1830 = vmatprep.subr.mxu0 0.0
      %1831 = vmatpush1.msra.mxu0 0.0
      %1832 = vmatprep.subr.mxu0 0.0
      %1833 = vmatpush1.msra.mxu0 0.0
      %1834 = vmatprep.subr.mxu0 0.0
      %1835 = vmatpush1.msra.mxu0 0.0
      %1836 = vmatprep.subr.mxu0 0.0
      %1837 = vmatpush1.msra.mxu0 0.0
      %1838 = vmatprep.subr.mxu0 0.0
      %1839 = vmatpush1.msra.mxu0 0.0
      %1840 = vmatprep.subr.mxu0 0.0
      %1841 = vmatpush1.msra.mxu0 0.0
      %1842 = vmatprep.subr.mxu0 0.0
      %1843 = vmatpush1.msra.mxu0 0.0
      %1844 = vmatprep.subr.mxu0 0.0
      %1845 = vmatpush1.msra.mxu0 0.0
      %1846 = vmatprep.subr.mxu0 0.0
      %1847 = vmatpush1.msra.mxu0 0.0
      %1848 = vmatprep.subr.mxu0 0.0
      %1849 = vmatpush1.msra.mxu0 0.0
      %1850 = vmatprep.subr.mxu0 0.0
      %1851 = vmatpush1.msra.mxu0 0.0
      %1852 = vmatprep.subr.mxu0 0.0
      %1853 = vmatpush1.msra.mxu0 0.0
      %1854 = vmatprep.subr.mxu0 0.0
      %1855 = vmatpush1.msra.mxu0 0.0
      %1856 = vmatprep.subr.mxu0 0.0
      %1857 = vmatpush1.msra.mxu0 0.0
      %1858 = vmatprep.subr.mxu0 0.0
      %1859 = vmatpush1.msra.mxu0 0.0
      %1860 = vmatprep.subr.mxu0 0.0
      %1861 = vmatpush1.msra.mxu0 0.0
      %1862 = vmatprep.subr.mxu0 0.0
      %1863 = vmatpush1.msra.mxu0 0.0
      %1864 = vmatprep.subr.mxu0 0.0
      %1865 = vmatpush1.msra.mxu0 0.0
      %1866 = vmatprep.subr.mxu0 0.0
      %1867 = vmatpush1.msra.mxu0 0.0
      %1868 = vmatprep.mubr.f32.mxu0 0.0
      %1869 = vmatmul.mubr.f32.gmra.mrb[0].mxu0 %v1802
      %v1870 = vpop.f32.mrb[0].mxu0
      %v1871 = vadd.f32 0.0, %v1870
      %v1872 = vpop.f32.mrb[0].mxu0
      %1873 = vdwg.mxu0
      %v1874 = vadd.f32 %v1714, %v1871
      %v1875 = vtanh.pop %v1874
      %v1876 = vmul.f32 %v1794, %v1704
      %v1877 = vsub.f32 1.0, %v1794
      %v1878 = vmul.f32 %v1877, %v1875
      %v1879 = vadd.f32 %v1876, %v1878
      %v1880 = vmax.f32 %v1879, -5.0
      %v1881 = vmin.f32 %v1880, 5.0
      %s1882 = scalar_lea.vmem %s445, %s1710
      %1883 = vst.msk [vmem:[%s1882] sm:$0xf] %vm643, %v1881
      %s1884 = smul.u32 %s645, 8
      %s1885 = smul.u32 %s20, 7
      %s1886 = sadd.s32 %s1884, %s1885
      %s1887 = smul.u32 %s1886, 4
      %s1888 = scalar_lea.vmem %s391, %s1887
      %v1889 = vld [vmem:[%s1888] sm:$0xf]
      %s1890 = scalar_lea.vmem %s411, %s1887
      %v1891 = vld [vmem:[%s1890] sm:$0xf]
      %v1893 = vsel %vm474, %v1881, 0
      %1895 = vmatprep.subr.mxu0 0.0
      %1896 = vmatpush1.msra.mxu0 %v459
      %1897 = vmatprep.subr.mxu0 0.0
      %1898 = vmatpush1.msra.mxu0 %v460
      %1899 = vmatprep.subr.mxu0 0.0
      %1900 = vmatpush1.msra.mxu0 %v461
      %1901 = vmatprep.subr.mxu0 0.0
      %1902 = vmatpush1.msra.mxu0 %v462
      %1903 = vmatprep.subr.mxu0 0.0
      %1904 = vmatpush1.msra.mxu0 0.0
      %1905 = vmatprep.subr.mxu0 0.0
      %1906 = vmatpush1.msra.mxu0 0.0
      %1907 = vmatprep.subr.mxu0 0.0
      %1908 = vmatpush1.msra.mxu0 0.0
      %1909 = vmatprep.subr.mxu0 0.0
      %1910 = vmatpush1.msra.mxu0 0.0
      %1911 = vmatprep.subr.mxu0 0.0
      %1912 = vmatpush1.msra.mxu0 0.0
      %1913 = vmatprep.subr.mxu0 0.0
      %1914 = vmatpush1.msra.mxu0 0.0
      %1915 = vmatprep.subr.mxu0 0.0
      %1916 = vmatpush1.msra.mxu0 0.0
      %1917 = vmatprep.subr.mxu0 0.0
      %1918 = vmatpush1.msra.mxu0 0.0
      %1919 = vmatprep.subr.mxu0 0.0
      %1920 = vmatpush1.msra.mxu0 0.0
      %1921 = vmatprep.subr.mxu0 0.0
      %1922 = vmatpush1.msra.mxu0 0.0
      %1923 = vmatprep.subr.mxu0 0.0
      %1924 = vmatpush1.msra.mxu0 0.0
      %1925 = vmatprep.subr.mxu0 0.0
      %1926 = vmatpush1.msra.mxu0 0.0
      %1927 = vmatprep.subr.mxu0 0.0
      %1928 = vmatpush1.msra.mxu0 0.0
      %1929 = vmatprep.subr.mxu0 0.0
      %1930 = vmatpush1.msra.mxu0 0.0
      %1931 = vmatprep.subr.mxu0 0.0
      %1932 = vmatpush1.msra.mxu0 0.0
      %1933 = vmatprep.subr.mxu0 0.0
      %1934 = vmatpush1.msra.mxu0 0.0
      %1935 = vmatprep.subr.mxu0 0.0
      %1936 = vmatpush1.msra.mxu0 0.0
      %1937 = vmatprep.subr.mxu0 0.0
      %1938 = vmatpush1.msra.mxu0 0.0
      %1939 = vmatprep.subr.mxu0 0.0
      %1940 = vmatpush1.msra.mxu0 0.0
      %1941 = vmatprep.subr.mxu0 0.0
      %1942 = vmatpush1.msra.mxu0 0.0
      %1943 = vmatprep.subr.mxu0 0.0
      %1944 = vmatpush1.msra.mxu0 0.0
      %1945 = vmatprep.subr.mxu0 0.0
      %1946 = vmatpush1.msra.mxu0 0.0
      %1947 = vmatprep.subr.mxu0 0.0
      %1948 = vmatpush1.msra.mxu0 0.0
      %1949 = vmatprep.subr.mxu0 0.0
      %1950 = vmatpush1.msra.mxu0 0.0
      %1951 = vmatprep.subr.mxu0 0.0
      %1952 = vmatpush1.msra.mxu0 0.0
      %1953 = vmatprep.subr.mxu0 0.0
      %1954 = vmatpush1.msra.mxu0 0.0
      %1955 = vmatprep.subr.mxu0 0.0
      %1956 = vmatpush1.msra.mxu0 0.0
      %1957 = vmatprep.subr.mxu0 0.0
      %1958 = vmatpush1.msra.mxu0 0.0
      %1959 = vmatprep.mubr.f32.mxu0 0.0
      %1960 = vmatmul.mubr.f32.gmra.mrb[0].mxu0 %v1893
      %v1961 = vpop.f32.mrb[0].mxu0
      %v1962 = vadd.f32 0.0, %v1961
      %v1963 = vpop.f32.mrb[0].mxu0
      %1964 = vdwg.mxu0
      %v1965 = vadd.f32 %v1889, %v1962
      %v1966 = vxor.u32 %v1965, 2147483648
      %v1967 = vmul.f32 %v1966, 1.442695
      %v1968 = vpow.pop %v1967
      %v1969 = vadd.f32 %v1968, 1.0
      %v1970 = vrcp.pop %v1969
      %v1971 = vmul.f32 1.0, %v1970
      %1972 = vrot.lane.b32.xlu0 %v1881, 32
      %v1973 = vpop.permute.xlu0 %1972
      %v1975 = vmul.f32 %v1971, %v1973
      %1977 = vrot.lane.b32.xlu0 %v1975, 96
      %v1978 = vpop.permute.xlu0 %1977
      %v1979 = vsel %vm474, %v1978, 0
      %1981 = vmatprep.subr.mxu0 0.0
      %1982 = vmatpush1.msra.mxu0 %v463
      %1983 = vmatprep.subr.mxu0 0.0
      %1984 = vmatpush1.msra.mxu0 %v464
      %1985 = vmatprep.subr.mxu0 0.0
      %1986 = vmatpush1.msra.mxu0 %v465
      %1987 = vmatprep.subr.mxu0 0.0
      %1988 = vmatpush1.msra.mxu0 %v466
      %1989 = vmatprep.subr.mxu0 0.0
      %1990 = vmatpush1.msra.mxu0 0.0
      %1991 = vmatprep.subr.mxu0 0.0
      %1992 = vmatpush1.msra.mxu0 0.0
      %1993 = vmatprep.subr.mxu0 0.0
      %1994 = vmatpush1.msra.mxu0 0.0
      %1995 = vmatprep.subr.mxu0 0.0
      %1996 = vmatpush1.msra.mxu0 0.0
      %1997 = vmatprep.subr.mxu0 0.0
      %1998 = vmatpush1.msra.mxu0 0.0
      %1999 = vmatprep.subr.mxu0 0.0
      %2000 = vmatpush1.msra.mxu0 0.0
      %2001 = vmatprep.subr.mxu0 0.0
      %2002 = vmatpush1.msra.mxu0 0.0
      %2003 = vmatprep.subr.mxu0 0.0
      %2004 = vmatpush1.msra.mxu0 0.0
      %2005 = vmatprep.subr.mxu0 0.0
      %2006 = vmatpush1.msra.mxu0 0.0
      %2007 = vmatprep.subr.mxu0 0.0
      %2008 = vmatpush1.msra.mxu0 0.0
      %2009 = vmatprep.subr.mxu0 0.0
      %2010 = vmatpush1.msra.mxu0 0.0
      %2011 = vmatprep.subr.mxu0 0.0
      %2012 = vmatpush1.msra.mxu0 0.0
      %2013 = vmatprep.subr.mxu0 0.0
      %2014 = vmatpush1.msra.mxu0 0.0
      %2015 = vmatprep.subr.mxu0 0.0
      %2016 = vmatpush1.msra.mxu0 0.0
      %2017 = vmatprep.subr.mxu0 0.0
      %2018 = vmatpush1.msra.mxu0 0.0
      %2019 = vmatprep.subr.mxu0 0.0
      %2020 = vmatpush1.msra.mxu0 0.0
      %2021 = vmatprep.subr.mxu0 0.0
      %2022 = vmatpush1.msra.mxu0 0.0
      %2023 = vmatprep.subr.mxu0 0.0
      %2024 = vmatpush1.msra.mxu0 0.0
      %2025 = vmatprep.subr.mxu0 0.0
      %2026 = vmatpush1.msra.mxu0 0.0
      %2027 = vmatprep.subr.mxu0 0.0
      %2028 = vmatpush1.msra.mxu0 0.0
      %2029 = vmatprep.subr.mxu0 0.0
      %2030 = vmatpush1.msra.mxu0 0.0
      %2031 = vmatprep.subr.mxu0 0.0
      %2032 = vmatpush1.msra.mxu0 0.0
      %2033 = vmatprep.subr.mxu0 0.0
      %2034 = vmatpush1.msra.mxu0 0.0
      %2035 = vmatprep.subr.mxu0 0.0
      %2036 = vmatpush1.msra.mxu0 0.0
      %2037 = vmatprep.subr.mxu0 0.0
      %2038 = vmatpush1.msra.mxu0 0.0
      %2039 = vmatprep.subr.mxu0 0.0
      %2040 = vmatpush1.msra.mxu0 0.0
      %2041 = vmatprep.subr.mxu0 0.0
      %2042 = vmatpush1.msra.mxu0 0.0
      %2043 = vmatprep.subr.mxu0 0.0
      %2044 = vmatpush1.msra.mxu0 0.0
      %2045 = vmatprep.mubr.f32.mxu0 0.0
      %2046 = vmatmul.mubr.f32.gmra.mrb[0].mxu0 %v1979
      %v2047 = vpop.f32.mrb[0].mxu0
      %v2048 = vadd.f32 0.0, %v2047
      %v2049 = vpop.f32.mrb[0].mxu0
      %2050 = vdwg.mxu0
      %v2051 = vadd.f32 %v1891, %v2048
      %v2052 = vtanh.pop %v2051
      %v2053 = vmul.f32 %v1971, %v1881
      %v2054 = vsub.f32 1.0, %v1971
      %v2055 = vmul.f32 %v2054, %v2052
      %v2056 = vadd.f32 %v2053, %v2055
      %v2057 = vmax.f32 %v2056, -5.0
      %v2058 = vmin.f32 %v2057, 5.0
      %s2059 = scalar_lea.vmem %s445, %s1887
      %2060 = vst.msk [vmem:[%s2059] sm:$0xf] %vm643, %v2058
      %s2061 = smul.u32 %s645, 9
      %s2062 = smul.u32 %s20, 6
      %s2063 = sadd.s32 %s2061, %s2062
      %s2064 = smul.u32 %s2063, 4
      %s2065 = scalar_lea.vmem %s391, %s2064
      %v2066 = vld [vmem:[%s2065] sm:$0xf]
      %s2067 = scalar_lea.vmem %s411, %s2064
      %v2068 = vld [vmem:[%s2067] sm:$0xf]
      %v2070 = vsel %vm474, %v2058, 0
      %2072 = vmatprep.subr.mxu0 0.0
      %2073 = vmatpush1.msra.mxu0 %v459
      %2074 = vmatprep.subr.mxu0 0.0
      %2075 = vmatpush1.msra.mxu0 %v460
      %2076 = vmatprep.subr.mxu0 0.0
      %2077 = vmatpush1.msra.mxu0 %v461
      %2078 = vmatprep.subr.mxu0 0.0
      %2079 = vmatpush1.msra.mxu0 %v462
      %2080 = vmatprep.subr.mxu0 0.0
      %2081 = vmatpush1.msra.mxu0 0.0
      %2082 = vmatprep.subr.mxu0 0.0
      %2083 = vmatpush1.msra.mxu0 0.0
      %2084 = vmatprep.subr.mxu0 0.0
      %2085 = vmatpush1.msra.mxu0 0.0
      %2086 = vmatprep.subr.mxu0 0.0
      %2087 = vmatpush1.msra.mxu0 0.0
      %2088 = vmatprep.subr.mxu0 0.0
      %2089 = vmatpush1.msra.mxu0 0.0
      %2090 = vmatprep.subr.mxu0 0.0
      %2091 = vmatpush1.msra.mxu0 0.0
      %2092 = vmatprep.subr.mxu0 0.0
      %2093 = vmatpush1.msra.mxu0 0.0
      %2094 = vmatprep.subr.mxu0 0.0
      %2095 = vmatpush1.msra.mxu0 0.0
      %2096 = vmatprep.subr.mxu0 0.0
      %2097 = vmatpush1.msra.mxu0 0.0
      %2098 = vmatprep.subr.mxu0 0.0
      %2099 = vmatpush1.msra.mxu0 0.0
      %2100 = vmatprep.subr.mxu0 0.0
      %2101 = vmatpush1.msra.mxu0 0.0
      %2102 = vmatprep.subr.mxu0 0.0
      %2103 = vmatpush1.msra.mxu0 0.0
      %2104 = vmatprep.subr.mxu0 0.0
      %2105 = vmatpush1.msra.mxu0 0.0
      %2106 = vmatprep.subr.mxu0 0.0
      %2107 = vmatpush1.msra.mxu0 0.0
      %2108 = vmatprep.subr.mxu0 0.0
      %2109 = vmatpush1.msra.mxu0 0.0
      %2110 = vmatprep.subr.mxu0 0.0
      %2111 = vmatpush1.msra.mxu0 0.0
      %2112 = vmatprep.subr.mxu0 0.0
      %2113 = vmatpush1.msra.mxu0 0.0
      %2114 = vmatprep.subr.mxu0 0.0
      %2115 = vmatpush1.msra.mxu0 0.0
      %2116 = vmatprep.subr.mxu0 0.0
      %2117 = vmatpush1.msra.mxu0 0.0
      %2118 = vmatprep.subr.mxu0 0.0
      %2119 = vmatpush1.msra.mxu0 0.0
      %2120 = vmatprep.subr.mxu0 0.0
      %2121 = vmatpush1.msra.mxu0 0.0
      %2122 = vmatprep.subr.mxu0 0.0
      %2123 = vmatpush1.msra.mxu0 0.0
      %2124 = vmatprep.subr.mxu0 0.0
      %2125 = vmatpush1.msra.mxu0 0.0
      %2126 = vmatprep.subr.mxu0 0.0
      %2127 = vmatpush1.msra.mxu0 0.0
      %2128 = vmatprep.subr.mxu0 0.0
      %2129 = vmatpush1.msra.mxu0 0.0
      %2130 = vmatprep.subr.mxu0 0.0
      %2131 = vmatpush1.msra.mxu0 0.0
      %2132 = vmatprep.subr.mxu0 0.0
      %2133 = vmatpush1.msra.mxu0 0.0
      %2134 = vmatprep.subr.mxu0 0.0
      %2135 = vmatpush1.msra.mxu0 0.0
      %2136 = vmatprep.mubr.f32.mxu0 0.0
      %2137 = vmatmul.mubr.f32.gmra.mrb[0].mxu0 %v2070
      %v2138 = vpop.f32.mrb[0].mxu0
      %v2139 = vadd.f32 0.0, %v2138
      %v2140 = vpop.f32.mrb[0].mxu0
      %2141 = vdwg.mxu0
      %v2142 = vadd.f32 %v2066, %v2139
      %v2143 = vxor.u32 %v2142, 2147483648
      %v2144 = vmul.f32 %v2143, 1.442695
      %v2145 = vpow.pop %v2144
      %v2146 = vadd.f32 %v2145, 1.0
      %v2147 = vrcp.pop %v2146
      %v2148 = vmul.f32 1.0, %v2147
      %2149 = vrot.lane.b32.xlu0 %v2058, 32
      %v2150 = vpop.permute.xlu0 %2149
      %v2152 = vmul.f32 %v2148, %v2150
      %2154 = vrot.lane.b32.xlu0 %v2152, 96
      %v2155 = vpop.permute.xlu0 %2154
      %v2156 = vsel %vm474, %v2155, 0
      %2158 = vmatprep.subr.mxu0 0.0
      %2159 = vmatpush1.msra.mxu0 %v463
      %2160 = vmatprep.subr.mxu0 0.0
      %2161 = vmatpush1.msra.mxu0 %v464
      %2162 = vmatprep.subr.mxu0 0.0
      %2163 = vmatpush1.msra.mxu0 %v465
      %2164 = vmatprep.subr.mxu0 0.0
      %2165 = vmatpush1.msra.mxu0 %v466
      %2166 = vmatprep.subr.mxu0 0.0
      %2167 = vmatpush1.msra.mxu0 0.0
      %2168 = vmatprep.subr.mxu0 0.0
      %2169 = vmatpush1.msra.mxu0 0.0
      %2170 = vmatprep.subr.mxu0 0.0
      %2171 = vmatpush1.msra.mxu0 0.0
      %2172 = vmatprep.subr.mxu0 0.0
      %2173 = vmatpush1.msra.mxu0 0.0
      %2174 = vmatprep.subr.mxu0 0.0
      %2175 = vmatpush1.msra.mxu0 0.0
      %2176 = vmatprep.subr.mxu0 0.0
      %2177 = vmatpush1.msra.mxu0 0.0
      %2178 = vmatprep.subr.mxu0 0.0
      %2179 = vmatpush1.msra.mxu0 0.0
      %2180 = vmatprep.subr.mxu0 0.0
      %2181 = vmatpush1.msra.mxu0 0.0
      %2182 = vmatprep.subr.mxu0 0.0
      %2183 = vmatpush1.msra.mxu0 0.0
      %2184 = vmatprep.subr.mxu0 0.0
      %2185 = vmatpush1.msra.mxu0 0.0
      %2186 = vmatprep.subr.mxu0 0.0
      %2187 = vmatpush1.msra.mxu0 0.0
      %2188 = vmatprep.subr.mxu0 0.0
      %2189 = vmatpush1.msra.mxu0 0.0
      %2190 = vmatprep.subr.mxu0 0.0
      %2191 = vmatpush1.msra.mxu0 0.0
      %2192 = vmatprep.subr.mxu0 0.0
      %2193 = vmatpush1.msra.mxu0 0.0
      %2194 = vmatprep.subr.mxu0 0.0
      %2195 = vmatpush1.msra.mxu0 0.0
      %2196 = vmatprep.subr.mxu0 0.0
      %2197 = vmatpush1.msra.mxu0 0.0
      %2198 = vmatprep.subr.mxu0 0.0
      %2199 = vmatpush1.msra.mxu0 0.0
      %2200 = vmatprep.subr.mxu0 0.0
      %2201 = vmatpush1.msra.mxu0 0.0
      %2202 = vmatprep.subr.mxu0 0.0
      %2203 = vmatpush1.msra.mxu0 0.0
      %2204 = vmatprep.subr.mxu0 0.0
      %2205 = vmatpush1.msra.mxu0 0.0
      %2206 = vmatprep.subr.mxu0 0.0
      %2207 = vmatpush1.msra.mxu0 0.0
      %2208 = vmatprep.subr.mxu0 0.0
      %2209 = vmatpush1.msra.mxu0 0.0
      %2210 = vmatprep.subr.mxu0 0.0
      %2211 = vmatpush1.msra.mxu0 0.0
      %2212 = vmatprep.subr.mxu0 0.0
      %2213 = vmatpush1.msra.mxu0 0.0
      %2214 = vmatprep.subr.mxu0 0.0
      %2215 = vmatpush1.msra.mxu0 0.0
      %2216 = vmatprep.subr.mxu0 0.0
      %2217 = vmatpush1.msra.mxu0 0.0
      %2218 = vmatprep.subr.mxu0 0.0
      %2219 = vmatpush1.msra.mxu0 0.0
      %2220 = vmatprep.subr.mxu0 0.0
      %2221 = vmatpush1.msra.mxu0 0.0
      %2222 = vmatprep.mubr.f32.mxu0 0.0
      %2223 = vmatmul.mubr.f32.gmra.mrb[0].mxu0 %v2156
      %v2224 = vpop.f32.mrb[0].mxu0
      %v2225 = vadd.f32 0.0, %v2224
      %v2226 = vpop.f32.mrb[0].mxu0
      %2227 = vdwg.mxu0
      %v2228 = vadd.f32 %v2068, %v2225
      %v2229 = vtanh.pop %v2228
      %v2230 = vmul.f32 %v2148, %v2058
      %v2231 = vsub.f32 1.0, %v2148
      %v2232 = vmul.f32 %v2231, %v2229
      %v2233 = vadd.f32 %v2230, %v2232
      %v2234 = vmax.f32 %v2233, -5.0
      %v2235 = vmin.f32 %v2234, 5.0
      %s2236 = scalar_lea.vmem %s445, %s2064
      %2237 = vst.msk [vmem:[%s2236] sm:$0xf] %vm643, %v2235
      %s2238 = smul.u32 %s645, 10
      %s2239 = smul.u32 %s20, 5
      %s2240 = sadd.s32 %s2238, %s2239
      %s2241 = smul.u32 %s2240, 4
      %s2242 = scalar_lea.vmem %s391, %s2241
      %v2243 = vld [vmem:[%s2242] sm:$0xf]
      %s2244 = scalar_lea.vmem %s411, %s2241
      %v2245 = vld [vmem:[%s2244] sm:$0xf]
      %v2247 = vsel %vm474, %v2235, 0
      %2249 = vmatprep.subr.mxu0 0.0
      %2250 = vmatpush1.msra.mxu0 %v459
      %2251 = vmatprep.subr.mxu0 0.0
      %2252 = vmatpush1.msra.mxu0 %v460
      %2253 = vmatprep.subr.mxu0 0.0
      %2254 = vmatpush1.msra.mxu0 %v461
      %2255 = vmatprep.subr.mxu0 0.0
      %2256 = vmatpush1.msra.mxu0 %v462
      %2257 = vmatprep.subr.mxu0 0.0
      %2258 = vmatpush1.msra.mxu0 0.0
      %2259 = vmatprep.subr.mxu0 0.0
      %2260 = vmatpush1.msra.mxu0 0.0
      %2261 = vmatprep.subr.mxu0 0.0
      %2262 = vmatpush1.msra.mxu0 0.0
      %2263 = vmatprep.subr.mxu0 0.0
      %2264 = vmatpush1.msra.mxu0 0.0
      %2265 = vmatprep.subr.mxu0 0.0
      %2266 = vmatpush1.msra.mxu0 0.0
      %2267 = vmatprep.subr.mxu0 0.0
      %2268 = vmatpush1.msra.mxu0 0.0
      %2269 = vmatprep.subr.mxu0 0.0
      %2270 = vmatpush1.msra.mxu0 0.0
      %2271 = vmatprep.subr.mxu0 0.0
      %2272 = vmatpush1.msra.mxu0 0.0
      %2273 = vmatprep.subr.mxu0 0.0
      %2274 = vmatpush1.msra.mxu0 0.0
      %2275 = vmatprep.subr.mxu0 0.0
      %2276 = vmatpush1.msra.mxu0 0.0
      %2277 = vmatprep.subr.mxu0 0.0
      %2278 = vmatpush1.msra.mxu0 0.0
      %2279 = vmatprep.subr.mxu0 0.0
      %2280 = vmatpush1.msra.mxu0 0.0
      %2281 = vmatprep.subr.mxu0 0.0
      %2282 = vmatpush1.msra.mxu0 0.0
      %2283 = vmatprep.subr.mxu0 0.0
      %2284 = vmatpush1.msra.mxu0 0.0
      %2285 = vmatprep.subr.mxu0 0.0
      %2286 = vmatpush1.msra.mxu0 0.0
      %2287 = vmatprep.subr.mxu0 0.0
      %2288 = vmatpush1.msra.mxu0 0.0
      %2289 = vmatprep.subr.mxu0 0.0
      %2290 = vmatpush1.msra.mxu0 0.0
      %2291 = vmatprep.subr.mxu0 0.0
      %2292 = vmatpush1.msra.mxu0 0.0
      %2293 = vmatprep.subr.mxu0 0.0
      %2294 = vmatpush1.msra.mxu0 0.0
      %2295 = vmatprep.subr.mxu0 0.0
      %2296 = vmatpush1.msra.mxu0 0.0
      %2297 = vmatprep.subr.mxu0 0.0
      %2298 = vmatpush1.msra.mxu0 0.0
      %2299 = vmatprep.subr.mxu0 0.0
      %2300 = vmatpush1.msra.mxu0 0.0
      %2301 = vmatprep.subr.mxu0 0.0
      %2302 = vmatpush1.msra.mxu0 0.0
      %2303 = vmatprep.subr.mxu0 0.0
      %2304 = vmatpush1.msra.mxu0 0.0
      %2305 = vmatprep.subr.mxu0 0.0
      %2306 = vmatpush1.msra.mxu0 0.0
      %2307 = vmatprep.subr.mxu0 0.0
      %2308 = vmatpush1.msra.mxu0 0.0
      %2309 = vmatprep.subr.mxu0 0.0
      %2310 = vmatpush1.msra.mxu0 0.0
      %2311 = vmatprep.subr.mxu0 0.0
      %2312 = vmatpush1.msra.mxu0 0.0
      %2313 = vmatprep.mubr.f32.mxu0 0.0
      %2314 = vmatmul.mubr.f32.gmra.mrb[0].mxu0 %v2247
      %v2315 = vpop.f32.mrb[0].mxu0
      %v2316 = vadd.f32 0.0, %v2315
      %v2317 = vpop.f32.mrb[0].mxu0
      %2318 = vdwg.mxu0
      %v2319 = vadd.f32 %v2243, %v2316
      %v2320 = vxor.u32 %v2319, 2147483648
      %v2321 = vmul.f32 %v2320, 1.442695
      %v2322 = vpow.pop %v2321
      %v2323 = vadd.f32 %v2322, 1.0
      %v2324 = vrcp.pop %v2323
      %v2325 = vmul.f32 1.0, %v2324
      %2326 = vrot.lane.b32.xlu0 %v2235, 32
      %v2327 = vpop.permute.xlu0 %2326
      %v2329 = vmul.f32 %v2325, %v2327
      %2331 = vrot.lane.b32.xlu0 %v2329, 96
      %v2332 = vpop.permute.xlu0 %2331
      %v2333 = vsel %vm474, %v2332, 0
      %2335 = vmatprep.subr.mxu0 0.0
      %2336 = vmatpush1.msra.mxu0 %v463
      %2337 = vmatprep.subr.mxu0 0.0
      %2338 = vmatpush1.msra.mxu0 %v464
      %2339 = vmatprep.subr.mxu0 0.0
      %2340 = vmatpush1.msra.mxu0 %v465
      %2341 = vmatprep.subr.mxu0 0.0
      %2342 = vmatpush1.msra.mxu0 %v466
      %2343 = vmatprep.subr.mxu0 0.0
      %2344 = vmatpush1.msra.mxu0 0.0
      %2345 = vmatprep.subr.mxu0 0.0
      %2346 = vmatpush1.msra.mxu0 0.0
      %2347 = vmatprep.subr.mxu0 0.0
      %2348 = vmatpush1.msra.mxu0 0.0
      %2349 = vmatprep.subr.mxu0 0.0
      %2350 = vmatpush1.msra.mxu0 0.0
      %2351 = vmatprep.subr.mxu0 0.0
      %2352 = vmatpush1.msra.mxu0 0.0
      %2353 = vmatprep.subr.mxu0 0.0
      %2354 = vmatpush1.msra.mxu0 0.0
      %2355 = vmatprep.subr.mxu0 0.0
      %2356 = vmatpush1.msra.mxu0 0.0
      %2357 = vmatprep.subr.mxu0 0.0
      %2358 = vmatpush1.msra.mxu0 0.0
      %2359 = vmatprep.subr.mxu0 0.0
      %2360 = vmatpush1.msra.mxu0 0.0
      %2361 = vmatprep.subr.mxu0 0.0
      %2362 = vmatpush1.msra.mxu0 0.0
      %2363 = vmatprep.subr.mxu0 0.0
      %2364 = vmatpush1.msra.mxu0 0.0
      %2365 = vmatprep.subr.mxu0 0.0
      %2366 = vmatpush1.msra.mxu0 0.0
      %2367 = vmatprep.subr.mxu0 0.0
      %2368 = vmatpush1.msra.mxu0 0.0
      %2369 = vmatprep.subr.mxu0 0.0
      %2370 = vmatpush1.msra.mxu0 0.0
      %2371 = vmatprep.subr.mxu0 0.0
      %2372 = vmatpush1.msra.mxu0 0.0
      %2373 = vmatprep.subr.mxu0 0.0
      %2374 = vmatpush1.msra.mxu0 0.0
      %2375 = vmatprep.subr.mxu0 0.0
      %2376 = vmatpush1.msra.mxu0 0.0
      %2377 = vmatprep.subr.mxu0 0.0
      %2378 = vmatpush1.msra.mxu0 0.0
      %2379 = vmatprep.subr.mxu0 0.0
      %2380 = vmatpush1.msra.mxu0 0.0
      %2381 = vmatprep.subr.mxu0 0.0
      %2382 = vmatpush1.msra.mxu0 0.0
      %2383 = vmatprep.subr.mxu0 0.0
      %2384 = vmatpush1.msra.mxu0 0.0
      %2385 = vmatprep.subr.mxu0 0.0
      %2386 = vmatpush1.msra.mxu0 0.0
      %2387 = vmatprep.subr.mxu0 0.0
      %2388 = vmatpush1.msra.mxu0 0.0
      %2389 = vmatprep.subr.mxu0 0.0
      %2390 = vmatpush1.msra.mxu0 0.0
      %2391 = vmatprep.subr.mxu0 0.0
      %2392 = vmatpush1.msra.mxu0 0.0
      %2393 = vmatprep.subr.mxu0 0.0
      %2394 = vmatpush1.msra.mxu0 0.0
      %2395 = vmatprep.subr.mxu0 0.0
      %2396 = vmatpush1.msra.mxu0 0.0
      %2397 = vmatprep.subr.mxu0 0.0
      %2398 = vmatpush1.msra.mxu0 0.0
      %2399 = vmatprep.mubr.f32.mxu0 0.0
      %2400 = vmatmul.mubr.f32.gmra.mrb[0].mxu0 %v2333
      %v2401 = vpop.f32.mrb[0].mxu0
      %v2402 = vadd.f32 0.0, %v2401
      %v2403 = vpop.f32.mrb[0].mxu0
      %2404 = vdwg.mxu0
      %v2405 = vadd.f32 %v2245, %v2402
      %v2406 = vtanh.pop %v2405
      %v2407 = vmul.f32 %v2325, %v2235
      %v2408 = vsub.f32 1.0, %v2325
      %v2409 = vmul.f32 %v2408, %v2406
      %v2410 = vadd.f32 %v2407, %v2409
      %v2411 = vmax.f32 %v2410, -5.0
      %v2412 = vmin.f32 %v2411, 5.0
      %s2413 = scalar_lea.vmem %s445, %s2241
      %2414 = vst.msk [vmem:[%s2413] sm:$0xf] %vm643, %v2412
      %s2415 = smul.u32 %s645, 11
      %s2416 = smul.u32 %s20, 4
      %s2417 = sadd.s32 %s2415, %s2416
      %s2418 = smul.u32 %s2417, 4
      %s2419 = scalar_lea.vmem %s391, %s2418
      %v2420 = vld [vmem:[%s2419] sm:$0xf]
      %s2421 = scalar_lea.vmem %s411, %s2418
      %v2422 = vld [vmem:[%s2421] sm:$0xf]
      %v2424 = vsel %vm474, %v2412, 0
      %2426 = vmatprep.subr.mxu0 0.0
      %2427 = vmatpush1.msra.mxu0 %v459
      %2428 = vmatprep.subr.mxu0 0.0
      %2429 = vmatpush1.msra.mxu0 %v460
      %2430 = vmatprep.subr.mxu0 0.0
      %2431 = vmatpush1.msra.mxu0 %v461
      %2432 = vmatprep.subr.mxu0 0.0
      %2433 = vmatpush1.msra.mxu0 %v462
      %2434 = vmatprep.subr.mxu0 0.0
      %2435 = vmatpush1.msra.mxu0 0.0
      %2436 = vmatprep.subr.mxu0 0.0
      %2437 = vmatpush1.msra.mxu0 0.0
      %2438 = vmatprep.subr.mxu0 0.0
      %2439 = vmatpush1.msra.mxu0 0.0
      %2440 = vmatprep.subr.mxu0 0.0
      %2441 = vmatpush1.msra.mxu0 0.0
      %2442 = vmatprep.subr.mxu0 0.0
      %2443 = vmatpush1.msra.mxu0 0.0
      %2444 = vmatprep.subr.mxu0 0.0
      %2445 = vmatpush1.msra.mxu0 0.0
      %2446 = vmatprep.subr.mxu0 0.0
      %2447 = vmatpush1.msra.mxu0 0.0
      %2448 = vmatprep.subr.mxu0 0.0
      %2449 = vmatpush1.msra.mxu0 0.0
      %2450 = vmatprep.subr.mxu0 0.0
      %2451 = vmatpush1.msra.mxu0 0.0
      %2452 = vmatprep.subr.mxu0 0.0
      %2453 = vmatpush1.msra.mxu0 0.0
      %2454 = vmatprep.subr.mxu0 0.0
      %2455 = vmatpush1.msra.mxu0 0.0
      %2456 = vmatprep.subr.mxu0 0.0
      %2457 = vmatpush1.msra.mxu0 0.0
      %2458 = vmatprep.subr.mxu0 0.0
      %2459 = vmatpush1.msra.mxu0 0.0
      %2460 = vmatprep.subr.mxu0 0.0
      %2461 = vmatpush1.msra.mxu0 0.0
      %2462 = vmatprep.subr.mxu0 0.0
      %2463 = vmatpush1.msra.mxu0 0.0
      %2464 = vmatprep.subr.mxu0 0.0
      %2465 = vmatpush1.msra.mxu0 0.0
      %2466 = vmatprep.subr.mxu0 0.0
      %2467 = vmatpush1.msra.mxu0 0.0
      %2468 = vmatprep.subr.mxu0 0.0
      %2469 = vmatpush1.msra.mxu0 0.0
      %2470 = vmatprep.subr.mxu0 0.0
      %2471 = vmatpush1.msra.mxu0 0.0
      %2472 = vmatprep.subr.mxu0 0.0
      %2473 = vmatpush1.msra.mxu0 0.0
      %2474 = vmatprep.subr.mxu0 0.0
      %2475 = vmatpush1.msra.mxu0 0.0
      %2476 = vmatprep.subr.mxu0 0.0
      %2477 = vmatpush1.msra.mxu0 0.0
      %2478 = vmatprep.subr.mxu0 0.0
      %2479 = vmatpush1.msra.mxu0 0.0
      %2480 = vmatprep.subr.mxu0 0.0
      %2481 = vmatpush1.msra.mxu0 0.0
      %2482 = vmatprep.subr.mxu0 0.0
      %2483 = vmatpush1.msra.mxu0 0.0
      %2484 = vmatprep.subr.mxu0 0.0
      %2485 = vmatpush1.msra.mxu0 0.0
      %2486 = vmatprep.subr.mxu0 0.0
      %2487 = vmatpush1.msra.mxu0 0.0
      %2488 = vmatprep.subr.mxu0 0.0
      %2489 = vmatpush1.msra.mxu0 0.0
      %2490 = vmatprep.mubr.f32.mxu0 0.0
      %2491 = vmatmul.mubr.f32.gmra.mrb[0].mxu0 %v2424
      %v2492 = vpop.f32.mrb[0].mxu0
      %v2493 = vadd.f32 0.0, %v2492
      %v2494 = vpop.f32.mrb[0].mxu0
      %2495 = vdwg.mxu0
      %v2496 = vadd.f32 %v2420, %v2493
      %v2497 = vxor.u32 %v2496, 2147483648
      %v2498 = vmul.f32 %v2497, 1.442695
      %v2499 = vpow.pop %v2498
      %v2500 = vadd.f32 %v2499, 1.0
      %v2501 = vrcp.pop %v2500
      %v2502 = vmul.f32 1.0, %v2501
      %2503 = vrot.lane.b32.xlu0 %v2412, 32
      %v2504 = vpop.permute.xlu0 %2503
      %v2506 = vmul.f32 %v2502, %v2504
      %2508 = vrot.lane.b32.xlu0 %v2506, 96
      %v2509 = vpop.permute.xlu0 %2508
      %v2510 = vsel %vm474, %v2509, 0
      %2512 = vmatprep.subr.mxu0 0.0
      %2513 = vmatpush1.msra.mxu0 %v463
      %2514 = vmatprep.subr.mxu0 0.0
      %2515 = vmatpush1.msra.mxu0 %v464
      %2516 = vmatprep.subr.mxu0 0.0
      %2517 = vmatpush1.msra.mxu0 %v465
      %2518 = vmatprep.subr.mxu0 0.0
      %2519 = vmatpush1.msra.mxu0 %v466
      %2520 = vmatprep.subr.mxu0 0.0
      %2521 = vmatpush1.msra.mxu0 0.0
      %2522 = vmatprep.subr.mxu0 0.0
      %2523 = vmatpush1.msra.mxu0 0.0
      %2524 = vmatprep.subr.mxu0 0.0
      %2525 = vmatpush1.msra.mxu0 0.0
      %2526 = vmatprep.subr.mxu0 0.0
      %2527 = vmatpush1.msra.mxu0 0.0
      %2528 = vmatprep.subr.mxu0 0.0
      %2529 = vmatpush1.msra.mxu0 0.0
      %2530 = vmatprep.subr.mxu0 0.0
      %2531 = vmatpush1.msra.mxu0 0.0
      %2532 = vmatprep.subr.mxu0 0.0
      %2533 = vmatpush1.msra.mxu0 0.0
      %2534 = vmatprep.subr.mxu0 0.0
      %2535 = vmatpush1.msra.mxu0 0.0
      %2536 = vmatprep.subr.mxu0 0.0
      %2537 = vmatpush1.msra.mxu0 0.0
      %2538 = vmatprep.subr.mxu0 0.0
      %2539 = vmatpush1.msra.mxu0 0.0
      %2540 = vmatprep.subr.mxu0 0.0
      %2541 = vmatpush1.msra.mxu0 0.0
      %2542 = vmatprep.subr.mxu0 0.0
      %2543 = vmatpush1.msra.mxu0 0.0
      %2544 = vmatprep.subr.mxu0 0.0
      %2545 = vmatpush1.msra.mxu0 0.0
      %2546 = vmatprep.subr.mxu0 0.0
      %2547 = vmatpush1.msra.mxu0 0.0
      %2548 = vmatprep.subr.mxu0 0.0
      %2549 = vmatpush1.msra.mxu0 0.0
      %2550 = vmatprep.subr.mxu0 0.0
      %2551 = vmatpush1.msra.mxu0 0.0
      %2552 = vmatprep.subr.mxu0 0.0
      %2553 = vmatpush1.msra.mxu0 0.0
      %2554 = vmatprep.subr.mxu0 0.0
      %2555 = vmatpush1.msra.mxu0 0.0
      %2556 = vmatprep.subr.mxu0 0.0
      %2557 = vmatpush1.msra.mxu0 0.0
      %2558 = vmatprep.subr.mxu0 0.0
      %2559 = vmatpush1.msra.mxu0 0.0
      %2560 = vmatprep.subr.mxu0 0.0
      %2561 = vmatpush1.msra.mxu0 0.0
      %2562 = vmatprep.subr.mxu0 0.0
      %2563 = vmatpush1.msra.mxu0 0.0
      %2564 = vmatprep.subr.mxu0 0.0
      %2565 = vmatpush1.msra.mxu0 0.0
      %2566 = vmatprep.subr.mxu0 0.0
      %2567 = vmatpush1.msra.mxu0 0.0
      %2568 = vmatprep.subr.mxu0 0.0
      %2569 = vmatpush1.msra.mxu0 0.0
      %2570 = vmatprep.subr.mxu0 0.0
      %2571 = vmatpush1.msra.mxu0 0.0
      %2572 = vmatprep.subr.mxu0 0.0
      %2573 = vmatpush1.msra.mxu0 0.0
      %2574 = vmatprep.subr.mxu0 0.0
      %2575 = vmatpush1.msra.mxu0 0.0
      %2576 = vmatprep.mubr.f32.mxu0 0.0
      %2577 = vmatmul.mubr.f32.gmra.mrb[0].mxu0 %v2510
      %v2578 = vpop.f32.mrb[0].mxu0
      %v2579 = vadd.f32 0.0, %v2578
      %v2580 = vpop.f32.mrb[0].mxu0
      %2581 = vdwg.mxu0
      %v2582 = vadd.f32 %v2422, %v2579
      %v2583 = vtanh.pop %v2582
      %v2584 = vmul.f32 %v2502, %v2412
      %v2585 = vsub.f32 1.0, %v2502
      %v2586 = vmul.f32 %v2585, %v2583
      %v2587 = vadd.f32 %v2584, %v2586
      %v2588 = vmax.f32 %v2587, -5.0
      %v2589 = vmin.f32 %v2588, 5.0
      %s2590 = scalar_lea.vmem %s445, %s2418
      %2591 = vst.msk [vmem:[%s2590] sm:$0xf] %vm643, %v2589
      %s2592 = smul.u32 %s645, 12
      %s2593 = smul.u32 %s20, 3
      %s2594 = sadd.s32 %s2592, %s2593
      %s2595 = smul.u32 %s2594, 4
      %s2596 = scalar_lea.vmem %s391, %s2595
      %v2597 = vld [vmem:[%s2596] sm:$0xf]
      %s2598 = scalar_lea.vmem %s411, %s2595
      %v2599 = vld [vmem:[%s2598] sm:$0xf]
      %v2601 = vsel %vm474, %v2589, 0
      %2603 = vmatprep.subr.mxu0 0.0
      %2604 = vmatpush1.msra.mxu0 %v459
      %2605 = vmatprep.subr.mxu0 0.0
      %2606 = vmatpush1.msra.mxu0 %v460
      %2607 = vmatprep.subr.mxu0 0.0
      %2608 = vmatpush1.msra.mxu0 %v461
      %2609 = vmatprep.subr.mxu0 0.0
      %2610 = vmatpush1.msra.mxu0 %v462
      %2611 = vmatprep.subr.mxu0 0.0
      %2612 = vmatpush1.msra.mxu0 0.0
      %2613 = vmatprep.subr.mxu0 0.0
      %2614 = vmatpush1.msra.mxu0 0.0
      %2615 = vmatprep.subr.mxu0 0.0
      %2616 = vmatpush1.msra.mxu0 0.0
      %2617 = vmatprep.subr.mxu0 0.0
      %2618 = vmatpush1.msra.mxu0 0.0
      %2619 = vmatprep.subr.mxu0 0.0
      %2620 = vmatpush1.msra.mxu0 0.0
      %2621 = vmatprep.subr.mxu0 0.0
      %2622 = vmatpush1.msra.mxu0 0.0
      %2623 = vmatprep.subr.mxu0 0.0
      %2624 = vmatpush1.msra.mxu0 0.0
      %2625 = vmatprep.subr.mxu0 0.0
      %2626 = vmatpush1.msra.mxu0 0.0
      %2627 = vmatprep.subr.mxu0 0.0
      %2628 = vmatpush1.msra.mxu0 0.0
      %2629 = vmatprep.subr.mxu0 0.0
      %2630 = vmatpush1.msra.mxu0 0.0
      %2631 = vmatprep.subr.mxu0 0.0
      %2632 = vmatpush1.msra.mxu0 0.0
      %2633 = vmatprep.subr.mxu0 0.0
      %2634 = vmatpush1.msra.mxu0 0.0
      %2635 = vmatprep.subr.mxu0 0.0
      %2636 = vmatpush1.msra.mxu0 0.0
      %2637 = vmatprep.subr.mxu0 0.0
      %2638 = vmatpush1.msra.mxu0 0.0
      %2639 = vmatprep.subr.mxu0 0.0
      %2640 = vmatpush1.msra.mxu0 0.0
      %2641 = vmatprep.subr.mxu0 0.0
      %2642 = vmatpush1.msra.mxu0 0.0
      %2643 = vmatprep.subr.mxu0 0.0
      %2644 = vmatpush1.msra.mxu0 0.0
      %2645 = vmatprep.subr.mxu0 0.0
      %2646 = vmatpush1.msra.mxu0 0.0
      %2647 = vmatprep.subr.mxu0 0.0
      %2648 = vmatpush1.msra.mxu0 0.0
      %2649 = vmatprep.subr.mxu0 0.0
      %2650 = vmatpush1.msra.mxu0 0.0
      %2651 = vmatprep.subr.mxu0 0.0
      %2652 = vmatpush1.msra.mxu0 0.0
      %2653 = vmatprep.subr.mxu0 0.0
      %2654 = vmatpush1.msra.mxu0 0.0
      %2655 = vmatprep.subr.mxu0 0.0
      %2656 = vmatpush1.msra.mxu0 0.0
      %2657 = vmatprep.subr.mxu0 0.0
      %2658 = vmatpush1.msra.mxu0 0.0
      %2659 = vmatprep.subr.mxu0 0.0
      %2660 = vmatpush1.msra.mxu0 0.0
      %2661 = vmatprep.subr.mxu0 0.0
      %2662 = vmatpush1.msra.mxu0 0.0
      %2663 = vmatprep.subr.mxu0 0.0
      %2664 = vmatpush1.msra.mxu0 0.0
      %2665 = vmatprep.subr.mxu0 0.0
      %2666 = vmatpush1.msra.mxu0 0.0
      %2667 = vmatprep.mubr.f32.mxu0 0.0
      %2668 = vmatmul.mubr.f32.gmra.mrb[0].mxu0 %v2601
      %v2669 = vpop.f32.mrb[0].mxu0
      %v2670 = vadd.f32 0.0, %v2669
      %v2671 = vpop.f32.mrb[0].mxu0
      %2672 = vdwg.mxu0
      %v2673 = vadd.f32 %v2597, %v2670
      %v2674 = vxor.u32 %v2673, 2147483648
      %v2675 = vmul.f32 %v2674, 1.442695
      %v2676 = vpow.pop %v2675
      %v2677 = vadd.f32 %v2676, 1.0
      %v2678 = vrcp.pop %v2677
      %v2679 = vmul.f32 1.0, %v2678
      %2680 = vrot.lane.b32.xlu0 %v2589, 32
      %v2681 = vpop.permute.xlu0 %2680
      %v2683 = vmul.f32 %v2679, %v2681
      %2685 = vrot.lane.b32.xlu0 %v2683, 96
      %v2686 = vpop.permute.xlu0 %2685
      %v2687 = vsel %vm474, %v2686, 0
      %2689 = vmatprep.subr.mxu0 0.0
      %2690 = vmatpush1.msra.mxu0 %v463
      %2691 = vmatprep.subr.mxu0 0.0
      %2692 = vmatpush1.msra.mxu0 %v464
      %2693 = vmatprep.subr.mxu0 0.0
      %2694 = vmatpush1.msra.mxu0 %v465
      %2695 = vmatprep.subr.mxu0 0.0
      %2696 = vmatpush1.msra.mxu0 %v466
      %2697 = vmatprep.subr.mxu0 0.0
      %2698 = vmatpush1.msra.mxu0 0.0
      %2699 = vmatprep.subr.mxu0 0.0
      %2700 = vmatpush1.msra.mxu0 0.0
      %2701 = vmatprep.subr.mxu0 0.0
      %2702 = vmatpush1.msra.mxu0 0.0
      %2703 = vmatprep.subr.mxu0 0.0
      %2704 = vmatpush1.msra.mxu0 0.0
      %2705 = vmatprep.subr.mxu0 0.0
      %2706 = vmatpush1.msra.mxu0 0.0
      %2707 = vmatprep.subr.mxu0 0.0
      %2708 = vmatpush1.msra.mxu0 0.0
      %2709 = vmatprep.subr.mxu0 0.0
      %2710 = vmatpush1.msra.mxu0 0.0
      %2711 = vmatprep.subr.mxu0 0.0
      %2712 = vmatpush1.msra.mxu0 0.0
      %2713 = vmatprep.subr.mxu0 0.0
      %2714 = vmatpush1.msra.mxu0 0.0
      %2715 = vmatprep.subr.mxu0 0.0
      %2716 = vmatpush1.msra.mxu0 0.0
      %2717 = vmatprep.subr.mxu0 0.0
      %2718 = vmatpush1.msra.mxu0 0.0
      %2719 = vmatprep.subr.mxu0 0.0
      %2720 = vmatpush1.msra.mxu0 0.0
      %2721 = vmatprep.subr.mxu0 0.0
      %2722 = vmatpush1.msra.mxu0 0.0
      %2723 = vmatprep.subr.mxu0 0.0
      %2724 = vmatpush1.msra.mxu0 0.0
      %2725 = vmatprep.subr.mxu0 0.0
      %2726 = vmatpush1.msra.mxu0 0.0
      %2727 = vmatprep.subr.mxu0 0.0
      %2728 = vmatpush1.msra.mxu0 0.0
      %2729 = vmatprep.subr.mxu0 0.0
      %2730 = vmatpush1.msra.mxu0 0.0
      %2731 = vmatprep.subr.mxu0 0.0
      %2732 = vmatpush1.msra.mxu0 0.0
      %2733 = vmatprep.subr.mxu0 0.0
      %2734 = vmatpush1.msra.mxu0 0.0
      %2735 = vmatprep.subr.mxu0 0.0
      %2736 = vmatpush1.msra.mxu0 0.0
      %2737 = vmatprep.subr.mxu0 0.0
      %2738 = vmatpush1.msra.mxu0 0.0
      %2739 = vmatprep.subr.mxu0 0.0
      %2740 = vmatpush1.msra.mxu0 0.0
      %2741 = vmatprep.subr.mxu0 0.0
      %2742 = vmatpush1.msra.mxu0 0.0
      %2743 = vmatprep.subr.mxu0 0.0
      %2744 = vmatpush1.msra.mxu0 0.0
      %2745 = vmatprep.subr.mxu0 0.0
      %2746 = vmatpush1.msra.mxu0 0.0
      %2747 = vmatprep.subr.mxu0 0.0
      %2748 = vmatpush1.msra.mxu0 0.0
      %2749 = vmatprep.subr.mxu0 0.0
      %2750 = vmatpush1.msra.mxu0 0.0
      %2751 = vmatprep.subr.mxu0 0.0
      %2752 = vmatpush1.msra.mxu0 0.0
      %2753 = vmatprep.mubr.f32.mxu0 0.0
      %2754 = vmatmul.mubr.f32.gmra.mrb[0].mxu0 %v2687
      %v2755 = vpop.f32.mrb[0].mxu0
      %v2756 = vadd.f32 0.0, %v2755
      %v2757 = vpop.f32.mrb[0].mxu0
      %2758 = vdwg.mxu0
      %v2759 = vadd.f32 %v2599, %v2756
      %v2760 = vtanh.pop %v2759
      %v2761 = vmul.f32 %v2679, %v2589
      %v2762 = vsub.f32 1.0, %v2679
      %v2763 = vmul.f32 %v2762, %v2760
      %v2764 = vadd.f32 %v2761, %v2763
      %v2765 = vmax.f32 %v2764, -5.0
      %v2766 = vmin.f32 %v2765, 5.0
      %s2767 = scalar_lea.vmem %s445, %s2595
      %2768 = vst.msk [vmem:[%s2767] sm:$0xf] %vm643, %v2766
      %s2769 = smul.u32 %s645, 13
      %s2770 = smul.u32 %s20, 2
      %s2771 = sadd.s32 %s2769, %s2770
      %s2772 = smul.u32 %s2771, 4
      %s2773 = scalar_lea.vmem %s391, %s2772
      %v2774 = vld [vmem:[%s2773] sm:$0xf]
      %s2775 = scalar_lea.vmem %s411, %s2772
      %v2776 = vld [vmem:[%s2775] sm:$0xf]
      %v2778 = vsel %vm474, %v2766, 0
      %2780 = vmatprep.subr.mxu0 0.0
      %2781 = vmatpush1.msra.mxu0 %v459
      %2782 = vmatprep.subr.mxu0 0.0
      %2783 = vmatpush1.msra.mxu0 %v460
      %2784 = vmatprep.subr.mxu0 0.0
      %2785 = vmatpush1.msra.mxu0 %v461
      %2786 = vmatprep.subr.mxu0 0.0
      %2787 = vmatpush1.msra.mxu0 %v462
      %2788 = vmatprep.subr.mxu0 0.0
      %2789 = vmatpush1.msra.mxu0 0.0
      %2790 = vmatprep.subr.mxu0 0.0
      %2791 = vmatpush1.msra.mxu0 0.0
      %2792 = vmatprep.subr.mxu0 0.0
      %2793 = vmatpush1.msra.mxu0 0.0
      %2794 = vmatprep.subr.mxu0 0.0
      %2795 = vmatpush1.msra.mxu0 0.0
      %2796 = vmatprep.subr.mxu0 0.0
      %2797 = vmatpush1.msra.mxu0 0.0
      %2798 = vmatprep.subr.mxu0 0.0
      %2799 = vmatpush1.msra.mxu0 0.0
      %2800 = vmatprep.subr.mxu0 0.0
      %2801 = vmatpush1.msra.mxu0 0.0
      %2802 = vmatprep.subr.mxu0 0.0
      %2803 = vmatpush1.msra.mxu0 0.0
      %2804 = vmatprep.subr.mxu0 0.0
      %2805 = vmatpush1.msra.mxu0 0.0
      %2806 = vmatprep.subr.mxu0 0.0
      %2807 = vmatpush1.msra.mxu0 0.0
      %2808 = vmatprep.subr.mxu0 0.0
      %2809 = vmatpush1.msra.mxu0 0.0
      %2810 = vmatprep.subr.mxu0 0.0
      %2811 = vmatpush1.msra.mxu0 0.0
      %2812 = vmatprep.subr.mxu0 0.0
      %2813 = vmatpush1.msra.mxu0 0.0
      %2814 = vmatprep.subr.mxu0 0.0
      %2815 = vmatpush1.msra.mxu0 0.0
      %2816 = vmatprep.subr.mxu0 0.0
      %2817 = vmatpush1.msra.mxu0 0.0
      %2818 = vmatprep.subr.mxu0 0.0
      %2819 = vmatpush1.msra.mxu0 0.0
      %2820 = vmatprep.subr.mxu0 0.0
      %2821 = vmatpush1.msra.mxu0 0.0
      %2822 = vmatprep.subr.mxu0 0.0
      %2823 = vmatpush1.msra.mxu0 0.0
      %2824 = vmatprep.subr.mxu0 0.0
      %2825 = vmatpush1.msra.mxu0 0.0
      %2826 = vmatprep.subr.mxu0 0.0
      %2827 = vmatpush1.msra.mxu0 0.0
      %2828 = vmatprep.subr.mxu0 0.0
      %2829 = vmatpush1.msra.mxu0 0.0
      %2830 = vmatprep.subr.mxu0 0.0
      %2831 = vmatpush1.msra.mxu0 0.0
      %2832 = vmatprep.subr.mxu0 0.0
      %2833 = vmatpush1.msra.mxu0 0.0
      %2834 = vmatprep.subr.mxu0 0.0
      %2835 = vmatpush1.msra.mxu0 0.0
      %2836 = vmatprep.subr.mxu0 0.0
      %2837 = vmatpush1.msra.mxu0 0.0
      %2838 = vmatprep.subr.mxu0 0.0
      %2839 = vmatpush1.msra.mxu0 0.0
      %2840 = vmatprep.subr.mxu0 0.0
      %2841 = vmatpush1.msra.mxu0 0.0
      %2842 = vmatprep.subr.mxu0 0.0
      %2843 = vmatpush1.msra.mxu0 0.0
      %2844 = vmatprep.mubr.f32.mxu0 0.0
      %2845 = vmatmul.mubr.f32.gmra.mrb[0].mxu0 %v2778
      %v2846 = vpop.f32.mrb[0].mxu0
      %v2847 = vadd.f32 0.0, %v2846
      %v2848 = vpop.f32.mrb[0].mxu0
      %2849 = vdwg.mxu0
      %v2850 = vadd.f32 %v2774, %v2847
      %v2851 = vxor.u32 %v2850, 2147483648
      %v2852 = vmul.f32 %v2851, 1.442695
      %v2853 = vpow.pop %v2852
      %v2854 = vadd.f32 %v2853, 1.0
      %v2855 = vrcp.pop %v2854
      %v2856 = vmul.f32 1.0, %v2855
      %2857 = vrot.lane.b32.xlu0 %v2766, 32
      %v2858 = vpop.permute.xlu0 %2857
      %v2860 = vmul.f32 %v2856, %v2858
      %2862 = vrot.lane.b32.xlu0 %v2860, 96
      %v2863 = vpop.permute.xlu0 %2862
      %v2864 = vsel %vm474, %v2863, 0
      %2866 = vmatprep.subr.mxu0 0.0
      %2867 = vmatpush1.msra.mxu0 %v463
      %2868 = vmatprep.subr.mxu0 0.0
      %2869 = vmatpush1.msra.mxu0 %v464
      %2870 = vmatprep.subr.mxu0 0.0
      %2871 = vmatpush1.msra.mxu0 %v465
      %2872 = vmatprep.subr.mxu0 0.0
      %2873 = vmatpush1.msra.mxu0 %v466
      %2874 = vmatprep.subr.mxu0 0.0
      %2875 = vmatpush1.msra.mxu0 0.0
      %2876 = vmatprep.subr.mxu0 0.0
      %2877 = vmatpush1.msra.mxu0 0.0
      %2878 = vmatprep.subr.mxu0 0.0
      %2879 = vmatpush1.msra.mxu0 0.0
      %2880 = vmatprep.subr.mxu0 0.0
      %2881 = vmatpush1.msra.mxu0 0.0
      %2882 = vmatprep.subr.mxu0 0.0
      %2883 = vmatpush1.msra.mxu0 0.0
      %2884 = vmatprep.subr.mxu0 0.0
      %2885 = vmatpush1.msra.mxu0 0.0
      %2886 = vmatprep.subr.mxu0 0.0
      %2887 = vmatpush1.msra.mxu0 0.0
      %2888 = vmatprep.subr.mxu0 0.0
      %2889 = vmatpush1.msra.mxu0 0.0
      %2890 = vmatprep.subr.mxu0 0.0
      %2891 = vmatpush1.msra.mxu0 0.0
      %2892 = vmatprep.subr.mxu0 0.0
      %2893 = vmatpush1.msra.mxu0 0.0
      %2894 = vmatprep.subr.mxu0 0.0
      %2895 = vmatpush1.msra.mxu0 0.0
      %2896 = vmatprep.subr.mxu0 0.0
      %2897 = vmatpush1.msra.mxu0 0.0
      %2898 = vmatprep.subr.mxu0 0.0
      %2899 = vmatpush1.msra.mxu0 0.0
      %2900 = vmatprep.subr.mxu0 0.0
      %2901 = vmatpush1.msra.mxu0 0.0
      %2902 = vmatprep.subr.mxu0 0.0
      %2903 = vmatpush1.msra.mxu0 0.0
      %2904 = vmatprep.subr.mxu0 0.0
      %2905 = vmatpush1.msra.mxu0 0.0
      %2906 = vmatprep.subr.mxu0 0.0
      %2907 = vmatpush1.msra.mxu0 0.0
      %2908 = vmatprep.subr.mxu0 0.0
      %2909 = vmatpush1.msra.mxu0 0.0
      %2910 = vmatprep.subr.mxu0 0.0
      %2911 = vmatpush1.msra.mxu0 0.0
      %2912 = vmatprep.subr.mxu0 0.0
      %2913 = vmatpush1.msra.mxu0 0.0
      %2914 = vmatprep.subr.mxu0 0.0
      %2915 = vmatpush1.msra.mxu0 0.0
      %2916 = vmatprep.subr.mxu0 0.0
      %2917 = vmatpush1.msra.mxu0 0.0
      %2918 = vmatprep.subr.mxu0 0.0
      %2919 = vmatpush1.msra.mxu0 0.0
      %2920 = vmatprep.subr.mxu0 0.0
      %2921 = vmatpush1.msra.mxu0 0.0
      %2922 = vmatprep.subr.mxu0 0.0
      %2923 = vmatpush1.msra.mxu0 0.0
      %2924 = vmatprep.subr.mxu0 0.0
      %2925 = vmatpush1.msra.mxu0 0.0
      %2926 = vmatprep.subr.mxu0 0.0
      %2927 = vmatpush1.msra.mxu0 0.0
      %2928 = vmatprep.subr.mxu0 0.0
      %2929 = vmatpush1.msra.mxu0 0.0
      %2930 = vmatprep.mubr.f32.mxu0 0.0
      %2931 = vmatmul.mubr.f32.gmra.mrb[0].mxu0 %v2864
      %v2932 = vpop.f32.mrb[0].mxu0
      %v2933 = vadd.f32 0.0, %v2932
      %v2934 = vpop.f32.mrb[0].mxu0
      %2935 = vdwg.mxu0
      %v2936 = vadd.f32 %v2776, %v2933
      %v2937 = vtanh.pop %v2936
      %v2938 = vmul.f32 %v2856, %v2766
      %v2939 = vsub.f32 1.0, %v2856
      %v2940 = vmul.f32 %v2939, %v2937
      %v2941 = vadd.f32 %v2938, %v2940
      %v2942 = vmax.f32 %v2941, -5.0
      %v2943 = vmin.f32 %v2942, 5.0
      %s2944 = scalar_lea.vmem %s445, %s2772
      %2945 = vst.msk [vmem:[%s2944] sm:$0xf] %vm643, %v2943
      %s2946 = smul.u32 %s645, 14
      %s2947 = sadd.s32 %s2946, %s20
      %s2948 = smul.u32 %s2947, 4
      %s2949 = scalar_lea.vmem %s391, %s2948
      %v2950 = vld [vmem:[%s2949] sm:$0xf]
      %s2951 = scalar_lea.vmem %s411, %s2948
      %v2952 = vld [vmem:[%s2951] sm:$0xf]
      %v2954 = vsel %vm474, %v2943, 0
      %2956 = vmatprep.subr.mxu0 0.0
      %2957 = vmatpush1.msra.mxu0 %v459
      %2958 = vmatprep.subr.mxu0 0.0
      %2959 = vmatpush1.msra.mxu0 %v460
      %2960 = vmatprep.subr.mxu0 0.0
      %2961 = vmatpush1.msra.mxu0 %v461
      %2962 = vmatprep.subr.mxu0 0.0
      %2963 = vmatpush1.msra.mxu0 %v462
      %2964 = vmatprep.subr.mxu0 0.0
      %2965 = vmatpush1.msra.mxu0 0.0
      %2966 = vmatprep.subr.mxu0 0.0
      %2967 = vmatpush1.msra.mxu0 0.0
      %2968 = vmatprep.subr.mxu0 0.0
      %2969 = vmatpush1.msra.mxu0 0.0
      %2970 = vmatprep.subr.mxu0 0.0
      %2971 = vmatpush1.msra.mxu0 0.0
      %2972 = vmatprep.subr.mxu0 0.0
      %2973 = vmatpush1.msra.mxu0 0.0
      %2974 = vmatprep.subr.mxu0 0.0
      %2975 = vmatpush1.msra.mxu0 0.0
      %2976 = vmatprep.subr.mxu0 0.0
      %2977 = vmatpush1.msra.mxu0 0.0
      %2978 = vmatprep.subr.mxu0 0.0
      %2979 = vmatpush1.msra.mxu0 0.0
      %2980 = vmatprep.subr.mxu0 0.0
      %2981 = vmatpush1.msra.mxu0 0.0
      %2982 = vmatprep.subr.mxu0 0.0
      %2983 = vmatpush1.msra.mxu0 0.0
      %2984 = vmatprep.subr.mxu0 0.0
      %2985 = vmatpush1.msra.mxu0 0.0
      %2986 = vmatprep.subr.mxu0 0.0
      %2987 = vmatpush1.msra.mxu0 0.0
      %2988 = vmatprep.subr.mxu0 0.0
      %2989 = vmatpush1.msra.mxu0 0.0
      %2990 = vmatprep.subr.mxu0 0.0
      %2991 = vmatpush1.msra.mxu0 0.0
      %2992 = vmatprep.subr.mxu0 0.0
      %2993 = vmatpush1.msra.mxu0 0.0
      %2994 = vmatprep.subr.mxu0 0.0
      %2995 = vmatpush1.msra.mxu0 0.0
      %2996 = vmatprep.subr.mxu0 0.0
      %2997 = vmatpush1.msra.mxu0 0.0
      %2998 = vmatprep.subr.mxu0 0.0
      %2999 = vmatpush1.msra.mxu0 0.0
      %3000 = vmatprep.subr.mxu0 0.0
      %3001 = vmatpush1.msra.mxu0 0.0
      %3002 = vmatprep.subr.mxu0 0.0
      %3003 = vmatpush1.msra.mxu0 0.0
      %3004 = vmatprep.subr.mxu0 0.0
      %3005 = vmatpush1.msra.mxu0 0.0
      %3006 = vmatprep.subr.mxu0 0.0
      %3007 = vmatpush1.msra.mxu0 0.0
      %3008 = vmatprep.subr.mxu0 0.0
      %3009 = vmatpush1.msra.mxu0 0.0
      %3010 = vmatprep.subr.mxu0 0.0
      %3011 = vmatpush1.msra.mxu0 0.0
      %3012 = vmatprep.subr.mxu0 0.0
      %3013 = vmatpush1.msra.mxu0 0.0
      %3014 = vmatprep.subr.mxu0 0.0
      %3015 = vmatpush1.msra.mxu0 0.0
      %3016 = vmatprep.subr.mxu0 0.0
      %3017 = vmatpush1.msra.mxu0 0.0
      %3018 = vmatprep.subr.mxu0 0.0
      %3019 = vmatpush1.msra.mxu0 0.0
      %3020 = vmatprep.mubr.f32.mxu0 0.0
      %3021 = vmatmul.mubr.f32.gmra.mrb[0].mxu0 %v2954
      %v3022 = vpop.f32.mrb[0].mxu0
      %v3023 = vadd.f32 0.0, %v3022
      %v3024 = vpop.f32.mrb[0].mxu0
      %3025 = vdwg.mxu0
      %v3026 = vadd.f32 %v2950, %v3023
      %v3027 = vxor.u32 %v3026, 2147483648
      %v3028 = vmul.f32 %v3027, 1.442695
      %v3029 = vpow.pop %v3028
      %v3030 = vadd.f32 %v3029, 1.0
      %v3031 = vrcp.pop %v3030
      %v3032 = vmul.f32 1.0, %v3031
      %3033 = vrot.lane.b32.xlu0 %v2943, 32
      %v3034 = vpop.permute.xlu0 %3033
      %v3036 = vmul.f32 %v3032, %v3034
      %3038 = vrot.lane.b32.xlu0 %v3036, 96
      %v3039 = vpop.permute.xlu0 %3038
      %v3040 = vsel %vm474, %v3039, 0
      %3042 = vmatprep.subr.mxu0 0.0
      %3043 = vmatpush1.msra.mxu0 %v463
      %3044 = vmatprep.subr.mxu0 0.0
      %3045 = vmatpush1.msra.mxu0 %v464
      %3046 = vmatprep.subr.mxu0 0.0
      %3047 = vmatpush1.msra.mxu0 %v465
      %3048 = vmatprep.subr.mxu0 0.0
      %3049 = vmatpush1.msra.mxu0 %v466
      %3050 = vmatprep.subr.mxu0 0.0
      %3051 = vmatpush1.msra.mxu0 0.0
      %3052 = vmatprep.subr.mxu0 0.0
      %3053 = vmatpush1.msra.mxu0 0.0
      %3054 = vmatprep.subr.mxu0 0.0
      %3055 = vmatpush1.msra.mxu0 0.0
      %3056 = vmatprep.subr.mxu0 0.0
      %3057 = vmatpush1.msra.mxu0 0.0
      %3058 = vmatprep.subr.mxu0 0.0
      %3059 = vmatpush1.msra.mxu0 0.0
      %3060 = vmatprep.subr.mxu0 0.0
      %3061 = vmatpush1.msra.mxu0 0.0
      %3062 = vmatprep.subr.mxu0 0.0
      %3063 = vmatpush1.msra.mxu0 0.0
      %3064 = vmatprep.subr.mxu0 0.0
      %3065 = vmatpush1.msra.mxu0 0.0
      %3066 = vmatprep.subr.mxu0 0.0
      %3067 = vmatpush1.msra.mxu0 0.0
      %3068 = vmatprep.subr.mxu0 0.0
      %3069 = vmatpush1.msra.mxu0 0.0
      %3070 = vmatprep.subr.mxu0 0.0
      %3071 = vmatpush1.msra.mxu0 0.0
      %3072 = vmatprep.subr.mxu0 0.0
      %3073 = vmatpush1.msra.mxu0 0.0
      %3074 = vmatprep.subr.mxu0 0.0
      %3075 = vmatpush1.msra.mxu0 0.0
      %3076 = vmatprep.subr.mxu0 0.0
      %3077 = vmatpush1.msra.mxu0 0.0
      %3078 = vmatprep.subr.mxu0 0.0
      %3079 = vmatpush1.msra.mxu0 0.0
      %3080 = vmatprep.subr.mxu0 0.0
      %3081 = vmatpush1.msra.mxu0 0.0
      %3082 = vmatprep.subr.mxu0 0.0
      %3083 = vmatpush1.msra.mxu0 0.0
      %3084 = vmatprep.subr.mxu0 0.0
      %3085 = vmatpush1.msra.mxu0 0.0
      %3086 = vmatprep.subr.mxu0 0.0
      %3087 = vmatpush1.msra.mxu0 0.0
      %3088 = vmatprep.subr.mxu0 0.0
      %3089 = vmatpush1.msra.mxu0 0.0
      %3090 = vmatprep.subr.mxu0 0.0
      %3091 = vmatpush1.msra.mxu0 0.0
      %3092 = vmatprep.subr.mxu0 0.0
      %3093 = vmatpush1.msra.mxu0 0.0
      %3094 = vmatprep.subr.mxu0 0.0
      %3095 = vmatpush1.msra.mxu0 0.0
      %3096 = vmatprep.subr.mxu0 0.0
      %3097 = vmatpush1.msra.mxu0 0.0
      %3098 = vmatprep.subr.mxu0 0.0
      %3099 = vmatpush1.msra.mxu0 0.0
      %3100 = vmatprep.subr.mxu0 0.0
      %3101 = vmatpush1.msra.mxu0 0.0
      %3102 = vmatprep.subr.mxu0 0.0
      %3103 = vmatpush1.msra.mxu0 0.0
      %3104 = vmatprep.subr.mxu0 0.0
      %3105 = vmatpush1.msra.mxu0 0.0
      %3106 = vmatprep.mubr.f32.mxu0 0.0
      %3107 = vmatmul.mubr.f32.gmra.mrb[0].mxu0 %v3040
      %v3108 = vpop.f32.mrb[0].mxu0
      %v3109 = vadd.f32 0.0, %v3108
      %v3110 = vpop.f32.mrb[0].mxu0
      %3111 = vdwg.mxu0
      %v3112 = vadd.f32 %v2952, %v3109
      %v3113 = vtanh.pop %v3112
      %v3114 = vmul.f32 %v3032, %v2943
      %v3115 = vsub.f32 1.0, %v3032
      %v3116 = vmul.f32 %v3115, %v3113
      %v3117 = vadd.f32 %v3114, %v3116
      %v3118 = vmax.f32 %v3117, -5.0
      %v3119 = vmin.f32 %v3118, 5.0
      %s3120 = scalar_lea.vmem %s445, %s2948
      %3121 = vst.msk [vmem:[%s3120] sm:$0xf] %vm643, %v3119
      %s3122 = smul.u32 %s645, 15
      %s3123 = smul.u32 %s3122, 4
      %s3124 = scalar_lea.vmem %s391, %s3123
      %v3125 = vld [vmem:[%s3124] sm:$0xf]
      %s3126 = scalar_lea.vmem %s411, %s3123
      %v3127 = vld [vmem:[%s3126] sm:$0xf]
      %v3129 = vsel %vm474, %v3119, 0
      %3131 = vmatprep.subr.mxu0 0.0
      %3132 = vmatpush1.msra.mxu0 %v459
      %3133 = vmatprep.subr.mxu0 0.0
      %3134 = vmatpush1.msra.mxu0 %v460
      %3135 = vmatprep.subr.mxu0 0.0
      %3136 = vmatpush1.msra.mxu0 %v461
      %3137 = vmatprep.subr.mxu0 0.0
      %3138 = vmatpush1.msra.mxu0 %v462
      %3139 = vmatprep.subr.mxu0 0.0
      %3140 = vmatpush1.msra.mxu0 0.0
      %3141 = vmatprep.subr.mxu0 0.0
      %3142 = vmatpush1.msra.mxu0 0.0
      %3143 = vmatprep.subr.mxu0 0.0
      %3144 = vmatpush1.msra.mxu0 0.0
      %3145 = vmatprep.subr.mxu0 0.0
      %3146 = vmatpush1.msra.mxu0 0.0
      %3147 = vmatprep.subr.mxu0 0.0
      %3148 = vmatpush1.msra.mxu0 0.0
      %3149 = vmatprep.subr.mxu0 0.0
      %3150 = vmatpush1.msra.mxu0 0.0
      %3151 = vmatprep.subr.mxu0 0.0
      %3152 = vmatpush1.msra.mxu0 0.0
      %3153 = vmatprep.subr.mxu0 0.0
      %3154 = vmatpush1.msra.mxu0 0.0
      %3155 = vmatprep.subr.mxu0 0.0
      %3156 = vmatpush1.msra.mxu0 0.0
      %3157 = vmatprep.subr.mxu0 0.0
      %3158 = vmatpush1.msra.mxu0 0.0
      %3159 = vmatprep.subr.mxu0 0.0
      %3160 = vmatpush1.msra.mxu0 0.0
      %3161 = vmatprep.subr.mxu0 0.0
      %3162 = vmatpush1.msra.mxu0 0.0
      %3163 = vmatprep.subr.mxu0 0.0
      %3164 = vmatpush1.msra.mxu0 0.0
      %3165 = vmatprep.subr.mxu0 0.0
      %3166 = vmatpush1.msra.mxu0 0.0
      %3167 = vmatprep.subr.mxu0 0.0
      %3168 = vmatpush1.msra.mxu0 0.0
      %3169 = vmatprep.subr.mxu0 0.0
      %3170 = vmatpush1.msra.mxu0 0.0
      %3171 = vmatprep.subr.mxu0 0.0
      %3172 = vmatpush1.msra.mxu0 0.0
      %3173 = vmatprep.subr.mxu0 0.0
      %3174 = vmatpush1.msra.mxu0 0.0
      %3175 = vmatprep.subr.mxu0 0.0
      %3176 = vmatpush1.msra.mxu0 0.0
      %3177 = vmatprep.subr.mxu0 0.0
      %3178 = vmatpush1.msra.mxu0 0.0
      %3179 = vmatprep.subr.mxu0 0.0
      %3180 = vmatpush1.msra.mxu0 0.0
      %3181 = vmatprep.subr.mxu0 0.0
      %3182 = vmatpush1.msra.mxu0 0.0
      %3183 = vmatprep.subr.mxu0 0.0
      %3184 = vmatpush1.msra.mxu0 0.0
      %3185 = vmatprep.subr.mxu0 0.0
      %3186 = vmatpush1.msra.mxu0 0.0
      %3187 = vmatprep.subr.mxu0 0.0
      %3188 = vmatpush1.msra.mxu0 0.0
      %3189 = vmatprep.subr.mxu0 0.0
      %3190 = vmatpush1.msra.mxu0 0.0
      %3191 = vmatprep.subr.mxu0 0.0
      %3192 = vmatpush1.msra.mxu0 0.0
      %3193 = vmatprep.subr.mxu0 0.0
      %3194 = vmatpush1.msra.mxu0 0.0
      %3195 = vmatprep.mubr.f32.mxu0 0.0
      %3196 = vmatmul.mubr.f32.gmra.mrb[0].mxu0 %v3129
      %v3197 = vpop.f32.mrb[0].mxu0
      %v3198 = vadd.f32 0.0, %v3197
      %v3199 = vpop.f32.mrb[0].mxu0
      %3200 = vdwg.mxu0
      %v3201 = vadd.f32 %v3125, %v3198
      %v3202 = vxor.u32 %v3201, 2147483648
      %v3203 = vmul.f32 %v3202, 1.442695
      %v3204 = vpow.pop %v3203
      %v3205 = vadd.f32 %v3204, 1.0
      %v3206 = vrcp.pop %v3205
      %v3207 = vmul.f32 1.0, %v3206
      %3208 = vrot.lane.b32.xlu0 %v3119, 32
      %v3209 = vpop.permute.xlu0 %3208
      %v3211 = vmul.f32 %v3207, %v3209
      %3213 = vrot.lane.b32.xlu0 %v3211, 96
      %v3214 = vpop.permute.xlu0 %3213
      %v3215 = vsel %vm474, %v3214, 0
      %3217 = vmatprep.subr.mxu0 0.0
      %3218 = vmatpush1.msra.mxu0 %v463
      %3219 = vmatprep.subr.mxu0 0.0
      %3220 = vmatpush1.msra.mxu0 %v464
      %3221 = vmatprep.subr.mxu0 0.0
      %3222 = vmatpush1.msra.mxu0 %v465
      %3223 = vmatprep.subr.mxu0 0.0
      %3224 = vmatpush1.msra.mxu0 %v466
      %3225 = vmatprep.subr.mxu0 0.0
      %3226 = vmatpush1.msra.mxu0 0.0
      %3227 = vmatprep.subr.mxu0 0.0
      %3228 = vmatpush1.msra.mxu0 0.0
      %3229 = vmatprep.subr.mxu0 0.0
      %3230 = vmatpush1.msra.mxu0 0.0
      %3231 = vmatprep.subr.mxu0 0.0
      %3232 = vmatpush1.msra.mxu0 0.0
      %3233 = vmatprep.subr.mxu0 0.0
      %3234 = vmatpush1.msra.mxu0 0.0
      %3235 = vmatprep.subr.mxu0 0.0
      %3236 = vmatpush1.msra.mxu0 0.0
      %3237 = vmatprep.subr.mxu0 0.0
      %3238 = vmatpush1.msra.mxu0 0.0
      %3239 = vmatprep.subr.mxu0 0.0
      %3240 = vmatpush1.msra.mxu0 0.0
      %3241 = vmatprep.subr.mxu0 0.0
      %3242 = vmatpush1.msra.mxu0 0.0
      %3243 = vmatprep.subr.mxu0 0.0
      %3244 = vmatpush1.msra.mxu0 0.0
      %3245 = vmatprep.subr.mxu0 0.0
      %3246 = vmatpush1.msra.mxu0 0.0
      %3247 = vmatprep.subr.mxu0 0.0
      %3248 = vmatpush1.msra.mxu0 0.0
      %3249 = vmatprep.subr.mxu0 0.0
      %3250 = vmatpush1.msra.mxu0 0.0
      %3251 = vmatprep.subr.mxu0 0.0
      %3252 = vmatpush1.msra.mxu0 0.0
      %3253 = vmatprep.subr.mxu0 0.0
      %3254 = vmatpush1.msra.mxu0 0.0
      %3255 = vmatprep.subr.mxu0 0.0
      %3256 = vmatpush1.msra.mxu0 0.0
      %3257 = vmatprep.subr.mxu0 0.0
      %3258 = vmatpush1.msra.mxu0 0.0
      %3259 = vmatprep.subr.mxu0 0.0
      %3260 = vmatpush1.msra.mxu0 0.0
      %3261 = vmatprep.subr.mxu0 0.0
      %3262 = vmatpush1.msra.mxu0 0.0
      %3263 = vmatprep.subr.mxu0 0.0
      %3264 = vmatpush1.msra.mxu0 0.0
      %3265 = vmatprep.subr.mxu0 0.0
      %3266 = vmatpush1.msra.mxu0 0.0
      %3267 = vmatprep.subr.mxu0 0.0
      %3268 = vmatpush1.msra.mxu0 0.0
      %3269 = vmatprep.subr.mxu0 0.0
      %3270 = vmatpush1.msra.mxu0 0.0
      %3271 = vmatprep.subr.mxu0 0.0
      %3272 = vmatpush1.msra.mxu0 0.0
      %3273 = vmatprep.subr.mxu0 0.0
      %3274 = vmatpush1.msra.mxu0 0.0
      %3275 = vmatprep.subr.mxu0 0.0
      %3276 = vmatpush1.msra.mxu0 0.0
      %3277 = vmatprep.subr.mxu0 0.0
      %3278 = vmatpush1.msra.mxu0 0.0
      %3279 = vmatprep.subr.mxu0 0.0
      %3280 = vmatpush1.msra.mxu0 0.0
      %3281 = vmatprep.mubr.f32.mxu0 0.0
      %3282 = vmatmul.mubr.f32.gmra.mrb[0].mxu0 %v3215
      %v3283 = vpop.f32.mrb[0].mxu0
      %v3284 = vadd.f32 0.0, %v3283
      %v3285 = vpop.f32.mrb[0].mxu0
      %3286 = vdwg.mxu0
      %v3287 = vadd.f32 %v3127, %v3284
      %v3288 = vtanh.pop %v3287
      %v3289 = vmul.f32 %v3207, %v3119
      %v3290 = vsub.f32 1.0, %v3207
      %v3291 = vmul.f32 %v3290, %v3288
      %v3292 = vadd.f32 %v3289, %v3291
      %v3293 = vmax.f32 %v3292, -5.0
      %v3294 = vmin.f32 %v3293, 5.0
      %s3295 = scalar_lea.vmem %s445, %s3123
      %3296 = vst.msk [vmem:[%s3295] sm:$0xf] %vm643, %v3294
      %3297 = vst.msk [vmem:[#allocation2] sm:$0xf] %vm643, %v3294
      %s3298 = ssub.s32 1, %s20
      %s3299 = smul.u32 %s3298, %s21
      %s3300 = ssub.s32 1, %s21
      %s3301 = smul.u32 %s20, %s3300
      %s3302 = sadd.s32 %s3299, %s3301
      %s3303 = smul.u32 16, %s3302
      %p3304 = scmp.lt.s32.totalorder %s20, 1
      %s3305 = scalar_select %p3304, %s20, 1
      %p3306 = scmp.lt.s32.totalorder %s3303, 31
      %s3307 = scalar_select %p3306, %s3303, 31
      %s3308 = smul.addr %s3305, 32
      %s3309 = sadd.s32 %s3307, %s3308
      %s3310 = smul.addr %s3309, 4
      %s3311 = scalar_lea.vmem %s5, %s3310
      // Predicated region
      $region45: #{bidirectional_clipped_gru.1} parent=39 // pred_check
        %p3312 = pneg %p212
      $region46: #{bidirectional_clipped_gru.1} parent=39 // pred_check_branch
        %3314 = sbr.rel (%p3312) target = $region48
      $region47: #{bidirectional_clipped_gru.1} parent=39 // pred_region
        %s3315 = ssub.s32 1, %s20
        %s3316 = smul.u32 %s3315, %s21
        %s3317 = ssub.s32 1, %s21
        %s3318 = smul.u32 %s20, %s3317
        %s3319 = sadd.s32 %s3316, %s3318
        %s3320 = smul.u32 16, %s3319
      $region48: #{bidirectional_clipped_gru.1} parent=39 // pred_fallthru
        _
    $region40: #{bidirectional_clipped_gru.1} parent=5 // pred_fallthru
      _
    %p3321 = scmp.le.s32.totalorder 2, %s11
    // Predicated region
    $region49: #{bidirectional_clipped_gru.1} parent=5 // pred_check
      %p3322 = pneg %p3321
    $region50: #{bidirectional_clipped_gru.1} parent=5 // pred_check_branch
      %3324 = sbr.rel (%p3322) target = $region52
    $region51: #{bidirectional_clipped_gru.1} parent=5 // pred_region
      %s3325 = ssub.s32 %s11, 2
      // Predicated region
      $region53: #{bidirectional_clipped_gru.1} parent=51 // pred_check
        %p3326 = pneg %p218
      $region54: #{bidirectional_clipped_gru.1} parent=51 // pred_check_branch
        %3328 = sbr.rel (%p3326) target = $region56
      $region55: #{bidirectional_clipped_gru.1} parent=51 // pred_region
        %s3329 = ssub.s32 1, %s22
        %s3330 = smul.u32 %s3329, %s23
        %s3331 = ssub.s32 1, %s23
        %s3332 = smul.u32 %s22, %s3331
        %s3333 = sadd.s32 %s3330, %s3332
        %s3334 = smul.u32 16, %s3333
        %p3335 = scmp.lt.s32.totalorder %s22, 1
        %s3336 = scalar_select %p3335, %s22, 1
        %p3337 = scmp.lt.s32.totalorder %s3334, 31
        %s3338 = scalar_select %p3337, %s3334, 31
        %s3339 = smul.addr %s3336, 32
        %s3340 = sadd.s32 %s3338, %s3339
        %s3341 = smul.addr %s3340, 4
        %s3342 = scalar_lea.vmem %s5, %s3341
      $region56: #{bidirectional_clipped_gru.1} parent=51 // pred_fallthru
        _
    $region52: #{bidirectional_clipped_gru.1} parent=5 // pred_fallthru
      _
  $region6: #{bidirectional_clipped_gru.1} parent=0 // loop_footer
    %s15 = sadd.s32 1, %s11
  $region7: #{bidirectional_clipped_gru.1} parent=0 // loop_footer_branch
    %10 = sbr.rel target = $region3
  $region8: #{bidirectional_clipped_gru.1} parent=0 // loop_exit
    _

</llo_original>
